<compile_context>
chip_gen: v7x
topology: tpu7x:2x2x1
jax: 0.10.0
libtpu: 0.0.40
codegen_flags: <defaults>
</compile_context>

<pallas_src>
import functools

import jax
import jax.numpy as jnp
import numpy as np
from jax import lax
from jax.experimental import pallas as pl
from jax.experimental.pallas import tpu as pltpu


_KH = _KW = 3
_CIN = 4
_COUT = 64                        # conv output channels
_H = _W = 7                       # Conv2d(k3,s1) -> 5x5, Flatten -> 5*5*64 = 1600
_OH = _OW = _H - _KH + 1          # 5
_NPOS = _OH * _OW                 # 25 output positions
_KDIM = _CIN * _KH * _KW          # 36 im2col patch size
_G = 4                            # positions per conv group (K=144 -> N=256)
_NPOS_PAD = 28                    # 25 padded to a multiple of _G
_NGRP = _NPOS_PAD // _G           # 7
_GK = _G * _KDIM                  # 144
_GN = _G * _COUT                  # 256
_H1 = 256
_H2_REAL = 448
_H2 = 512                         # 448 zero-padded to 512 (padded lanes are exactly zero)
_MAX_TILE_B = 512                 # batch-row block


def _round_up(x, m):
    return (x + m - 1) // m * m


# ----------------------------------------------------------------------------
# Fused forward kernel
# ----------------------------------------------------------------------------
def _fused_forward_kernel(
    patches_ref,                   # (7, TILE_B, 144) bf16  grouped im2col patches
    cwg_ref, cbg_ref,              # (144, 256) bf16 block-diag conv weight, (1,256) f32 bias
    w1_ref, b1_ref,                # (7, 256, 256) bf16 flatten-folded Linear(1600,256), (1,256) f32
    w2_ref, b2_ref,                # (256, 512) bf16, (1,512) f32
    wae_ref, bae_ref,              # (512, 1024) bf16 merged [actor_hidden | extra_layer], (1,1024) f32
    wha_ref, whr_ref, bh_ref,      # (512, HW) bf16 x2, (1, HW) f32 packed output heads
    out_ref,                       # (TILE_B, HW) f32 lane-dense output slab
):
    f32, bf16 = jnp.float32, jnp.bfloat16
    tile_b = patches_ref.shape[1]
    cwg = cwg_ref[...]
    cbg = cbg_ref[...]

    # Conv2d(4->64,k3)+ReLU fused with the flatten-folded Linear(1600,256).
    # Per group of 4 positions: one K=144 dot against the block-diagonal conv
    # weight gives a lane-aligned (TILE_B,256) conv slab; then a full-fill
    # K=256 dot accumulates into h1 (the MXU does the bulk of the reduction).
    acc = jnp.zeros((tile_b, _H1), f32)
    for g in range(_NGRP):                      # static unroll (7)
        co = jnp.maximum(
            jnp.dot(patches_ref[g], cwg, preferred_element_type=f32) + cbg, 0.0)
        acc = acc + jnp.dot(co.astype(bf16), w1_ref[g], preferred_element_type=f32)
    h1 = jnp.maximum(acc + b1_ref[...], 0.0).astype(bf16)

    # Linear(256,448) (zero-padded to 512) + ReLU
    feat = jnp.maximum(
        jnp.dot(h1, w2_ref[...], preferred_element_type=f32) + b2_ref[...], 0.0)
    feat_bf = feat.astype(bf16)

    # actor hidden and extra_layer share their input -> one merged (512,1024) dot
    ae = jnp.maximum(
        jnp.dot(feat_bf, wae_ref[...], preferred_element_type=f32) + bae_ref[...], 0.0)
    a1 = ae[:, :_H2].astype(bf16)                # actor hidden
    resid = (ae[:, _H2:] + feat).astype(bf16)    # extra_layer(x) + x

    # Packed heads: cols [0:os) policy, [os] value_ext, [os+1] value_int.
    out_ref[...] = (
        jnp.dot(a1, wha_ref[...], preferred_element_type=f32)
        + jnp.dot(resid, whr_ref[...], preferred_element_type=f32)
        + bh_ref[...])


# ----------------------------------------------------------------------------
# pallas_call wrapper
# ----------------------------------------------------------------------------
def _resident_spec(arr):
    nd = arr.ndim
    return pl.BlockSpec(arr.shape, lambda i, nd=nd: (0,) * nd)  # VMEM-resident weight


def _fused_pallas_call(patches, params, head_w, tile_b):
    ngrp, b_pad, gk = patches.shape
    grid = (b_pad // tile_b,)

    weight_args = (
        params["cwg"], params["cbg"],
        params["w1"], params["b1"],
        params["w2"], params["b2"],
        params["wae"], params["bae"],
        params["wh_a"], params["wh_r"], params["bh"],
    )
    in_specs = [pl.BlockSpec((ngrp, tile_b, gk), lambda i: (0, i, 0))]
    in_specs += [_resident_spec(a) for a in weight_args]
    out_specs = pl.BlockSpec((tile_b, head_w), lambda i: (i, 0))

    return pl.pallas_call(
        _fused_forward_kernel,
        out_shape=jax.ShapeDtypeStruct((b_pad, head_w), jnp.float32),
        grid=grid,
        in_specs=in_specs,
        out_specs=out_specs,
        compiler_params=pltpu.CompilerParams(
            dimension_semantics=("parallel",),
            vmem_limit_bytes=32 * 1024 * 1024,
        ),
    )(patches, *weight_args)


# ----------------------------------------------------------------------------
# JAX glue: grouped im2col, batch/tile selection, output slicing
# ----------------------------------------------------------------------------
def _im2col_groups(state):
    # state (B,4,7,7) NCHW -> (7, B, 144) bf16; within each group of 4
    # positions the 144 columns are [pos0 (cin,kh,kw) | pos1 | pos2 | pos3],
    # matching the block-diagonal conv weight and the flatten-folded w1.
    B = state.shape[0]
    cols = []
    for dh in range(_KH):
        for dw in range(_KW):
            cols.append(state[:, :, dh:dh + _OH, dw:dw + _OW])   # (B,C,5,5)
    p = jnp.stack(cols, axis=-1)                 # (B, C, 5, 5, 9)
    p = p.transpose(0, 2, 3, 1, 4)               # (B, 5, 5, C, 9)
    p = p.reshape(B, _NPOS, _KDIM)               # (B, 25, 36)
    p = jnp.pad(p, ((0, 0), (0, _NPOS_PAD - _NPOS), (0, 0)))
    p = p.reshape(B, _NGRP, _GK)                 # (B, 7, 144)
    return p.transpose(1, 0, 2).astype(jnp.bfloat16)


def _pick_tile(batch):
    gran = 16                                    # bf16 sublane-pair granularity
    b_ceil = _round_up(batch, gran)
    # Aim for >=2 grid steps so v7x's two TensorCores both get work.
    target = _round_up((b_ceil + 1) // 2, gran)
    tile_b = int(min(_MAX_TILE_B, max(gran, target)))
    b_pad = _round_up(b_ceil, tile_b)
    return tile_b, b_pad


@functools.partial(jax.jit, static_argnames=("output_size",))
def cnn_actor_critic_forward(state, params, output_size):
    B = state.shape[0]
    patches = _im2col_groups(state)                         # (7, B, 144)
    head_w = params["wh_a"].shape[1]

    tile_b, b_pad = _pick_tile(B)
    if b_pad != B:
        patches = jnp.pad(patches, ((0, 0), (0, b_pad - B), (0, 0)))

    out = _fused_pallas_call(patches, params, head_w, tile_b)   # (b_pad, head_w)

    policy = out[:B, :output_size]
    value_ext = out[:B, output_size:output_size + 1]
    value_int = out[:B, output_size + 1:output_size + 2]
    return policy, value_ext, value_int


# ----------------------------------------------------------------------------
# Parameters: raw PyTorch-layout weights (orthogonal init, zero biases, same
# gains as the nn.Module __init__), plus kernel-ready packed bf16 versions.
# ----------------------------------------------------------------------------
def make_raw_params(key, output_size):
    keys = jax.random.split(key, 8)
    ortho = lambda k, shape, gain: jax.nn.initializers.orthogonal(scale=gain)(
        k, shape, jnp.float32)
    sqrt2 = float(np.sqrt(2.0))
    return dict(
        conv_w=ortho(keys[0], (_COUT, _KDIM), sqrt2).reshape(_COUT, _CIN, _KH, _KW),
        conv_b=jnp.zeros((_COUT,), jnp.float32),
        w1=ortho(keys[1], (_H1, _NPOS * _COUT), sqrt2),      # (256, 1600)
        b1=jnp.zeros((_H1,), jnp.float32),
        w2=ortho(keys[2], (_H2_REAL, _H1), sqrt2),           # (448, 256)
        b2=jnp.zeros((_H2_REAL,), jnp.float32),
        wa1=ortho(keys[3], (_H2_REAL, _H2_REAL), 0.01),
        ba1=jnp.zeros((_H2_REAL,), jnp.float32),
        wa2=ortho(keys[4], (output_size, _H2_REAL), 0.01),
        ba2=jnp.zeros((output_size,), jnp.float32),
        we=ortho(keys[5], (_H2_REAL, _H2_REAL), 0.1),
        be=jnp.zeros((_H2_REAL,), jnp.float32),
        wce=ortho(keys[6], (1, _H2_REAL), 0.01),
        bce=jnp.zeros((1,), jnp.float32),
        wci=ortho(keys[7], (1, _H2_REAL), 0.01),
        bci=jnp.zeros((1,), jnp.float32),
    )


def pack_params(raw, output_size):
    head_w = _round_up(output_size + 2, 128)
    bf16 = jnp.bfloat16

    # Conv weight as a (36,64) im2col matrix, placed block-diagonally for a
    # group of 4 positions -> (144, 256); bias tiled 4x.
    cw = raw["conv_w"].reshape(_COUT, _KDIM).T               # (36, 64)
    cwg = jnp.zeros((_GK, _GN), jnp.float32)
    for i in range(_G):
        cwg = cwg.at[i * _KDIM:(i + 1) * _KDIM, i * _COUT:(i + 1) * _COUT].set(cw)
    cbg = jnp.tile(raw["conv_b"], (_G,)).reshape(1, _GN)

    # Fold the channel-major Flatten into w1: (256,1600) with flat index
    # c*25+p -> (25,64,256) -> pad to 28 positions -> (7,256,256); the K-order
    # of each group matches the block-diagonal conv output [pos | 64ch].
    w1 = raw["w1"].T.reshape(_COUT, _NPOS, _H1).transpose(1, 0, 2)
    w1 = jnp.pad(w1, ((0, _NPOS_PAD - _NPOS), (0, 0), (0, 0)))
    w1 = w1.reshape(_NGRP, _GN, _H1)
    b1 = raw["b1"].reshape(1, _H1)

    def pad_cols(a, n):
        return jnp.pad(a, ((0, 0), (0, n - a.shape[1])))

    def pad_rows(a, n):
        return jnp.pad(a, ((0, n - a.shape[0]), (0, 0)))

    w2 = pad_cols(raw["w2"].T, _H2)                          # (256, 512)
    b2 = jnp.pad(raw["b2"], (0, _H2 - _H2_REAL)).reshape(1, _H2)

    # Merge actor-hidden and extra_layer weights along N: (512, 1024).
    wa1 = pad_cols(pad_rows(raw["wa1"].T, _H2), _H2)
    we = pad_cols(pad_rows(raw["we"].T, _H2), _H2)
    wae = jnp.concatenate([wa1, we], axis=1)
    bae = jnp.concatenate([
        jnp.pad(raw["ba1"], (0, _H2 - _H2_REAL)),
        jnp.pad(raw["be"], (0, _H2 - _H2_REAL))]).reshape(1, 2 * _H2)

    # Packed lane-dense heads: cols [0:os) policy, [os] critic_ext, [os+1] critic_int.
    wh_a = jnp.zeros((_H2, head_w), jnp.float32)
    wh_a = wh_a.at[:_H2_REAL, :output_size].set(raw["wa2"].T)
    wh_r = jnp.zeros((_H2, head_w), jnp.float32)
    wh_r = wh_r.at[:_H2_REAL, output_size].set(raw["wce"][0])
    wh_r = wh_r.at[:_H2_REAL, output_size + 1].set(raw["wci"][0])
    bh = jnp.zeros((1, head_w), jnp.float32)
    bh = bh.at[0, :output_size].set(raw["ba2"])
    bh = bh.at[0, output_size].set(raw["bce"][0])
    bh = bh.at[0, output_size + 1].set(raw["bci"][0])

    return dict(
        cwg=cwg.astype(bf16), cbg=cbg,
        w1=w1.astype(bf16), b1=b1,
        w2=w2.astype(bf16), b2=b2,
        wae=wae.astype(bf16), bae=bae,
        wh_a=wh_a.astype(bf16), wh_r=wh_r.astype(bf16), bh=bh,
    )


# ----------------------------------------------------------------------------
# Pure-JAX reference (mirrors the PyTorch module, f32 HIGHEST precision)
# ----------------------------------------------------------------------------
def reference_forward(state, raw, output_size):
    hi = lax.Precision.HIGHEST
    x = lax.conv_general_dilated(
        state, raw["conv_w"], window_strides=(1, 1), padding="VALID",
        dimension_numbers=("NCHW", "OIHW", "NCHW"), precision=hi)
    x = jnp.maximum(x + raw["conv_b"][None, :, None, None], 0.0)
    x = x.reshape(x.shape[0], -1)                            # channel-major flatten
    lin = lambda v, w, b: jnp.dot(v, w.T, precision=hi) + b
    x = jnp.maximum(lin(x, raw["w1"], raw["b1"]), 0.0)
    feat = jnp.maximum(lin(x, raw["w2"], raw["b2"]), 0.0)
    a1 = jnp.maximum(lin(feat, raw["wa1"], raw["ba1"]), 0.0)
    policy = lin(a1, raw["wa2"], raw["ba2"])
    extra = jnp.maximum(lin(feat, raw["we"], raw["be"]), 0.0)
    resid = extra + feat
    value_ext = lin(resid, raw["wce"], raw["bce"])
    value_int = lin(resid, raw["wci"], raw["bci"])
    return policy, value_ext, value_int


if __name__ == "__main__":
    key = jax.random.PRNGKey(0)
    k_param, k_input = jax.random.split(key)

    output_size = 8
    batch = 2
    # Conv2d(k=3, s=1) followed by Flatten into Linear(5*5*64) => 7x7 input.
    state = jax.random.normal(k_input, (batch, _CIN, _H, _W), jnp.float32)

    raw = make_raw_params(k_param, output_size)
    params = pack_params(raw, output_size)

    policy, value_ext, value_int = cnn_actor_critic_forward(
        state, params, output_size)
    jax.block_until_ready((policy, value_ext, value_int))

    assert policy.shape == (batch, output_size)
    assert value_ext.shape == (batch, 1)
    assert value_int.shape == (batch, 1)

    ref_p, ref_e, ref_i = reference_forward(state, raw, output_size)
    np.testing.assert_allclose(np.asarray(policy), np.asarray(ref_p),
                               rtol=5e-2, atol=1e-3)
    np.testing.assert_allclose(np.asarray(value_ext), np.asarray(ref_e),
                               rtol=5e-2, atol=1e-3)
    np.testing.assert_allclose(np.asarray(value_int), np.asarray(ref_i),
                               rtol=5e-2, atol=1e-3)

    print("KERNEL_OK")
</pallas_src>

<mosaic_0001>
module attributes {stable_mosaic.version = 11 : i64} {
  func.func @_fused_forward_kernel(%arg0: i32, %arg1: memref<7x16x144xbf16, #tpu.memory_space<vmem>>, %arg2: memref<144x256xbf16, #tpu.memory_space<vmem>>, %arg3: memref<1x256xf32, #tpu.memory_space<vmem>>, %arg4: memref<7x256x256xbf16, #tpu.memory_space<vmem>>, %arg5: memref<1x256xf32, #tpu.memory_space<vmem>>, %arg6: memref<256x512xbf16, #tpu.memory_space<vmem>>, %arg7: memref<1x512xf32, #tpu.memory_space<vmem>>, %arg8: memref<512x1024xbf16, #tpu.memory_space<vmem>>, %arg9: memref<1x1024xf32, #tpu.memory_space<vmem>>, %arg10: memref<512x128xbf16, #tpu.memory_space<vmem>>, %arg11: memref<512x128xbf16, #tpu.memory_space<vmem>>, %arg12: memref<1x128xf32, #tpu.memory_space<vmem>>, %arg13: memref<16x128xf32, #tpu.memory_space<vmem>>) attributes {dimension_semantics = [#tpu.dimension_semantics<parallel>], iteration_bounds = array<i64: 1>, scalar_prefetch = 0 : i64, scratch_operands = 0 : i64, tpu.core_type = #tpu.core_type<tc>, window_params = [{transform_indices = @transform_0, window_bounds = array<i64: 7, 16, 144>}, {pipeline_mode = #tpu.pipeline_mode<synchronous>, transform_indices = @transform_1, window_bounds = array<i64: 144, 256>}, {pipeline_mode = #tpu.pipeline_mode<synchronous>, transform_indices = @transform_2, window_bounds = array<i64: 1, 256>}, {pipeline_mode = #tpu.pipeline_mode<synchronous>, transform_indices = @transform_3, window_bounds = array<i64: 7, 256, 256>}, {pipeline_mode = #tpu.pipeline_mode<synchronous>, transform_indices = @transform_4, window_bounds = array<i64: 1, 256>}, {pipeline_mode = #tpu.pipeline_mode<synchronous>, transform_indices = @transform_5, window_bounds = array<i64: 256, 512>}, {pipeline_mode = #tpu.pipeline_mode<synchronous>, transform_indices = @transform_6, window_bounds = array<i64: 1, 512>}, {pipeline_mode = #tpu.pipeline_mode<synchronous>, transform_indices = @transform_7, window_bounds = array<i64: 512, 1024>}, {pipeline_mode = #tpu.pipeline_mode<synchronous>, transform_indices = @transform_8, window_bounds = array<i64: 1, 1024>}, {pipeline_mode = #tpu.pipeline_mode<synchronous>, transform_indices = @transform_9, window_bounds = array<i64: 512, 128>}, {pipeline_mode = #tpu.pipeline_mode<synchronous>, transform_indices = @transform_10, window_bounds = array<i64: 512, 128>}, {pipeline_mode = #tpu.pipeline_mode<synchronous>, transform_indices = @transform_11, window_bounds = array<i64: 1, 128>}, {transform_indices = @transform_12, window_bounds = array<i64: 16, 128>}]} {
    %c0 = arith.constant 0 : index
    %c0_0 = arith.constant 0 : index
    %0 = vector.load %arg2[%c0, %c0_0] : memref<144x256xbf16, #tpu.memory_space<vmem>>, vector<144x256xbf16>
    %c0_1 = arith.constant 0 : index
    %c0_2 = arith.constant 0 : index
    %1 = vector.load %arg3[%c0_1, %c0_2] : memref<1x256xf32, #tpu.memory_space<vmem>>, vector<1x256xf32>
    %cst = arith.constant 0.000000e+00 : f32
    %2 = vector.broadcast %cst : f32 to vector<16x256xf32>
    %c0_3 = arith.constant 0 : index
    %c0_4 = arith.constant 0 : index
    %c0_5 = arith.constant 0 : index
    %3 = vector.load %arg1[%c0_3, %c0_4, %c0_5] : memref<7x16x144xbf16, #tpu.memory_space<vmem>>, vector<1x16x144xbf16>
    %4 = vector.shape_cast %3 : vector<1x16x144xbf16> to vector<16x144xbf16>
    %cst_6 = arith.constant dense<0.000000e+00> : vector<16x256xf32>
    %5 = tpu.matmul %4, %0, %cst_6 {dimension_numbers = #tpu.dot_dimension_numbers<[1], [0], [0], [1], [0, 0, 1, 1], [], []>} : vector<16x144xbf16>, vector<144x256xbf16>, vector<16x256xf32> -> vector<16x256xf32>
    %6 = vector.broadcast %1 : vector<1x256xf32> to vector<16x256xf32>
    %7 = arith.addf %5, %6 : vector<16x256xf32>
    %cst_7 = arith.constant 0.000000e+00 : f32
    %8 = vector.broadcast %cst_7 : f32 to vector<16x256xf32>
    %9 = arith.maximumf %7, %8 : vector<16x256xf32>
    %10 = arith.truncf %9 : vector<16x256xf32> to vector<16x256xbf16>
    %c0_8 = arith.constant 0 : index
    %c0_9 = arith.constant 0 : index
    %c0_10 = arith.constant 0 : index
    %11 = vector.load %arg4[%c0_8, %c0_9, %c0_10] : memref<7x256x256xbf16, #tpu.memory_space<vmem>>, vector<1x256x256xbf16>
    %12 = vector.shape_cast %11 : vector<1x256x256xbf16> to vector<256x256xbf16>
    %cst_11 = arith.constant dense<0.000000e+00> : vector<16x256xf32>
    %13 = tpu.matmul %10, %12, %cst_11 {dimension_numbers = #tpu.dot_dimension_numbers<[1], [0], [0], [1], [0, 0, 1, 1], [], []>} : vector<16x256xbf16>, vector<256x256xbf16>, vector<16x256xf32> -> vector<16x256xf32>
    %14 = arith.addf %2, %13 : vector<16x256xf32>
    %c1 = arith.constant 1 : index
    %c0_12 = arith.constant 0 : index
    %c0_13 = arith.constant 0 : index
    %15 = vector.load %arg1[%c1, %c0_12, %c0_13] : memref<7x16x144xbf16, #tpu.memory_space<vmem>>, vector<1x16x144xbf16>
    %16 = vector.shape_cast %15 : vector<1x16x144xbf16> to vector<16x144xbf16>
    %cst_14 = arith.constant dense<0.000000e+00> : vector<16x256xf32>
    %17 = tpu.matmul %16, %0, %cst_14 {dimension_numbers = #tpu.dot_dimension_numbers<[1], [0], [0], [1], [0, 0, 1, 1], [], []>} : vector<16x144xbf16>, vector<144x256xbf16>, vector<16x256xf32> -> vector<16x256xf32>
    %18 = vector.broadcast %1 : vector<1x256xf32> to vector<16x256xf32>
    %19 = arith.addf %17, %18 : vector<16x256xf32>
    %cst_15 = arith.constant 0.000000e+00 : f32
    %20 = vector.broadcast %cst_15 : f32 to vector<16x256xf32>
    %21 = arith.maximumf %19, %20 : vector<16x256xf32>
    %22 = arith.truncf %21 : vector<16x256xf32> to vector<16x256xbf16>
    %c1_16 = arith.constant 1 : index
    %c0_17 = arith.constant 0 : index
    %c0_18 = arith.constant 0 : index
    %23 = vector.load %arg4[%c1_16, %c0_17, %c0_18] : memref<7x256x256xbf16, #tpu.memory_space<vmem>>, vector<1x256x256xbf16>
    %24 = vector.shape_cast %23 : vector<1x256x256xbf16> to vector<256x256xbf16>
    %cst_19 = arith.constant dense<0.000000e+00> : vector<16x256xf32>
    %25 = tpu.matmul %22, %24, %cst_19 {dimension_numbers = #tpu.dot_dimension_numbers<[1], [0], [0], [1], [0, 0, 1, 1], [], []>} : vector<16x256xbf16>, vector<256x256xbf16>, vector<16x256xf32> -> vector<16x256xf32>
    %26 = arith.addf %14, %25 : vector<16x256xf32>
    %c2 = arith.constant 2 : index
    %c0_20 = arith.constant 0 : index
    %c0_21 = arith.constant 0 : index
    %27 = vector.load %arg1[%c2, %c0_20, %c0_21] : memref<7x16x144xbf16, #tpu.memory_space<vmem>>, vector<1x16x144xbf16>
    %28 = vector.shape_cast %27 : vector<1x16x144xbf16> to vector<16x144xbf16>
    %cst_22 = arith.constant dense<0.000000e+00> : vector<16x256xf32>
    %29 = tpu.matmul %28, %0, %cst_22 {dimension_numbers = #tpu.dot_dimension_numbers<[1], [0], [0], [1], [0, 0, 1, 1], [], []>} : vector<16x144xbf16>, vector<144x256xbf16>, vector<16x256xf32> -> vector<16x256xf32>
    %30 = vector.broadcast %1 : vector<1x256xf32> to vector<16x256xf32>
    %31 = arith.addf %29, %30 : vector<16x256xf32>
    %cst_23 = arith.constant 0.000000e+00 : f32
    %32 = vector.broadcast %cst_23 : f32 to vector<16x256xf32>
    %33 = arith.maximumf %31, %32 : vector<16x256xf32>
    %34 = arith.truncf %33 : vector<16x256xf32> to vector<16x256xbf16>
    %c2_24 = arith.constant 2 : index
    %c0_25 = arith.constant 0 : index
    %c0_26 = arith.constant 0 : index
    %35 = vector.load %arg4[%c2_24, %c0_25, %c0_26] : memref<7x256x256xbf16, #tpu.memory_space<vmem>>, vector<1x256x256xbf16>
    %36 = vector.shape_cast %35 : vector<1x256x256xbf16> to vector<256x256xbf16>
    %cst_27 = arith.constant dense<0.000000e+00> : vector<16x256xf32>
    %37 = tpu.matmul %34, %36, %cst_27 {dimension_numbers = #tpu.dot_dimension_numbers<[1], [0], [0], [1], [0, 0, 1, 1], [], []>} : vector<16x256xbf16>, vector<256x256xbf16>, vector<16x256xf32> -> vector<16x256xf32>
    %38 = arith.addf %26, %37 : vector<16x256xf32>
    %c3 = arith.constant 3 : index
    %c0_28 = arith.constant 0 : index
    %c0_29 = arith.constant 0 : index
    %39 = vector.load %arg1[%c3, %c0_28, %c0_29] : memref<7x16x144xbf16, #tpu.memory_space<vmem>>, vector<1x16x144xbf16>
    %40 = vector.shape_cast %39 : vector<1x16x144xbf16> to vector<16x144xbf16>
    %cst_30 = arith.constant dense<0.000000e+00> : vector<16x256xf32>
    %41 = tpu.matmul %40, %0, %cst_30 {dimension_numbers = #tpu.dot_dimension_numbers<[1], [0], [0], [1], [0, 0, 1, 1], [], []>} : vector<16x144xbf16>, vector<144x256xbf16>, vector<16x256xf32> -> vector<16x256xf32>
    %42 = vector.broadcast %1 : vector<1x256xf32> to vector<16x256xf32>
    %43 = arith.addf %41, %42 : vector<16x256xf32>
    %cst_31 = arith.constant 0.000000e+00 : f32
    %44 = vector.broadcast %cst_31 : f32 to vector<16x256xf32>
    %45 = arith.maximumf %43, %44 : vector<16x256xf32>
    %46 = arith.truncf %45 : vector<16x256xf32> to vector<16x256xbf16>
    %c3_32 = arith.constant 3 : index
    %c0_33 = arith.constant 0 : index
    %c0_34 = arith.constant 0 : index
    %47 = vector.load %arg4[%c3_32, %c0_33, %c0_34] : memref<7x256x256xbf16, #tpu.memory_space<vmem>>, vector<1x256x256xbf16>
    %48 = vector.shape_cast %47 : vector<1x256x256xbf16> to vector<256x256xbf16>
    %cst_35 = arith.constant dense<0.000000e+00> : vector<16x256xf32>
    %49 = tpu.matmul %46, %48, %cst_35 {dimension_numbers = #tpu.dot_dimension_numbers<[1], [0], [0], [1], [0, 0, 1, 1], [], []>} : vector<16x256xbf16>, vector<256x256xbf16>, vector<16x256xf32> -> vector<16x256xf32>
    %50 = arith.addf %38, %49 : vector<16x256xf32>
    %c4 = arith.constant 4 : index
    %c0_36 = arith.constant 0 : index
    %c0_37 = arith.constant 0 : index
    %51 = vector.load %arg1[%c4, %c0_36, %c0_37] : memref<7x16x144xbf16, #tpu.memory_space<vmem>>, vector<1x16x144xbf16>
    %52 = vector.shape_cast %51 : vector<1x16x144xbf16> to vector<16x144xbf16>
    %cst_38 = arith.constant dense<0.000000e+00> : vector<16x256xf32>
    %53 = tpu.matmul %52, %0, %cst_38 {dimension_numbers = #tpu.dot_dimension_numbers<[1], [0], [0], [1], [0, 0, 1, 1], [], []>} : vector<16x144xbf16>, vector<144x256xbf16>, vector<16x256xf32> -> vector<16x256xf32>
    %54 = vector.broadcast %1 : vector<1x256xf32> to vector<16x256xf32>
    %55 = arith.addf %53, %54 : vector<16x256xf32>
    %cst_39 = arith.constant 0.000000e+00 : f32
    %56 = vector.broadcast %cst_39 : f32 to vector<16x256xf32>
    %57 = arith.maximumf %55, %56 : vector<16x256xf32>
    %58 = arith.truncf %57 : vector<16x256xf32> to vector<16x256xbf16>
    %c4_40 = arith.constant 4 : index
    %c0_41 = arith.constant 0 : index
    %c0_42 = arith.constant 0 : index
    %59 = vector.load %arg4[%c4_40, %c0_41, %c0_42] : memref<7x256x256xbf16, #tpu.memory_space<vmem>>, vector<1x256x256xbf16>
    %60 = vector.shape_cast %59 : vector<1x256x256xbf16> to vector<256x256xbf16>
    %cst_43 = arith.constant dense<0.000000e+00> : vector<16x256xf32>
    %61 = tpu.matmul %58, %60, %cst_43 {dimension_numbers = #tpu.dot_dimension_numbers<[1], [0], [0], [1], [0, 0, 1, 1], [], []>} : vector<16x256xbf16>, vector<256x256xbf16>, vector<16x256xf32> -> vector<16x256xf32>
    %62 = arith.addf %50, %61 : vector<16x256xf32>
    %c5 = arith.constant 5 : index
    %c0_44 = arith.constant 0 : index
    %c0_45 = arith.constant 0 : index
    %63 = vector.load %arg1[%c5, %c0_44, %c0_45] : memref<7x16x144xbf16, #tpu.memory_space<vmem>>, vector<1x16x144xbf16>
    %64 = vector.shape_cast %63 : vector<1x16x144xbf16> to vector<16x144xbf16>
    %cst_46 = arith.constant dense<0.000000e+00> : vector<16x256xf32>
    %65 = tpu.matmul %64, %0, %cst_46 {dimension_numbers = #tpu.dot_dimension_numbers<[1], [0], [0], [1], [0, 0, 1, 1], [], []>} : vector<16x144xbf16>, vector<144x256xbf16>, vector<16x256xf32> -> vector<16x256xf32>
    %66 = vector.broadcast %1 : vector<1x256xf32> to vector<16x256xf32>
    %67 = arith.addf %65, %66 : vector<16x256xf32>
    %cst_47 = arith.constant 0.000000e+00 : f32
    %68 = vector.broadcast %cst_47 : f32 to vector<16x256xf32>
    %69 = arith.maximumf %67, %68 : vector<16x256xf32>
    %70 = arith.truncf %69 : vector<16x256xf32> to vector<16x256xbf16>
    %c5_48 = arith.constant 5 : index
    %c0_49 = arith.constant 0 : index
    %c0_50 = arith.constant 0 : index
    %71 = vector.load %arg4[%c5_48, %c0_49, %c0_50] : memref<7x256x256xbf16, #tpu.memory_space<vmem>>, vector<1x256x256xbf16>
    %72 = vector.shape_cast %71 : vector<1x256x256xbf16> to vector<256x256xbf16>
    %cst_51 = arith.constant dense<0.000000e+00> : vector<16x256xf32>
    %73 = tpu.matmul %70, %72, %cst_51 {dimension_numbers = #tpu.dot_dimension_numbers<[1], [0], [0], [1], [0, 0, 1, 1], [], []>} : vector<16x256xbf16>, vector<256x256xbf16>, vector<16x256xf32> -> vector<16x256xf32>
    %74 = arith.addf %62, %73 : vector<16x256xf32>
    %c6 = arith.constant 6 : index
    %c0_52 = arith.constant 0 : index
    %c0_53 = arith.constant 0 : index
    %75 = vector.load %arg1[%c6, %c0_52, %c0_53] : memref<7x16x144xbf16, #tpu.memory_space<vmem>>, vector<1x16x144xbf16>
    %76 = vector.shape_cast %75 : vector<1x16x144xbf16> to vector<16x144xbf16>
    %cst_54 = arith.constant dense<0.000000e+00> : vector<16x256xf32>
    %77 = tpu.matmul %76, %0, %cst_54 {dimension_numbers = #tpu.dot_dimension_numbers<[1], [0], [0], [1], [0, 0, 1, 1], [], []>} : vector<16x144xbf16>, vector<144x256xbf16>, vector<16x256xf32> -> vector<16x256xf32>
    %78 = vector.broadcast %1 : vector<1x256xf32> to vector<16x256xf32>
    %79 = arith.addf %77, %78 : vector<16x256xf32>
    %cst_55 = arith.constant 0.000000e+00 : f32
    %80 = vector.broadcast %cst_55 : f32 to vector<16x256xf32>
    %81 = arith.maximumf %79, %80 : vector<16x256xf32>
    %82 = arith.truncf %81 : vector<16x256xf32> to vector<16x256xbf16>
    %c6_56 = arith.constant 6 : index
    %c0_57 = arith.constant 0 : index
    %c0_58 = arith.constant 0 : index
    %83 = vector.load %arg4[%c6_56, %c0_57, %c0_58] : memref<7x256x256xbf16, #tpu.memory_space<vmem>>, vector<1x256x256xbf16>
    %84 = vector.shape_cast %83 : vector<1x256x256xbf16> to vector<256x256xbf16>
    %cst_59 = arith.constant dense<0.000000e+00> : vector<16x256xf32>
    %85 = tpu.matmul %82, %84, %cst_59 {dimension_numbers = #tpu.dot_dimension_numbers<[1], [0], [0], [1], [0, 0, 1, 1], [], []>} : vector<16x256xbf16>, vector<256x256xbf16>, vector<16x256xf32> -> vector<16x256xf32>
    %86 = arith.addf %74, %85 : vector<16x256xf32>
    %c0_60 = arith.constant 0 : index
    %c0_61 = arith.constant 0 : index
    %87 = vector.load %arg5[%c0_60, %c0_61] : memref<1x256xf32, #tpu.memory_space<vmem>>, vector<1x256xf32>
    %88 = vector.broadcast %87 : vector<1x256xf32> to vector<16x256xf32>
    %89 = arith.addf %86, %88 : vector<16x256xf32>
    %cst_62 = arith.constant 0.000000e+00 : f32
    %90 = vector.broadcast %cst_62 : f32 to vector<16x256xf32>
    %91 = arith.maximumf %89, %90 : vector<16x256xf32>
    %92 = arith.truncf %91 : vector<16x256xf32> to vector<16x256xbf16>
    %c0_63 = arith.constant 0 : index
    %c0_64 = arith.constant 0 : index
    %93 = vector.load %arg6[%c0_63, %c0_64] : memref<256x512xbf16, #tpu.memory_space<vmem>>, vector<256x512xbf16>
    %cst_65 = arith.constant dense<0.000000e+00> : vector<16x512xf32>
    %94 = tpu.matmul %92, %93, %cst_65 {dimension_numbers = #tpu.dot_dimension_numbers<[1], [0], [0], [1], [0, 0, 1, 1], [], []>} : vector<16x256xbf16>, vector<256x512xbf16>, vector<16x512xf32> -> vector<16x512xf32>
    %c0_66 = arith.constant 0 : index
    %c0_67 = arith.constant 0 : index
    %95 = vector.load %arg7[%c0_66, %c0_67] : memref<1x512xf32, #tpu.memory_space<vmem>>, vector<1x512xf32>
    %96 = vector.broadcast %95 : vector<1x512xf32> to vector<16x512xf32>
    %97 = arith.addf %94, %96 : vector<16x512xf32>
    %cst_68 = arith.constant 0.000000e+00 : f32
    %98 = vector.broadcast %cst_68 : f32 to vector<16x512xf32>
    %99 = arith.maximumf %97, %98 : vector<16x512xf32>
    %100 = arith.truncf %99 : vector<16x512xf32> to vector<16x512xbf16>
    %c0_69 = arith.constant 0 : index
    %c0_70 = arith.constant 0 : index
    %101 = vector.load %arg8[%c0_69, %c0_70] : memref<512x1024xbf16, #tpu.memory_space<vmem>>, vector<512x1024xbf16>
    %cst_71 = arith.constant dense<0.000000e+00> : vector<16x1024xf32>
    %102 = tpu.matmul %100, %101, %cst_71 {dimension_numbers = #tpu.dot_dimension_numbers<[1], [0], [0], [1], [0, 0, 1, 1], [], []>} : vector<16x512xbf16>, vector<512x1024xbf16>, vector<16x1024xf32> -> vector<16x1024xf32>
    %c0_72 = arith.constant 0 : index
    %c0_73 = arith.constant 0 : index
    %103 = vector.load %arg9[%c0_72, %c0_73] : memref<1x1024xf32, #tpu.memory_space<vmem>>, vector<1x1024xf32>
    %104 = vector.broadcast %103 : vector<1x1024xf32> to vector<16x1024xf32>
    %105 = arith.addf %102, %104 : vector<16x1024xf32>
    %cst_74 = arith.constant 0.000000e+00 : f32
    %106 = vector.broadcast %cst_74 : f32 to vector<16x1024xf32>
    %107 = arith.maximumf %105, %106 : vector<16x1024xf32>
    %108 = vector.extract_strided_slice %107 {offsets = [0, 0], sizes = [16, 512], strides = [1, 1]} : vector<16x1024xf32> to vector<16x512xf32>
    %109 = arith.truncf %108 : vector<16x512xf32> to vector<16x512xbf16>
    %110 = vector.extract_strided_slice %107 {offsets = [0, 512], sizes = [16, 512], strides = [1, 1]} : vector<16x1024xf32> to vector<16x512xf32>
    %111 = arith.addf %110, %99 : vector<16x512xf32>
    %112 = arith.truncf %111 : vector<16x512xf32> to vector<16x512xbf16>
    %c0_75 = arith.constant 0 : index
    %c0_76 = arith.constant 0 : index
    %113 = vector.load %arg10[%c0_75, %c0_76] : memref<512x128xbf16, #tpu.memory_space<vmem>>, vector<512x128xbf16>
    %cst_77 = arith.constant dense<0.000000e+00> : vector<16x128xf32>
    %114 = tpu.matmul %109, %113, %cst_77 {dimension_numbers = #tpu.dot_dimension_numbers<[1], [0], [0], [1], [0, 0, 1, 1], [], []>} : vector<16x512xbf16>, vector<512x128xbf16>, vector<16x128xf32> -> vector<16x128xf32>
    %c0_78 = arith.constant 0 : index
    %c0_79 = arith.constant 0 : index
    %115 = vector.load %arg11[%c0_78, %c0_79] : memref<512x128xbf16, #tpu.memory_space<vmem>>, vector<512x128xbf16>
    %cst_80 = arith.constant dense<0.000000e+00> : vector<16x128xf32>
    %116 = tpu.matmul %112, %115, %cst_80 {dimension_numbers = #tpu.dot_dimension_numbers<[1], [0], [0], [1], [0, 0, 1, 1], [], []>} : vector<16x512xbf16>, vector<512x128xbf16>, vector<16x128xf32> -> vector<16x128xf32>
    %117 = arith.addf %114, %116 : vector<16x128xf32>
    %c0_81 = arith.constant 0 : index
    %c0_82 = arith.constant 0 : index
    %118 = vector.load %arg12[%c0_81, %c0_82] : memref<1x128xf32, #tpu.memory_space<vmem>>, vector<1x128xf32>
    %119 = vector.broadcast %118 : vector<1x128xf32> to vector<16x128xf32>
    %120 = arith.addf %117, %119 : vector<16x128xf32>
    %c0_83 = arith.constant 0 : index
    %c0_84 = arith.constant 0 : index
    %121 = vector.load %arg13[%c0_83, %c0_84] : memref<16x128xf32, #tpu.memory_space<vmem>>, vector<16x128xf32>
    tpu.vector_store %arg13[%c0_83, %c0_84], %120 {strides = array<i32>} : memref<16x128xf32, #tpu.memory_space<vmem>>, vector<16x128xf32>,
    return
  }
  func.func @transform_0(%arg0: i32) -> (i32, i32, i32) {
    %c0_i32 = arith.constant 0 : i32
    %c0_i32_0 = arith.constant 0 : i32
    %c0_i32_1 = arith.constant 0 : i32
    return %c0_i32, %arg0, %c0_i32_0 : i32, i32, i32
  }
  func.func @transform_1(%arg0: i32) -> (i32, i32) {
    %c0_i32 = arith.constant 0 : i32
    %c0_i32_0 = arith.constant 0 : i32
    %c0_i32_1 = arith.constant 0 : i32
    return %c0_i32, %c0_i32_0 : i32, i32
  }
  func.func @transform_2(%arg0: i32) -> (i32, i32) {
    %c0_i32 = arith.constant 0 : i32
    %c0_i32_0 = arith.constant 0 : i32
    %c0_i32_1 = arith.constant 0 : i32
    return %c0_i32, %c0_i32_0 : i32, i32
  }
  func.func @transform_3(%arg0: i32) -> (i32, i32, i32) {
    %c0_i32 = arith.constant 0 : i32
    %c0_i32_0 = arith.constant 0 : i32
    %c0_i32_1 = arith.constant 0 : i32
    %c0_i32_2 = arith.constant 0 : i32
    return %c0_i32, %c0_i32_0, %c0_i32_1 : i32, i32, i32
  }
  func.func @transform_4(%arg0: i32) -> (i32, i32) {
    %c0_i32 = arith.constant 0 : i32
    %c0_i32_0 = arith.constant 0 : i32
    %c0_i32_1 = arith.constant 0 : i32
    return %c0_i32, %c0_i32_0 : i32, i32
  }
  func.func @transform_5(%arg0: i32) -> (i32, i32) {
    %c0_i32 = arith.constant 0 : i32
    %c0_i32_0 = arith.constant 0 : i32
    %c0_i32_1 = arith.constant 0 : i32
    return %c0_i32, %c0_i32_0 : i32, i32
  }
  func.func @transform_6(%arg0: i32) -> (i32, i32) {
    %c0_i32 = arith.constant 0 : i32
    %c0_i32_0 = arith.constant 0 : i32
    %c0_i32_1 = arith.constant 0 : i32
    return %c0_i32, %c0_i32_0 : i32, i32
  }
  func.func @transform_7(%arg0: i32) -> (i32, i32) {
    %c0_i32 = arith.constant 0 : i32
    %c0_i32_0 = arith.constant 0 : i32
    %c0_i32_1 = arith.constant 0 : i32
    return %c0_i32, %c0_i32_0 : i32, i32
  }
  func.func @transform_8(%arg0: i32) -> (i32, i32) {
    %c0_i32 = arith.constant 0 : i32
    %c0_i32_0 = arith.constant 0 : i32
    %c0_i32_1 = arith.constant 0 : i32
    return %c0_i32, %c0_i32_0 : i32, i32
  }
  func.func @transform_9(%arg0: i32) -> (i32, i32) {
    %c0_i32 = arith.constant 0 : i32
    %c0_i32_0 = arith.constant 0 : i32
    %c0_i32_1 = arith.constant 0 : i32
    return %c0_i32, %c0_i32_0 : i32, i32
  }
  func.func @transform_10(%arg0: i32) -> (i32, i32) {
    %c0_i32 = arith.constant 0 : i32
    %c0_i32_0 = arith.constant 0 : i32
    %c0_i32_1 = arith.constant 0 : i32
    return %c0_i32, %c0_i32_0 : i32, i32
  }
  func.func @transform_11(%arg0: i32) -> (i32, i32) {
    %c0_i32 = arith.constant 0 : i32
    %c0_i32_0 = arith.constant 0 : i32
    %c0_i32_1 = arith.constant 0 : i32
    return %c0_i32, %c0_i32_0 : i32, i32
  }
  func.func @transform_12(%arg0: i32) -> (i32, i32) {
    %c0_i32 = arith.constant 0 : i32
    %c0_i32_0 = arith.constant 0 : i32
    return %arg0, %c0_i32 : i32, i32
  }
}

</mosaic_0001>

<llo_original>
// kernel: cnn_actor_critic_forward.1
$region0: #{cnn_actor_critic_forward.1}
  #allocation0 [shape = 'u32[]', space=smem, size = 0x4, offset = 0x4, fixed_abs, tag = 'smem constant byte address 0x4 - core index']
  #allocation1 [shape = 'u32[144,128]{1,0:T(1,128)}', space=vmem, size = 0x12000, scoped, tag = 'internal scratch']
  %s0 = inlined_call_operand.vmem [shape: bf16[7,16,144], index: 0, kind: input, shape index: {}]
  %s1 = inlined_call_operand.hbm [shape: bf16[144,256], index: 1, kind: input, shape index: {}]
  %s2 = inlined_call_operand.vmem [shape: f32[1,256], index: 2, kind: input, shape index: {}]
  %s3 = inlined_call_operand.hbm [shape: bf16[7,256,256], index: 3, kind: input, shape index: {}]
  %s4 = inlined_call_operand.vmem [shape: f32[1,256], index: 4, kind: input, shape index: {}]
  %s5 = inlined_call_operand.vmem [shape: bf16[256,512], index: 5, kind: input, shape index: {}]
  %s6 = inlined_call_operand.vmem [shape: f32[1,512], index: 6, kind: input, shape index: {}]
  %s7 = inlined_call_operand.hbm [shape: bf16[512,1024], index: 7, kind: input, shape index: {}]
  %s8 = inlined_call_operand.vmem [shape: f32[1,1024], index: 8, kind: input, shape index: {}]
  %s9 = inlined_call_operand.vmem [shape: bf16[512,128], index: 9, kind: input, shape index: {}]
  %s10 = inlined_call_operand.vmem [shape: bf16[512,128], index: 10, kind: input, shape index: {}]
  %s11 = inlined_call_operand.vmem [shape: f32[1,128], index: 11, kind: input, shape index: {}]
  %s12 = inlined_call_operand.vmem [shape: f32[16,128], index: 12, kind: output, shape index: {}]
  %s13 = sld [smem:[#allocation0]]
  $region70: #{cnn_actor_critic_forward.1} parent=0
    _
  %s15 = ssub.s32 1, %s13
  %s16 = scalar_select 0, %s15, %s13
  $region1: #{cnn_actor_critic_forward.1} parent=0
    #allocation2 [shape = 'u8[73728]{0}', space=vmem, size = 0x12000, scoped, tag = 'input window, operand 1, single buffered']
    #allocation3 [shape = 's32[1]{0}', space=sflag, size = 0x4, scoped, tag = 'scoped memory for cnn_actor_critic_forward.1']
    #allocation4 [shape = 'u8[917504]{0}', space=vmem, size = 0xe0000, scoped, tag = 'input window, operand 3, single buffered']
    #allocation5 [shape = 's32[1]{0}', space=sflag, size = 0x4, scoped, tag = 'scoped memory for cnn_actor_critic_forward.1']
    #allocation6 [shape = 'u8[1048576]{0}', space=vmem, size = 0x100000, scoped, tag = 'input window, operand 7, single buffered']
    %17 = vsyncpa [#allocation3], 0
    %18 = vsyncpa [#allocation5], 0
    // Predicated region
    $region2: #{cnn_actor_critic_forward.1} parent=1 // pred_check
      _
    $region3: #{cnn_actor_critic_forward.1} parent=1 // pred_check_branch
      %20 = sbr.rel (0) target = $region5
    $region4: #{cnn_actor_critic_forward.1} parent=1 // pred_region
      _
    $region5: #{cnn_actor_critic_forward.1} parent=1 // pred_fallthru
      _
    // Predicated region
    $region6: #{cnn_actor_critic_forward.1} parent=1 // pred_check
      _
    $region7: #{cnn_actor_critic_forward.1} parent=1 // pred_check_branch
      %22 = sbr.rel (0) target = $region9
    $region8: #{cnn_actor_critic_forward.1} parent=1 // pred_region
      %s24 = ssub.s32 2304, 2304
      %25 = vsyncadd [#allocation3], %s24
      %s26 = sshll.u32 [#allocation2], 4
      %s27 = int_to_ptr.vmem [resolvable:$true] %s26
      %32 = dma.hbm_to_vmem [thread:$0]  %s1, 2304, %s27, [#allocation3], 128, 128, 8
    $region9: #{cnn_actor_critic_forward.1} parent=1 // pred_fallthru
      _
    // Predicated region
    $region10: #{cnn_actor_critic_forward.1} parent=1 // pred_check
      _
    $region11: #{cnn_actor_critic_forward.1} parent=1 // pred_check_branch
      %34 = sbr.rel (0) target = $region13
    $region12: #{cnn_actor_critic_forward.1} parent=1 // pred_region
      _
    $region13: #{cnn_actor_critic_forward.1} parent=1 // pred_fallthru
      _
    // Predicated region
    $region14: #{cnn_actor_critic_forward.1} parent=1 // pred_check
      _
    $region15: #{cnn_actor_critic_forward.1} parent=1 // pred_check_branch
      %36 = sbr.rel (0) target = $region17
    $region16: #{cnn_actor_critic_forward.1} parent=1 // pred_region
      %s38 = ssub.s32 28672, 28672
      %39 = vsyncadd [#allocation5], %s38
      %s40 = sshll.u32 [#allocation4], 4
      %s41 = int_to_ptr.vmem [resolvable:$true] %s40
      %46 = dma.hbm_to_vmem [thread:$0]  %s3, 28672, %s41, [#allocation5], 128, 128, 8
    $region17: #{cnn_actor_critic_forward.1} parent=1 // pred_fallthru
      _
    // Predicated region
    $region18: #{cnn_actor_critic_forward.1} parent=1 // pred_check
      _
    $region19: #{cnn_actor_critic_forward.1} parent=1 // pred_check_branch
      %48 = sbr.rel (0) target = $region21
    $region20: #{cnn_actor_critic_forward.1} parent=1 // pred_region
      _
    $region21: #{cnn_actor_critic_forward.1} parent=1 // pred_fallthru
      _
    // Predicated region
    $region22: #{cnn_actor_critic_forward.1} parent=1 // pred_check
      _
    $region23: #{cnn_actor_critic_forward.1} parent=1 // pred_check_branch
      %50 = sbr.rel (0) target = $region25
    $region24: #{cnn_actor_critic_forward.1} parent=1 // pred_region
      _
    $region25: #{cnn_actor_critic_forward.1} parent=1 // pred_fallthru
      _
    // Predicated region
    $region26: #{cnn_actor_critic_forward.1} parent=1 // pred_check
      _
    $region27: #{cnn_actor_critic_forward.1} parent=1 // pred_check_branch
      %52 = sbr.rel (0) target = $region29
    $region28: #{cnn_actor_critic_forward.1} parent=1 // pred_region
      _
    $region29: #{cnn_actor_critic_forward.1} parent=1 // pred_fallthru
      _
    // Predicated region
    $region30: #{cnn_actor_critic_forward.1} parent=1 // pred_check
      _
    $region31: #{cnn_actor_critic_forward.1} parent=1 // pred_check_branch
      %54 = sbr.rel (0) target = $region33
    $region32: #{cnn_actor_critic_forward.1} parent=1 // pred_region
      %s56 = ssub.s32 32768, 32768
      %57 = vsyncadd [#allocation5], %s56
      %s58 = sshll.u32 [#allocation6], 4
      %s59 = int_to_ptr.vmem [resolvable:$true] %s58
      %64 = dma.hbm_to_vmem [thread:$0]  %s7, 32768, %s59, [#allocation5], 512, 512, 32
    $region33: #{cnn_actor_critic_forward.1} parent=1 // pred_fallthru
      _
    // Predicated region
    $region34: #{cnn_actor_critic_forward.1} parent=1 // pred_check
      _
    $region35: #{cnn_actor_critic_forward.1} parent=1 // pred_check_branch
      %66 = sbr.rel (0) target = $region37
    $region36: #{cnn_actor_critic_forward.1} parent=1 // pred_region
      _
    $region37: #{cnn_actor_critic_forward.1} parent=1 // pred_fallthru
      _
    // Predicated region
    $region38: #{cnn_actor_critic_forward.1} parent=1 // pred_check
      _
    $region39: #{cnn_actor_critic_forward.1} parent=1 // pred_check_branch
      %68 = sbr.rel (0) target = $region41
    $region40: #{cnn_actor_critic_forward.1} parent=1 // pred_region
      _
    $region41: #{cnn_actor_critic_forward.1} parent=1 // pred_fallthru
      _
    // Predicated region
    $region42: #{cnn_actor_critic_forward.1} parent=1 // pred_check
      _
    $region43: #{cnn_actor_critic_forward.1} parent=1 // pred_check_branch
      %70 = sbr.rel (0) target = $region45
    $region44: #{cnn_actor_critic_forward.1} parent=1 // pred_region
      _
    $region45: #{cnn_actor_critic_forward.1} parent=1 // pred_fallthru
      _
    // Predicated region
    $region46: #{cnn_actor_critic_forward.1} parent=1 // pred_check
      _
    $region47: #{cnn_actor_critic_forward.1} parent=1 // pred_check_branch
      %72 = sbr.rel (0) target = $region49
    $region48: #{cnn_actor_critic_forward.1} parent=1 // pred_region
      _
    $region49: #{cnn_actor_critic_forward.1} parent=1 // pred_fallthru
      _
    // Predicated region
    $region50: #{cnn_actor_critic_forward.1} parent=1 // pred_check
      _
    $region51: #{cnn_actor_critic_forward.1} parent=1 // pred_check_branch
      %74 = sbr.rel (0) target = $region53
    $region52: #{cnn_actor_critic_forward.1} parent=1 // pred_region
      %75 = dma.done [#allocation3], 2304
    $region53: #{cnn_actor_critic_forward.1} parent=1 // pred_fallthru
      _
    // Predicated region
    $region54: #{cnn_actor_critic_forward.1} parent=1 // pred_check
      _
    $region55: #{cnn_actor_critic_forward.1} parent=1 // pred_check_branch
      %77 = sbr.rel (0) target = $region57
    $region56: #{cnn_actor_critic_forward.1} parent=1 // pred_region
      %78 = dma.done [#allocation5], 28672
    $region57: #{cnn_actor_critic_forward.1} parent=1 // pred_fallthru
      _
    // Predicated region
    $region58: #{cnn_actor_critic_forward.1} parent=1 // pred_check
      _
    $region59: #{cnn_actor_critic_forward.1} parent=1 // pred_check_branch
      %80 = sbr.rel (0) target = $region61
    $region60: #{cnn_actor_critic_forward.1} parent=1 // pred_region
      %81 = dma.done [#allocation5], 32768
    $region61: #{cnn_actor_critic_forward.1} parent=1 // pred_fallthru
      _
    %v83 = vld [vmem:[#allocation2] sm:$0xff]
    %v84 = vld [vmem:[#allocation2 + $0x8] sm:$0xff]
    %v85 = vld [vmem:[#allocation2 + $0x10] sm:$0xff]
    %v86 = vld [vmem:[#allocation2 + $0x18] sm:$0xff]
    %v87 = vld [vmem:[#allocation2 + $0x20] sm:$0xff]
    %v88 = vld [vmem:[#allocation2 + $0x28] sm:$0xff]
    %v89 = vld [vmem:[#allocation2 + $0x30] sm:$0xff]
    %v90 = vld [vmem:[#allocation2 + $0x38] sm:$0xff]
    %v91 = vld [vmem:[#allocation2 + $0x40] sm:$0xff]
    %v92 = vld [vmem:[#allocation2 + $0x48] sm:$0xff]
    %v93 = vld [vmem:[#allocation2 + $0x50] sm:$0xff]
    %v94 = vld [vmem:[#allocation2 + $0x58] sm:$0xff]
    %v95 = vld [vmem:[#allocation2 + $0x60] sm:$0xff]
    %v96 = vld [vmem:[#allocation2 + $0x68] sm:$0xff]
    %v97 = vld [vmem:[#allocation2 + $0x70] sm:$0xff]
    %v98 = vld [vmem:[#allocation2 + $0x78] sm:$0xff]
    %v99 = vld [vmem:[#allocation2 + $0x80] sm:$0xff]
    %v100 = vld [vmem:[#allocation2 + $0x88] sm:$0xff]
    %v101 = vld [vmem:[%s2] sm:$0x3]
    %v102 = vld [vmem:[%s0] sm:$0xff]
    %v103 = vld [vmem:[%s0 + $0x8] sm:$0xff]
    %v105 = vlaneseq
    %v106 = vshrl.u32 %v105, 7
    %v107 = vsub.s32 0, %v106
    %v108 = vrot.slane %v101, %v107
    %v109 = vlaneseq
    %v110 = vshrl.u32 %v109, 7
    %v111 = vsub.s32 1, %v110
    %v112 = vrot.slane %v101, %v111
    %v117 = vunpack.c.l.b16 %v102
    %v118 = vunpack.c.h.b16 %v102
    %v119 = vunpack.c.l.b16 %v103
    %v120 = vunpack.c.h.b16 %v103
    %v121 = vpack.c.b16 %v119, %v117
    %v122 = vpack.c.b16 %v120, %v118
    %v142 = vunpack.c.l.b16 %v83
    %v143 = vunpack.c.h.b16 %v83
    %v144 = vunpack.c.l.b16 %v84
    %v145 = vunpack.c.h.b16 %v84
    %v146 = vunpack.c.l.b16 %v85
    %v147 = vunpack.c.h.b16 %v85
    %v148 = vunpack.c.l.b16 %v86
    %v149 = vunpack.c.h.b16 %v86
    %v150 = vunpack.c.l.b16 %v87
    %v151 = vunpack.c.h.b16 %v87
    %v152 = vunpack.c.l.b16 %v88
    %v153 = vunpack.c.h.b16 %v88
    %v154 = vunpack.c.l.b16 %v89
    %v155 = vunpack.c.h.b16 %v89
    %v156 = vunpack.c.l.b16 %v90
    %v157 = vunpack.c.h.b16 %v90
    %v158 = vunpack.c.l.b16 %v91
    %v159 = vunpack.c.h.b16 %v91
    %v160 = vunpack.c.l.b16 %v92
    %v161 = vunpack.c.h.b16 %v92
    %v162 = vunpack.c.l.b16 %v93
    %v163 = vunpack.c.h.b16 %v93
    %v164 = vunpack.c.l.b16 %v94
    %v165 = vunpack.c.h.b16 %v94
    %v166 = vunpack.c.l.b16 %v95
    %v167 = vunpack.c.h.b16 %v95
    %v168 = vunpack.c.l.b16 %v96
    %v169 = vunpack.c.h.b16 %v96
    %v170 = vunpack.c.l.b16 %v97
    %v171 = vunpack.c.h.b16 %v97
    %v172 = vunpack.c.l.b16 %v98
    %v173 = vunpack.c.h.b16 %v98
    %v174 = vunpack.c.l.b16 %v99
    %v175 = vunpack.c.h.b16 %v99
    %v176 = vunpack.c.l.b16 %v100
    %v177 = vunpack.c.h.b16 %v100
    %v178 = vpack.c.b16 %v144, %v142
    %v179 = vpack.c.b16 %v145, %v143
    %v180 = vpack.c.b16 %v148, %v146
    %v181 = vpack.c.b16 %v149, %v147
    %v182 = vpack.c.b16 %v152, %v150
    %v183 = vpack.c.b16 %v153, %v151
    %v184 = vpack.c.b16 %v156, %v154
    %v185 = vpack.c.b16 %v157, %v155
    %v186 = vpack.c.b16 %v160, %v158
    %v187 = vpack.c.b16 %v161, %v159
    %v188 = vpack.c.b16 %v164, %v162
    %v189 = vpack.c.b16 %v165, %v163
    %v190 = vpack.c.b16 %v168, %v166
    %v191 = vpack.c.b16 %v169, %v167
    %v192 = vpack.c.b16 %v172, %v170
    %v193 = vpack.c.b16 %v173, %v171
    %v194 = vpack.c.b16 %v176, %v174
    %v195 = vpack.c.b16 %v177, %v175
    %vm214 = vcmask 130048
    %v216 = vsel %vm214, %v122, 0
    %218 = vmatprep.subr.bf16.mxu0 %v179
    %219 = vmatpush1.bf16.msra.mxu0 %v178
    %220 = vmatprep.subr.bf16.mxu0 %v181
    %221 = vmatpush1.bf16.msra.mxu0 %v180
    %222 = vmatprep.subr.bf16.mxu0 %v183
    %223 = vmatpush1.bf16.msra.mxu0 %v182
    %224 = vmatprep.subr.bf16.mxu0 %v185
    %225 = vmatpush1.bf16.msra.mxu0 %v184
    %226 = vmatprep.subr.bf16.mxu0 %v187
    %227 = vmatpush1.bf16.msra.mxu0 %v186
    %228 = vmatprep.subr.bf16.mxu0 %v189
    %229 = vmatpush1.bf16.msra.mxu0 %v188
    %230 = vmatprep.subr.bf16.mxu0 %v191
    %231 = vmatpush1.bf16.msra.mxu0 %v190
    %232 = vmatprep.subr.bf16.mxu0 %v193
    %233 = vmatpush1.bf16.msra.mxu0 %v192
    %234 = vmatprep.subr.bf16.mxu0 %v195
    %235 = vmatpush1.bf16.msra.mxu0 %v194
    %236 = vmatprep.subr.bf16.mxu0 0
    %237 = vmatpush1.bf16.msra.mxu0 0
    %238 = vmatprep.subr.bf16.mxu0 0
    %239 = vmatpush1.bf16.msra.mxu0 0
    %240 = vmatprep.subr.bf16.mxu0 0
    %241 = vmatpush1.bf16.msra.mxu0 0
    %242 = vmatprep.subr.bf16.mxu0 0
    %243 = vmatpush1.bf16.msra.mxu0 0
    %244 = vmatprep.subr.bf16.mxu0 0
    %245 = vmatpush1.bf16.msra.mxu0 0
    %246 = vmatprep.subr.bf16.mxu0 0
    %247 = vmatpush1.bf16.msra.mxu0 0
    %248 = vmatprep.subr.bf16.mxu0 0
    %249 = vmatpush1.bf16.msra.mxu0 0
    %250 = vmatprep.mubr.bf16.mxu0 %v216
    %251 = vmatmul.mubr.bf16.gmra.mrb[0].mxu0 %v121
    %v252 = vpop.f32.mrb[0].mxu0
    %v253 = vadd.f32 %v108, %v252
    %v254 = vpop.f32.mrb[0].mxu0
    %v255 = vadd.f32 %v112, %v254
    %v256 = vpop.f32.mrb[0].mxu0
    %v257 = vadd.f32 %v108, %v256
    %v258 = vpop.f32.mrb[0].mxu0
    %v259 = vadd.f32 %v112, %v258
    %260 = vdwg.mxu0
    %v261 = vmax.f32 %v253, 0.0
    %v262 = vmax.f32 %v255, 0.0
    %v263 = vmax.f32 %v257, 0.0
    %v264 = vmax.f32 %v259, 0.0
    %v265 = vpack.c.bf16 %v263, %v261
    %v266 = vpack.c.bf16 %v264, %v262
    %v267 = vld [vmem:[#allocation4] sm:$0xff]
    %v268 = vld [vmem:[#allocation4 + $0x8] sm:$0xff]
    %v269 = vld [vmem:[#allocation4 + $0x10] sm:$0xff]
    %v270 = vld [vmem:[#allocation4 + $0x18] sm:$0xff]
    %v271 = vld [vmem:[#allocation4 + $0x20] sm:$0xff]
    %v272 = vld [vmem:[#allocation4 + $0x28] sm:$0xff]
    %v273 = vld [vmem:[#allocation4 + $0x30] sm:$0xff]
    %v274 = vld [vmem:[#allocation4 + $0x38] sm:$0xff]
    %v275 = vld [vmem:[#allocation4 + $0x40] sm:$0xff]
    %v276 = vld [vmem:[#allocation4 + $0x48] sm:$0xff]
    %v277 = vld [vmem:[#allocation4 + $0x50] sm:$0xff]
    %v278 = vld [vmem:[#allocation4 + $0x58] sm:$0xff]
    %v279 = vld [vmem:[#allocation4 + $0x60] sm:$0xff]
    %v280 = vld [vmem:[#allocation4 + $0x68] sm:$0xff]
    %v281 = vld [vmem:[#allocation4 + $0x70] sm:$0xff]
    %v282 = vld [vmem:[#allocation4 + $0x78] sm:$0xff]
    %v283 = vld [vmem:[#allocation4 + $0x80] sm:$0xff]
    %v284 = vld [vmem:[#allocation4 + $0x88] sm:$0xff]
    %v285 = vld [vmem:[#allocation4 + $0x90] sm:$0xff]
    %v286 = vld [vmem:[#allocation4 + $0x98] sm:$0xff]
    %v287 = vld [vmem:[#allocation4 + $0xa0] sm:$0xff]
    %v288 = vld [vmem:[#allocation4 + $0xa8] sm:$0xff]
    %v289 = vld [vmem:[#allocation4 + $0xb0] sm:$0xff]
    %v290 = vld [vmem:[#allocation4 + $0xb8] sm:$0xff]
    %v291 = vld [vmem:[#allocation4 + $0xc0] sm:$0xff]
    %v292 = vld [vmem:[#allocation4 + $0xc8] sm:$0xff]
    %v293 = vld [vmem:[#allocation4 + $0xd0] sm:$0xff]
    %v294 = vld [vmem:[#allocation4 + $0xd8] sm:$0xff]
    %v295 = vld [vmem:[#allocation4 + $0xe0] sm:$0xff]
    %v296 = vld [vmem:[#allocation4 + $0xe8] sm:$0xff]
    %v297 = vld [vmem:[#allocation4 + $0xf0] sm:$0xff]
    %v298 = vld [vmem:[#allocation4 + $0xf8] sm:$0xff]
    %s299 = scalar_lea.vmem %s0, 16
    %v300 = vld [vmem:[%s299] sm:$0xff]
    %v301 = vld [vmem:[%s299 + $0x8] sm:$0xff]
    %v304 = vunpack.c.l.b16 %v300
    %v305 = vunpack.c.h.b16 %v300
    %v306 = vunpack.c.l.b16 %v301
    %v307 = vunpack.c.h.b16 %v301
    %v308 = vpack.c.b16 %v306, %v304
    %v309 = vpack.c.b16 %v307, %v305
    %v312 = vsel %vm214, %v309, 0
    %314 = vmatprep.subr.bf16.mxu0 %v179
    %315 = vmatpush1.bf16.msra.mxu0 %v178
    %316 = vmatprep.subr.bf16.mxu0 %v181
    %317 = vmatpush1.bf16.msra.mxu0 %v180
    %318 = vmatprep.subr.bf16.mxu0 %v183
    %319 = vmatpush1.bf16.msra.mxu0 %v182
    %320 = vmatprep.subr.bf16.mxu0 %v185
    %321 = vmatpush1.bf16.msra.mxu0 %v184
    %322 = vmatprep.subr.bf16.mxu0 %v187
    %323 = vmatpush1.bf16.msra.mxu0 %v186
    %324 = vmatprep.subr.bf16.mxu0 %v189
    %325 = vmatpush1.bf16.msra.mxu0 %v188
    %326 = vmatprep.subr.bf16.mxu0 %v191
    %327 = vmatpush1.bf16.msra.mxu0 %v190
    %328 = vmatprep.subr.bf16.mxu0 %v193
    %329 = vmatpush1.bf16.msra.mxu0 %v192
    %330 = vmatprep.subr.bf16.mxu0 %v195
    %331 = vmatpush1.bf16.msra.mxu0 %v194
    %332 = vmatprep.subr.bf16.mxu0 0
    %333 = vmatpush1.bf16.msra.mxu0 0
    %334 = vmatprep.subr.bf16.mxu0 0
    %335 = vmatpush1.bf16.msra.mxu0 0
    %336 = vmatprep.subr.bf16.mxu0 0
    %337 = vmatpush1.bf16.msra.mxu0 0
    %338 = vmatprep.subr.bf16.mxu0 0
    %339 = vmatpush1.bf16.msra.mxu0 0
    %340 = vmatprep.subr.bf16.mxu0 0
    %341 = vmatpush1.bf16.msra.mxu0 0
    %342 = vmatprep.subr.bf16.mxu0 0
    %343 = vmatpush1.bf16.msra.mxu0 0
    %344 = vmatprep.subr.bf16.mxu0 0
    %345 = vmatpush1.bf16.msra.mxu0 0
    %346 = vmatprep.mubr.bf16.mxu0 %v312
    %347 = vmatmul.mubr.bf16.gmra.mrb[0].mxu0 %v308
    %v348 = vpop.f32.mrb[0].mxu0
    %v349 = vadd.f32 %v108, %v348
    %v350 = vpop.f32.mrb[0].mxu0
    %v351 = vadd.f32 %v112, %v350
    %v352 = vpop.f32.mrb[0].mxu0
    %v353 = vadd.f32 %v108, %v352
    %v354 = vpop.f32.mrb[0].mxu0
    %v355 = vadd.f32 %v112, %v354
    %356 = vdwg.mxu0
    %v357 = vmax.f32 %v349, 0.0
    %v358 = vmax.f32 %v351, 0.0
    %v359 = vmax.f32 %v353, 0.0
    %v360 = vmax.f32 %v355, 0.0
    %v361 = vpack.c.bf16 %v359, %v357
    %v362 = vpack.c.bf16 %v360, %v358
    %s363 = scalar_lea.vmem [#allocation4], 256
    %v364 = vld [vmem:[%s363] sm:$0xff]
    %v365 = vld [vmem:[%s363 + $0x8] sm:$0xff]
    %v366 = vld [vmem:[%s363 + $0x10] sm:$0xff]
    %v367 = vld [vmem:[%s363 + $0x18] sm:$0xff]
    %v368 = vld [vmem:[%s363 + $0x20] sm:$0xff]
    %v369 = vld [vmem:[%s363 + $0x28] sm:$0xff]
    %v370 = vld [vmem:[%s363 + $0x30] sm:$0xff]
    %v371 = vld [vmem:[%s363 + $0x38] sm:$0xff]
    %v372 = vld [vmem:[%s363 + $0x40] sm:$0xff]
    %v373 = vld [vmem:[%s363 + $0x48] sm:$0xff]
    %v374 = vld [vmem:[%s363 + $0x50] sm:$0xff]
    %v375 = vld [vmem:[%s363 + $0x58] sm:$0xff]
    %v376 = vld [vmem:[%s363 + $0x60] sm:$0xff]
    %v377 = vld [vmem:[%s363 + $0x68] sm:$0xff]
    %v378 = vld [vmem:[%s363 + $0x70] sm:$0xff]
    %v379 = vld [vmem:[%s363 + $0x78] sm:$0xff]
    %v380 = vld [vmem:[%s363 + $0x80] sm:$0xff]
    %v381 = vld [vmem:[%s363 + $0x88] sm:$0xff]
    %v382 = vld [vmem:[%s363 + $0x90] sm:$0xff]
    %v383 = vld [vmem:[%s363 + $0x98] sm:$0xff]
    %v384 = vld [vmem:[%s363 + $0xa0] sm:$0xff]
    %v385 = vld [vmem:[%s363 + $0xa8] sm:$0xff]
    %v386 = vld [vmem:[%s363 + $0xb0] sm:$0xff]
    %v387 = vld [vmem:[%s363 + $0xb8] sm:$0xff]
    %v388 = vld [vmem:[%s363 + $0xc0] sm:$0xff]
    %v389 = vld [vmem:[%s363 + $0xc8] sm:$0xff]
    %v390 = vld [vmem:[%s363 + $0xd0] sm:$0xff]
    %v391 = vld [vmem:[%s363 + $0xd8] sm:$0xff]
    %v392 = vld [vmem:[%s363 + $0xe0] sm:$0xff]
    %v393 = vld [vmem:[%s363 + $0xe8] sm:$0xff]
    %v394 = vld [vmem:[%s363 + $0xf0] sm:$0xff]
    %v395 = vld [vmem:[%s363 + $0xf8] sm:$0xff]
    %v428 = vunpack.c.l.b16 %v364
    %v429 = vunpack.c.h.b16 %v364
    %v430 = vunpack.c.l.b16 %v365
    %v431 = vunpack.c.h.b16 %v365
    %v432 = vunpack.c.l.b16 %v366
    %v433 = vunpack.c.h.b16 %v366
    %v434 = vunpack.c.l.b16 %v367
    %v435 = vunpack.c.h.b16 %v367
    %v436 = vunpack.c.l.b16 %v368
    %v437 = vunpack.c.h.b16 %v368
    %v438 = vunpack.c.l.b16 %v369
    %v439 = vunpack.c.h.b16 %v369
    %v440 = vunpack.c.l.b16 %v370
    %v441 = vunpack.c.h.b16 %v370
    %v442 = vunpack.c.l.b16 %v371
    %v443 = vunpack.c.h.b16 %v371
    %v444 = vunpack.c.l.b16 %v372
    %v445 = vunpack.c.h.b16 %v372
    %v446 = vunpack.c.l.b16 %v373
    %v447 = vunpack.c.h.b16 %v373
    %v448 = vunpack.c.l.b16 %v374
    %v449 = vunpack.c.h.b16 %v374
    %v450 = vunpack.c.l.b16 %v375
    %v451 = vunpack.c.h.b16 %v375
    %v452 = vunpack.c.l.b16 %v376
    %v453 = vunpack.c.h.b16 %v376
    %v454 = vunpack.c.l.b16 %v377
    %v455 = vunpack.c.h.b16 %v377
    %v456 = vunpack.c.l.b16 %v378
    %v457 = vunpack.c.h.b16 %v378
    %v458 = vunpack.c.l.b16 %v379
    %v459 = vunpack.c.h.b16 %v379
    %v460 = vunpack.c.l.b16 %v380
    %v461 = vunpack.c.h.b16 %v380
    %v462 = vunpack.c.l.b16 %v381
    %v463 = vunpack.c.h.b16 %v381
    %v464 = vunpack.c.l.b16 %v382
    %v465 = vunpack.c.h.b16 %v382
    %v466 = vunpack.c.l.b16 %v383
    %v467 = vunpack.c.h.b16 %v383
    %v468 = vunpack.c.l.b16 %v384
    %v469 = vunpack.c.h.b16 %v384
    %v470 = vunpack.c.l.b16 %v385
    %v471 = vunpack.c.h.b16 %v385
    %v472 = vunpack.c.l.b16 %v386
    %v473 = vunpack.c.h.b16 %v386
    %v474 = vunpack.c.l.b16 %v387
    %v475 = vunpack.c.h.b16 %v387
    %v476 = vunpack.c.l.b16 %v388
    %v477 = vunpack.c.h.b16 %v388
    %v478 = vunpack.c.l.b16 %v389
    %v479 = vunpack.c.h.b16 %v389
    %v480 = vunpack.c.l.b16 %v390
    %v481 = vunpack.c.h.b16 %v390
    %v482 = vunpack.c.l.b16 %v391
    %v483 = vunpack.c.h.b16 %v391
    %v484 = vunpack.c.l.b16 %v392
    %v485 = vunpack.c.h.b16 %v392
    %v486 = vunpack.c.l.b16 %v393
    %v487 = vunpack.c.h.b16 %v393
    %v488 = vunpack.c.l.b16 %v394
    %v489 = vunpack.c.h.b16 %v394
    %v490 = vunpack.c.l.b16 %v395
    %v491 = vunpack.c.h.b16 %v395
    %v492 = vpack.c.b16 %v430, %v428
    %v493 = vpack.c.b16 %v431, %v429
    %v494 = vpack.c.b16 %v434, %v432
    %v495 = vpack.c.b16 %v435, %v433
    %v496 = vpack.c.b16 %v438, %v436
    %v497 = vpack.c.b16 %v439, %v437
    %v498 = vpack.c.b16 %v442, %v440
    %v499 = vpack.c.b16 %v443, %v441
    %v500 = vpack.c.b16 %v446, %v444
    %v501 = vpack.c.b16 %v447, %v445
    %v502 = vpack.c.b16 %v450, %v448
    %v503 = vpack.c.b16 %v451, %v449
    %v504 = vpack.c.b16 %v454, %v452
    %v505 = vpack.c.b16 %v455, %v453
    %v506 = vpack.c.b16 %v458, %v456
    %v507 = vpack.c.b16 %v459, %v457
    %v508 = vpack.c.b16 %v462, %v460
    %v509 = vpack.c.b16 %v463, %v461
    %v510 = vpack.c.b16 %v466, %v464
    %v511 = vpack.c.b16 %v467, %v465
    %v512 = vpack.c.b16 %v470, %v468
    %v513 = vpack.c.b16 %v471, %v469
    %v514 = vpack.c.b16 %v474, %v472
    %v515 = vpack.c.b16 %v475, %v473
    %v516 = vpack.c.b16 %v478, %v476
    %v517 = vpack.c.b16 %v479, %v477
    %v518 = vpack.c.b16 %v482, %v480
    %v519 = vpack.c.b16 %v483, %v481
    %v520 = vpack.c.b16 %v486, %v484
    %v521 = vpack.c.b16 %v487, %v485
    %v522 = vpack.c.b16 %v490, %v488
    %v523 = vpack.c.b16 %v491, %v489
    %556 = vmatprep.subr.bf16.mxu0 %v493
    %557 = vmatpush1.bf16.msra.mxu0 %v492
    %558 = vmatprep.subr.bf16.mxu0 %v495
    %559 = vmatpush1.bf16.msra.mxu0 %v494
    %560 = vmatprep.subr.bf16.mxu0 %v497
    %561 = vmatpush1.bf16.msra.mxu0 %v496
    %562 = vmatprep.subr.bf16.mxu0 %v499
    %563 = vmatpush1.bf16.msra.mxu0 %v498
    %564 = vmatprep.subr.bf16.mxu0 %v501
    %565 = vmatpush1.bf16.msra.mxu0 %v500
    %566 = vmatprep.subr.bf16.mxu0 %v503
    %567 = vmatpush1.bf16.msra.mxu0 %v502
    %568 = vmatprep.subr.bf16.mxu0 %v505
    %569 = vmatpush1.bf16.msra.mxu0 %v504
    %570 = vmatprep.subr.bf16.mxu0 %v507
    %571 = vmatpush1.bf16.msra.mxu0 %v506
    %572 = vmatprep.subr.bf16.mxu0 %v509
    %573 = vmatpush1.bf16.msra.mxu0 %v508
    %574 = vmatprep.subr.bf16.mxu0 %v511
    %575 = vmatpush1.bf16.msra.mxu0 %v510
    %576 = vmatprep.subr.bf16.mxu0 %v513
    %577 = vmatpush1.bf16.msra.mxu0 %v512
    %578 = vmatprep.subr.bf16.mxu0 %v515
    %579 = vmatpush1.bf16.msra.mxu0 %v514
    %580 = vmatprep.subr.bf16.mxu0 %v517
    %581 = vmatpush1.bf16.msra.mxu0 %v516
    %582 = vmatprep.subr.bf16.mxu0 %v519
    %583 = vmatpush1.bf16.msra.mxu0 %v518
    %584 = vmatprep.subr.bf16.mxu0 %v521
    %585 = vmatpush1.bf16.msra.mxu0 %v520
    %586 = vmatprep.subr.bf16.mxu0 %v523
    %587 = vmatpush1.bf16.msra.mxu0 %v522
    %588 = vmatprep.mubr.bf16.mxu0 %v362
    %589 = vmatmul.mubr.bf16.gmra.mrb[0].mxu0 %v361
    %v590 = vpop.f32.mrb[0].mxu0
    %v591 = vadd.f32 0.0, %v590
    %v592 = vpop.f32.mrb[0].mxu0
    %v593 = vadd.f32 0.0, %v592
    %v594 = vpop.f32.mrb[0].mxu0
    %v595 = vadd.f32 0.0, %v594
    %v596 = vpop.f32.mrb[0].mxu0
    %v597 = vadd.f32 0.0, %v596
    %598 = vdwg.mxu0
    %v631 = vunpack.c.l.b16 %v267
    %v632 = vunpack.c.h.b16 %v267
    %v633 = vunpack.c.l.b16 %v268
    %v634 = vunpack.c.h.b16 %v268
    %v635 = vunpack.c.l.b16 %v269
    %v636 = vunpack.c.h.b16 %v269
    %v637 = vunpack.c.l.b16 %v270
    %v638 = vunpack.c.h.b16 %v270
    %v639 = vunpack.c.l.b16 %v271
    %v640 = vunpack.c.h.b16 %v271
    %v641 = vunpack.c.l.b16 %v272
    %v642 = vunpack.c.h.b16 %v272
    %v643 = vunpack.c.l.b16 %v273
    %v644 = vunpack.c.h.b16 %v273
    %v645 = vunpack.c.l.b16 %v274
    %v646 = vunpack.c.h.b16 %v274
    %v647 = vunpack.c.l.b16 %v275
    %v648 = vunpack.c.h.b16 %v275
    %v649 = vunpack.c.l.b16 %v276
    %v650 = vunpack.c.h.b16 %v276
    %v651 = vunpack.c.l.b16 %v277
    %v652 = vunpack.c.h.b16 %v277
    %v653 = vunpack.c.l.b16 %v278
    %v654 = vunpack.c.h.b16 %v278
    %v655 = vunpack.c.l.b16 %v279
    %v656 = vunpack.c.h.b16 %v279
    %v657 = vunpack.c.l.b16 %v280
    %v658 = vunpack.c.h.b16 %v280
    %v659 = vunpack.c.l.b16 %v281
    %v660 = vunpack.c.h.b16 %v281
    %v661 = vunpack.c.l.b16 %v282
    %v662 = vunpack.c.h.b16 %v282
    %v663 = vunpack.c.l.b16 %v283
    %v664 = vunpack.c.h.b16 %v283
    %v665 = vunpack.c.l.b16 %v284
    %v666 = vunpack.c.h.b16 %v284
    %v667 = vunpack.c.l.b16 %v285
    %v668 = vunpack.c.h.b16 %v285
    %v669 = vunpack.c.l.b16 %v286
    %v670 = vunpack.c.h.b16 %v286
    %v671 = vunpack.c.l.b16 %v287
    %v672 = vunpack.c.h.b16 %v287
    %v673 = vunpack.c.l.b16 %v288
    %v674 = vunpack.c.h.b16 %v288
    %v675 = vunpack.c.l.b16 %v289
    %v676 = vunpack.c.h.b16 %v289
    %v677 = vunpack.c.l.b16 %v290
    %v678 = vunpack.c.h.b16 %v290
    %v679 = vunpack.c.l.b16 %v291
    %v680 = vunpack.c.h.b16 %v291
    %v681 = vunpack.c.l.b16 %v292
    %v682 = vunpack.c.h.b16 %v292
    %v683 = vunpack.c.l.b16 %v293
    %v684 = vunpack.c.h.b16 %v293
    %v685 = vunpack.c.l.b16 %v294
    %v686 = vunpack.c.h.b16 %v294
    %v687 = vunpack.c.l.b16 %v295
    %v688 = vunpack.c.h.b16 %v295
    %v689 = vunpack.c.l.b16 %v296
    %v690 = vunpack.c.h.b16 %v296
    %v691 = vunpack.c.l.b16 %v297
    %v692 = vunpack.c.h.b16 %v297
    %v693 = vunpack.c.l.b16 %v298
    %v694 = vunpack.c.h.b16 %v298
    %v695 = vpack.c.b16 %v633, %v631
    %v696 = vpack.c.b16 %v634, %v632
    %v697 = vpack.c.b16 %v637, %v635
    %v698 = vpack.c.b16 %v638, %v636
    %v699 = vpack.c.b16 %v641, %v639
    %v700 = vpack.c.b16 %v642, %v640
    %v701 = vpack.c.b16 %v645, %v643
    %v702 = vpack.c.b16 %v646, %v644
    %v703 = vpack.c.b16 %v649, %v647
    %v704 = vpack.c.b16 %v650, %v648
    %v705 = vpack.c.b16 %v653, %v651
    %v706 = vpack.c.b16 %v654, %v652
    %v707 = vpack.c.b16 %v657, %v655
    %v708 = vpack.c.b16 %v658, %v656
    %v709 = vpack.c.b16 %v661, %v659
    %v710 = vpack.c.b16 %v662, %v660
    %v711 = vpack.c.b16 %v665, %v663
    %v712 = vpack.c.b16 %v666, %v664
    %v713 = vpack.c.b16 %v669, %v667
    %v714 = vpack.c.b16 %v670, %v668
    %v715 = vpack.c.b16 %v673, %v671
    %v716 = vpack.c.b16 %v674, %v672
    %v717 = vpack.c.b16 %v677, %v675
    %v718 = vpack.c.b16 %v678, %v676
    %v719 = vpack.c.b16 %v681, %v679
    %v720 = vpack.c.b16 %v682, %v680
    %v721 = vpack.c.b16 %v685, %v683
    %v722 = vpack.c.b16 %v686, %v684
    %v723 = vpack.c.b16 %v689, %v687
    %v724 = vpack.c.b16 %v690, %v688
    %v725 = vpack.c.b16 %v693, %v691
    %v726 = vpack.c.b16 %v694, %v692
    %759 = vmatprep.subr.bf16.mxu0 %v696
    %760 = vmatpush1.bf16.msra.mxu0 %v695
    %761 = vmatprep.subr.bf16.mxu0 %v698
    %762 = vmatpush1.bf16.msra.mxu0 %v697
    %763 = vmatprep.subr.bf16.mxu0 %v700
    %764 = vmatpush1.bf16.msra.mxu0 %v699
    %765 = vmatprep.subr.bf16.mxu0 %v702
    %766 = vmatpush1.bf16.msra.mxu0 %v701
    %767 = vmatprep.subr.bf16.mxu0 %v704
    %768 = vmatpush1.bf16.msra.mxu0 %v703
    %769 = vmatprep.subr.bf16.mxu0 %v706
    %770 = vmatpush1.bf16.msra.mxu0 %v705
    %771 = vmatprep.subr.bf16.mxu0 %v708
    %772 = vmatpush1.bf16.msra.mxu0 %v707
    %773 = vmatprep.subr.bf16.mxu0 %v710
    %774 = vmatpush1.bf16.msra.mxu0 %v709
    %775 = vmatprep.subr.bf16.mxu0 %v712
    %776 = vmatpush1.bf16.msra.mxu0 %v711
    %777 = vmatprep.subr.bf16.mxu0 %v714
    %778 = vmatpush1.bf16.msra.mxu0 %v713
    %779 = vmatprep.subr.bf16.mxu0 %v716
    %780 = vmatpush1.bf16.msra.mxu0 %v715
    %781 = vmatprep.subr.bf16.mxu0 %v718
    %782 = vmatpush1.bf16.msra.mxu0 %v717
    %783 = vmatprep.subr.bf16.mxu0 %v720
    %784 = vmatpush1.bf16.msra.mxu0 %v719
    %785 = vmatprep.subr.bf16.mxu0 %v722
    %786 = vmatpush1.bf16.msra.mxu0 %v721
    %787 = vmatprep.subr.bf16.mxu0 %v724
    %788 = vmatpush1.bf16.msra.mxu0 %v723
    %789 = vmatprep.subr.bf16.mxu0 %v726
    %790 = vmatpush1.bf16.msra.mxu0 %v725
    %791 = vmatprep.mubr.bf16.mxu0 %v266
    %792 = vmatmul.mubr.bf16.gmra.mrb[0].mxu0 %v265
    %v793 = vpop.f32.mrb[0].mxu0
    %v794 = vadd.f32 %v591, %v793
    %v795 = vpop.f32.mrb[0].mxu0
    %v796 = vadd.f32 %v593, %v795
    %v797 = vpop.f32.mrb[0].mxu0
    %v798 = vadd.f32 %v595, %v797
    %v799 = vpop.f32.mrb[0].mxu0
    %v800 = vadd.f32 %v597, %v799
    %801 = vdwg.mxu0
    %s802 = scalar_lea.vmem %s0, 32
    %v803 = vld [vmem:[%s802] sm:$0xff]
    %v804 = vld [vmem:[%s802 + $0x8] sm:$0xff]
    %v807 = vunpack.c.l.b16 %v803
    %v808 = vunpack.c.h.b16 %v803
    %v809 = vunpack.c.l.b16 %v804
    %v810 = vunpack.c.h.b16 %v804
    %v811 = vpack.c.b16 %v809, %v807
    %v812 = vpack.c.b16 %v810, %v808
    %v815 = vsel %vm214, %v812, 0
    %817 = vmatprep.subr.bf16.mxu0 %v179
    %818 = vmatpush1.bf16.msra.mxu0 %v178
    %819 = vmatprep.subr.bf16.mxu0 %v181
    %820 = vmatpush1.bf16.msra.mxu0 %v180
    %821 = vmatprep.subr.bf16.mxu0 %v183
    %822 = vmatpush1.bf16.msra.mxu0 %v182
    %823 = vmatprep.subr.bf16.mxu0 %v185
    %824 = vmatpush1.bf16.msra.mxu0 %v184
    %825 = vmatprep.subr.bf16.mxu0 %v187
    %826 = vmatpush1.bf16.msra.mxu0 %v186
    %827 = vmatprep.subr.bf16.mxu0 %v189
    %828 = vmatpush1.bf16.msra.mxu0 %v188
    %829 = vmatprep.subr.bf16.mxu0 %v191
    %830 = vmatpush1.bf16.msra.mxu0 %v190
    %831 = vmatprep.subr.bf16.mxu0 %v193
    %832 = vmatpush1.bf16.msra.mxu0 %v192
    %833 = vmatprep.subr.bf16.mxu0 %v195
    %834 = vmatpush1.bf16.msra.mxu0 %v194
    %835 = vmatprep.subr.bf16.mxu0 0
    %836 = vmatpush1.bf16.msra.mxu0 0
    %837 = vmatprep.subr.bf16.mxu0 0
    %838 = vmatpush1.bf16.msra.mxu0 0
    %839 = vmatprep.subr.bf16.mxu0 0
    %840 = vmatpush1.bf16.msra.mxu0 0
    %841 = vmatprep.subr.bf16.mxu0 0
    %842 = vmatpush1.bf16.msra.mxu0 0
    %843 = vmatprep.subr.bf16.mxu0 0
    %844 = vmatpush1.bf16.msra.mxu0 0
    %845 = vmatprep.subr.bf16.mxu0 0
    %846 = vmatpush1.bf16.msra.mxu0 0
    %847 = vmatprep.subr.bf16.mxu0 0
    %848 = vmatpush1.bf16.msra.mxu0 0
    %849 = vmatprep.mubr.bf16.mxu0 %v815
    %850 = vmatmul.mubr.bf16.gmra.mrb[0].mxu0 %v811
    %v851 = vpop.f32.mrb[0].mxu0
    %v852 = vadd.f32 %v108, %v851
    %v853 = vpop.f32.mrb[0].mxu0
    %v854 = vadd.f32 %v112, %v853
    %v855 = vpop.f32.mrb[0].mxu0
    %v856 = vadd.f32 %v108, %v855
    %v857 = vpop.f32.mrb[0].mxu0
    %v858 = vadd.f32 %v112, %v857
    %859 = vdwg.mxu0
    %v860 = vmax.f32 %v852, 0.0
    %v861 = vmax.f32 %v854, 0.0
    %v862 = vmax.f32 %v856, 0.0
    %v863 = vmax.f32 %v858, 0.0
    %v864 = vpack.c.bf16 %v862, %v860
    %v865 = vpack.c.bf16 %v863, %v861
    %s866 = scalar_lea.vmem [#allocation4], 512
    %v867 = vld [vmem:[%s866] sm:$0xff]
    %v868 = vld [vmem:[%s866 + $0x8] sm:$0xff]
    %v869 = vld [vmem:[%s866 + $0x10] sm:$0xff]
    %v870 = vld [vmem:[%s866 + $0x18] sm:$0xff]
    %v871 = vld [vmem:[%s866 + $0x20] sm:$0xff]
    %v872 = vld [vmem:[%s866 + $0x28] sm:$0xff]
    %v873 = vld [vmem:[%s866 + $0x30] sm:$0xff]
    %v874 = vld [vmem:[%s866 + $0x38] sm:$0xff]
    %v875 = vld [vmem:[%s866 + $0x40] sm:$0xff]
    %v876 = vld [vmem:[%s866 + $0x48] sm:$0xff]
    %v877 = vld [vmem:[%s866 + $0x50] sm:$0xff]
    %v878 = vld [vmem:[%s866 + $0x58] sm:$0xff]
    %v879 = vld [vmem:[%s866 + $0x60] sm:$0xff]
    %v880 = vld [vmem:[%s866 + $0x68] sm:$0xff]
    %v881 = vld [vmem:[%s866 + $0x70] sm:$0xff]
    %v882 = vld [vmem:[%s866 + $0x78] sm:$0xff]
    %v883 = vld [vmem:[%s866 + $0x80] sm:$0xff]
    %v884 = vld [vmem:[%s866 + $0x88] sm:$0xff]
    %v885 = vld [vmem:[%s866 + $0x90] sm:$0xff]
    %v886 = vld [vmem:[%s866 + $0x98] sm:$0xff]
    %v887 = vld [vmem:[%s866 + $0xa0] sm:$0xff]
    %v888 = vld [vmem:[%s866 + $0xa8] sm:$0xff]
    %v889 = vld [vmem:[%s866 + $0xb0] sm:$0xff]
    %v890 = vld [vmem:[%s866 + $0xb8] sm:$0xff]
    %v891 = vld [vmem:[%s866 + $0xc0] sm:$0xff]
    %v892 = vld [vmem:[%s866 + $0xc8] sm:$0xff]
    %v893 = vld [vmem:[%s866 + $0xd0] sm:$0xff]
    %v894 = vld [vmem:[%s866 + $0xd8] sm:$0xff]
    %v895 = vld [vmem:[%s866 + $0xe0] sm:$0xff]
    %v896 = vld [vmem:[%s866 + $0xe8] sm:$0xff]
    %v897 = vld [vmem:[%s866 + $0xf0] sm:$0xff]
    %v898 = vld [vmem:[%s866 + $0xf8] sm:$0xff]
    %v931 = vunpack.c.l.b16 %v867
    %v932 = vunpack.c.h.b16 %v867
    %v933 = vunpack.c.l.b16 %v868
    %v934 = vunpack.c.h.b16 %v868
    %v935 = vunpack.c.l.b16 %v869
    %v936 = vunpack.c.h.b16 %v869
    %v937 = vunpack.c.l.b16 %v870
    %v938 = vunpack.c.h.b16 %v870
    %v939 = vunpack.c.l.b16 %v871
    %v940 = vunpack.c.h.b16 %v871
    %v941 = vunpack.c.l.b16 %v872
    %v942 = vunpack.c.h.b16 %v872
    %v943 = vunpack.c.l.b16 %v873
    %v944 = vunpack.c.h.b16 %v873
    %v945 = vunpack.c.l.b16 %v874
    %v946 = vunpack.c.h.b16 %v874
    %v947 = vunpack.c.l.b16 %v875
    %v948 = vunpack.c.h.b16 %v875
    %v949 = vunpack.c.l.b16 %v876
    %v950 = vunpack.c.h.b16 %v876
    %v951 = vunpack.c.l.b16 %v877
    %v952 = vunpack.c.h.b16 %v877
    %v953 = vunpack.c.l.b16 %v878
    %v954 = vunpack.c.h.b16 %v878
    %v955 = vunpack.c.l.b16 %v879
    %v956 = vunpack.c.h.b16 %v879
    %v957 = vunpack.c.l.b16 %v880
    %v958 = vunpack.c.h.b16 %v880
    %v959 = vunpack.c.l.b16 %v881
    %v960 = vunpack.c.h.b16 %v881
    %v961 = vunpack.c.l.b16 %v882
    %v962 = vunpack.c.h.b16 %v882
    %v963 = vunpack.c.l.b16 %v883
    %v964 = vunpack.c.h.b16 %v883
    %v965 = vunpack.c.l.b16 %v884
    %v966 = vunpack.c.h.b16 %v884
    %v967 = vunpack.c.l.b16 %v885
    %v968 = vunpack.c.h.b16 %v885
    %v969 = vunpack.c.l.b16 %v886
    %v970 = vunpack.c.h.b16 %v886
    %v971 = vunpack.c.l.b16 %v887
    %v972 = vunpack.c.h.b16 %v887
    %v973 = vunpack.c.l.b16 %v888
    %v974 = vunpack.c.h.b16 %v888
    %v975 = vunpack.c.l.b16 %v889
    %v976 = vunpack.c.h.b16 %v889
    %v977 = vunpack.c.l.b16 %v890
    %v978 = vunpack.c.h.b16 %v890
    %v979 = vunpack.c.l.b16 %v891
    %v980 = vunpack.c.h.b16 %v891
    %v981 = vunpack.c.l.b16 %v892
    %v982 = vunpack.c.h.b16 %v892
    %v983 = vunpack.c.l.b16 %v893
    %v984 = vunpack.c.h.b16 %v893
    %v985 = vunpack.c.l.b16 %v894
    %v986 = vunpack.c.h.b16 %v894
    %v987 = vunpack.c.l.b16 %v895
    %v988 = vunpack.c.h.b16 %v895
    %v989 = vunpack.c.l.b16 %v896
    %v990 = vunpack.c.h.b16 %v896
    %v991 = vunpack.c.l.b16 %v897
    %v992 = vunpack.c.h.b16 %v897
    %v993 = vunpack.c.l.b16 %v898
    %v994 = vunpack.c.h.b16 %v898
    %v995 = vpack.c.b16 %v933, %v931
    %v996 = vpack.c.b16 %v934, %v932
    %v997 = vpack.c.b16 %v937, %v935
    %v998 = vpack.c.b16 %v938, %v936
    %v999 = vpack.c.b16 %v941, %v939
    %v1000 = vpack.c.b16 %v942, %v940
    %v1001 = vpack.c.b16 %v945, %v943
    %v1002 = vpack.c.b16 %v946, %v944
    %v1003 = vpack.c.b16 %v949, %v947
    %v1004 = vpack.c.b16 %v950, %v948
    %v1005 = vpack.c.b16 %v953, %v951
    %v1006 = vpack.c.b16 %v954, %v952
    %v1007 = vpack.c.b16 %v957, %v955
    %v1008 = vpack.c.b16 %v958, %v956
    %v1009 = vpack.c.b16 %v961, %v959
    %v1010 = vpack.c.b16 %v962, %v960
    %v1011 = vpack.c.b16 %v965, %v963
    %v1012 = vpack.c.b16 %v966, %v964
    %v1013 = vpack.c.b16 %v969, %v967
    %v1014 = vpack.c.b16 %v970, %v968
    %v1015 = vpack.c.b16 %v973, %v971
    %v1016 = vpack.c.b16 %v974, %v972
    %v1017 = vpack.c.b16 %v977, %v975
    %v1018 = vpack.c.b16 %v978, %v976
    %v1019 = vpack.c.b16 %v981, %v979
    %v1020 = vpack.c.b16 %v982, %v980
    %v1021 = vpack.c.b16 %v985, %v983
    %v1022 = vpack.c.b16 %v986, %v984
    %v1023 = vpack.c.b16 %v989, %v987
    %v1024 = vpack.c.b16 %v990, %v988
    %v1025 = vpack.c.b16 %v993, %v991
    %v1026 = vpack.c.b16 %v994, %v992
    %1059 = vmatprep.subr.bf16.mxu0 %v996
    %1060 = vmatpush1.bf16.msra.mxu0 %v995
    %1061 = vmatprep.subr.bf16.mxu0 %v998
    %1062 = vmatpush1.bf16.msra.mxu0 %v997
    %1063 = vmatprep.subr.bf16.mxu0 %v1000
    %1064 = vmatpush1.bf16.msra.mxu0 %v999
    %1065 = vmatprep.subr.bf16.mxu0 %v1002
    %1066 = vmatpush1.bf16.msra.mxu0 %v1001
    %1067 = vmatprep.subr.bf16.mxu0 %v1004
    %1068 = vmatpush1.bf16.msra.mxu0 %v1003
    %1069 = vmatprep.subr.bf16.mxu0 %v1006
    %1070 = vmatpush1.bf16.msra.mxu0 %v1005
    %1071 = vmatprep.subr.bf16.mxu0 %v1008
    %1072 = vmatpush1.bf16.msra.mxu0 %v1007
    %1073 = vmatprep.subr.bf16.mxu0 %v1010
    %1074 = vmatpush1.bf16.msra.mxu0 %v1009
    %1075 = vmatprep.subr.bf16.mxu0 %v1012
    %1076 = vmatpush1.bf16.msra.mxu0 %v1011
    %1077 = vmatprep.subr.bf16.mxu0 %v1014
    %1078 = vmatpush1.bf16.msra.mxu0 %v1013
    %1079 = vmatprep.subr.bf16.mxu0 %v1016
    %1080 = vmatpush1.bf16.msra.mxu0 %v1015
    %1081 = vmatprep.subr.bf16.mxu0 %v1018
    %1082 = vmatpush1.bf16.msra.mxu0 %v1017
    %1083 = vmatprep.subr.bf16.mxu0 %v1020
    %1084 = vmatpush1.bf16.msra.mxu0 %v1019
    %1085 = vmatprep.subr.bf16.mxu0 %v1022
    %1086 = vmatpush1.bf16.msra.mxu0 %v1021
    %1087 = vmatprep.subr.bf16.mxu0 %v1024
    %1088 = vmatpush1.bf16.msra.mxu0 %v1023
    %1089 = vmatprep.subr.bf16.mxu0 %v1026
    %1090 = vmatpush1.bf16.msra.mxu0 %v1025
    %1091 = vmatprep.mubr.bf16.mxu0 %v865
    %1092 = vmatmul.mubr.bf16.gmra.mrb[0].mxu0 %v864
    %v1093 = vpop.f32.mrb[0].mxu0
    %v1094 = vadd.f32 0.0, %v1093
    %v1095 = vpop.f32.mrb[0].mxu0
    %v1096 = vadd.f32 0.0, %v1095
    %v1097 = vpop.f32.mrb[0].mxu0
    %v1098 = vadd.f32 0.0, %v1097
    %v1099 = vpop.f32.mrb[0].mxu0
    %v1100 = vadd.f32 0.0, %v1099
    %1101 = vdwg.mxu0
    %v1102 = vadd.f32 %v794, %v1094
    %v1103 = vadd.f32 %v796, %v1096
    %v1104 = vadd.f32 %v798, %v1098
    %v1105 = vadd.f32 %v800, %v1100
    %s1106 = scalar_lea.vmem %s0, 48
    %v1107 = vld [vmem:[%s1106] sm:$0xff]
    %v1108 = vld [vmem:[%s1106 + $0x8] sm:$0xff]
    %v1111 = vunpack.c.l.b16 %v1107
    %v1112 = vunpack.c.h.b16 %v1107
    %v1113 = vunpack.c.l.b16 %v1108
    %v1114 = vunpack.c.h.b16 %v1108
    %v1115 = vpack.c.b16 %v1113, %v1111
    %v1116 = vpack.c.b16 %v1114, %v1112
    %v1119 = vsel %vm214, %v1116, 0
    %1121 = vmatprep.subr.bf16.mxu0 %v179
    %1122 = vmatpush1.bf16.msra.mxu0 %v178
    %1123 = vmatprep.subr.bf16.mxu0 %v181
    %1124 = vmatpush1.bf16.msra.mxu0 %v180
    %1125 = vmatprep.subr.bf16.mxu0 %v183
    %1126 = vmatpush1.bf16.msra.mxu0 %v182
    %1127 = vmatprep.subr.bf16.mxu0 %v185
    %1128 = vmatpush1.bf16.msra.mxu0 %v184
    %1129 = vmatprep.subr.bf16.mxu0 %v187
    %1130 = vmatpush1.bf16.msra.mxu0 %v186
    %1131 = vmatprep.subr.bf16.mxu0 %v189
    %1132 = vmatpush1.bf16.msra.mxu0 %v188
    %1133 = vmatprep.subr.bf16.mxu0 %v191
    %1134 = vmatpush1.bf16.msra.mxu0 %v190
    %1135 = vmatprep.subr.bf16.mxu0 %v193
    %1136 = vmatpush1.bf16.msra.mxu0 %v192
    %1137 = vmatprep.subr.bf16.mxu0 %v195
    %1138 = vmatpush1.bf16.msra.mxu0 %v194
    %1139 = vmatprep.subr.bf16.mxu0 0
    %1140 = vmatpush1.bf16.msra.mxu0 0
    %1141 = vmatprep.subr.bf16.mxu0 0
    %1142 = vmatpush1.bf16.msra.mxu0 0
    %1143 = vmatprep.subr.bf16.mxu0 0
    %1144 = vmatpush1.bf16.msra.mxu0 0
    %1145 = vmatprep.subr.bf16.mxu0 0
    %1146 = vmatpush1.bf16.msra.mxu0 0
    %1147 = vmatprep.subr.bf16.mxu0 0
    %1148 = vmatpush1.bf16.msra.mxu0 0
    %1149 = vmatprep.subr.bf16.mxu0 0
    %1150 = vmatpush1.bf16.msra.mxu0 0
    %1151 = vmatprep.subr.bf16.mxu0 0
    %1152 = vmatpush1.bf16.msra.mxu0 0
    %1153 = vmatprep.mubr.bf16.mxu0 %v1119
    %1154 = vmatmul.mubr.bf16.gmra.mrb[0].mxu0 %v1115
    %v1155 = vpop.f32.mrb[0].mxu0
    %v1156 = vadd.f32 %v108, %v1155
    %v1157 = vpop.f32.mrb[0].mxu0
    %v1158 = vadd.f32 %v112, %v1157
    %v1159 = vpop.f32.mrb[0].mxu0
    %v1160 = vadd.f32 %v108, %v1159
    %v1161 = vpop.f32.mrb[0].mxu0
    %v1162 = vadd.f32 %v112, %v1161
    %1163 = vdwg.mxu0
    %v1164 = vmax.f32 %v1156, 0.0
    %v1165 = vmax.f32 %v1158, 0.0
    %v1166 = vmax.f32 %v1160, 0.0
    %v1167 = vmax.f32 %v1162, 0.0
    %v1168 = vpack.c.bf16 %v1166, %v1164
    %v1169 = vpack.c.bf16 %v1167, %v1165
    %s1170 = scalar_lea.vmem [#allocation4], 768
    %v1171 = vld [vmem:[%s1170] sm:$0xff]
    %v1172 = vld [vmem:[%s1170 + $0x8] sm:$0xff]
    %v1173 = vld [vmem:[%s1170 + $0x10] sm:$0xff]
    %v1174 = vld [vmem:[%s1170 + $0x18] sm:$0xff]
    %v1175 = vld [vmem:[%s1170 + $0x20] sm:$0xff]
    %v1176 = vld [vmem:[%s1170 + $0x28] sm:$0xff]
    %v1177 = vld [vmem:[%s1170 + $0x30] sm:$0xff]
    %v1178 = vld [vmem:[%s1170 + $0x38] sm:$0xff]
    %v1179 = vld [vmem:[%s1170 + $0x40] sm:$0xff]
    %v1180 = vld [vmem:[%s1170 + $0x48] sm:$0xff]
    %v1181 = vld [vmem:[%s1170 + $0x50] sm:$0xff]
    %v1182 = vld [vmem:[%s1170 + $0x58] sm:$0xff]
    %v1183 = vld [vmem:[%s1170 + $0x60] sm:$0xff]
    %v1184 = vld [vmem:[%s1170 + $0x68] sm:$0xff]
    %v1185 = vld [vmem:[%s1170 + $0x70] sm:$0xff]
    %v1186 = vld [vmem:[%s1170 + $0x78] sm:$0xff]
    %v1187 = vld [vmem:[%s1170 + $0x80] sm:$0xff]
    %v1188 = vld [vmem:[%s1170 + $0x88] sm:$0xff]
    %v1189 = vld [vmem:[%s1170 + $0x90] sm:$0xff]
    %v1190 = vld [vmem:[%s1170 + $0x98] sm:$0xff]
    %v1191 = vld [vmem:[%s1170 + $0xa0] sm:$0xff]
    %v1192 = vld [vmem:[%s1170 + $0xa8] sm:$0xff]
    %v1193 = vld [vmem:[%s1170 + $0xb0] sm:$0xff]
    %v1194 = vld [vmem:[%s1170 + $0xb8] sm:$0xff]
    %v1195 = vld [vmem:[%s1170 + $0xc0] sm:$0xff]
    %v1196 = vld [vmem:[%s1170 + $0xc8] sm:$0xff]
    %v1197 = vld [vmem:[%s1170 + $0xd0] sm:$0xff]
    %v1198 = vld [vmem:[%s1170 + $0xd8] sm:$0xff]
    %v1199 = vld [vmem:[%s1170 + $0xe0] sm:$0xff]
    %v1200 = vld [vmem:[%s1170 + $0xe8] sm:$0xff]
    %v1201 = vld [vmem:[%s1170 + $0xf0] sm:$0xff]
    %v1202 = vld [vmem:[%s1170 + $0xf8] sm:$0xff]
    %v1235 = vunpack.c.l.b16 %v1171
    %v1236 = vunpack.c.h.b16 %v1171
    %v1237 = vunpack.c.l.b16 %v1172
    %v1238 = vunpack.c.h.b16 %v1172
    %v1239 = vunpack.c.l.b16 %v1173
    %v1240 = vunpack.c.h.b16 %v1173
    %v1241 = vunpack.c.l.b16 %v1174
    %v1242 = vunpack.c.h.b16 %v1174
    %v1243 = vunpack.c.l.b16 %v1175
    %v1244 = vunpack.c.h.b16 %v1175
    %v1245 = vunpack.c.l.b16 %v1176
    %v1246 = vunpack.c.h.b16 %v1176
    %v1247 = vunpack.c.l.b16 %v1177
    %v1248 = vunpack.c.h.b16 %v1177
    %v1249 = vunpack.c.l.b16 %v1178
    %v1250 = vunpack.c.h.b16 %v1178
    %v1251 = vunpack.c.l.b16 %v1179
    %v1252 = vunpack.c.h.b16 %v1179
    %v1253 = vunpack.c.l.b16 %v1180
    %v1254 = vunpack.c.h.b16 %v1180
    %v1255 = vunpack.c.l.b16 %v1181
    %v1256 = vunpack.c.h.b16 %v1181
    %v1257 = vunpack.c.l.b16 %v1182
    %v1258 = vunpack.c.h.b16 %v1182
    %v1259 = vunpack.c.l.b16 %v1183
    %v1260 = vunpack.c.h.b16 %v1183
    %v1261 = vunpack.c.l.b16 %v1184
    %v1262 = vunpack.c.h.b16 %v1184
    %v1263 = vunpack.c.l.b16 %v1185
    %v1264 = vunpack.c.h.b16 %v1185
    %v1265 = vunpack.c.l.b16 %v1186
    %v1266 = vunpack.c.h.b16 %v1186
    %v1267 = vunpack.c.l.b16 %v1187
    %v1268 = vunpack.c.h.b16 %v1187
    %v1269 = vunpack.c.l.b16 %v1188
    %v1270 = vunpack.c.h.b16 %v1188
    %v1271 = vunpack.c.l.b16 %v1189
    %v1272 = vunpack.c.h.b16 %v1189
    %v1273 = vunpack.c.l.b16 %v1190
    %v1274 = vunpack.c.h.b16 %v1190
    %v1275 = vunpack.c.l.b16 %v1191
    %v1276 = vunpack.c.h.b16 %v1191
    %v1277 = vunpack.c.l.b16 %v1192
    %v1278 = vunpack.c.h.b16 %v1192
    %v1279 = vunpack.c.l.b16 %v1193
    %v1280 = vunpack.c.h.b16 %v1193
    %v1281 = vunpack.c.l.b16 %v1194
    %v1282 = vunpack.c.h.b16 %v1194
    %v1283 = vunpack.c.l.b16 %v1195
    %v1284 = vunpack.c.h.b16 %v1195
    %v1285 = vunpack.c.l.b16 %v1196
    %v1286 = vunpack.c.h.b16 %v1196
    %v1287 = vunpack.c.l.b16 %v1197
    %v1288 = vunpack.c.h.b16 %v1197
    %v1289 = vunpack.c.l.b16 %v1198
    %v1290 = vunpack.c.h.b16 %v1198
    %v1291 = vunpack.c.l.b16 %v1199
    %v1292 = vunpack.c.h.b16 %v1199
    %v1293 = vunpack.c.l.b16 %v1200
    %v1294 = vunpack.c.h.b16 %v1200
    %v1295 = vunpack.c.l.b16 %v1201
    %v1296 = vunpack.c.h.b16 %v1201
    %v1297 = vunpack.c.l.b16 %v1202
    %v1298 = vunpack.c.h.b16 %v1202
    %v1299 = vpack.c.b16 %v1237, %v1235
    %v1300 = vpack.c.b16 %v1238, %v1236
    %v1301 = vpack.c.b16 %v1241, %v1239
    %v1302 = vpack.c.b16 %v1242, %v1240
    %v1303 = vpack.c.b16 %v1245, %v1243
    %v1304 = vpack.c.b16 %v1246, %v1244
    %v1305 = vpack.c.b16 %v1249, %v1247
    %v1306 = vpack.c.b16 %v1250, %v1248
    %v1307 = vpack.c.b16 %v1253, %v1251
    %v1308 = vpack.c.b16 %v1254, %v1252
    %v1309 = vpack.c.b16 %v1257, %v1255
    %v1310 = vpack.c.b16 %v1258, %v1256
    %v1311 = vpack.c.b16 %v1261, %v1259
    %v1312 = vpack.c.b16 %v1262, %v1260
    %v1313 = vpack.c.b16 %v1265, %v1263
    %v1314 = vpack.c.b16 %v1266, %v1264
    %v1315 = vpack.c.b16 %v1269, %v1267
    %v1316 = vpack.c.b16 %v1270, %v1268
    %v1317 = vpack.c.b16 %v1273, %v1271
    %v1318 = vpack.c.b16 %v1274, %v1272
    %v1319 = vpack.c.b16 %v1277, %v1275
    %v1320 = vpack.c.b16 %v1278, %v1276
    %v1321 = vpack.c.b16 %v1281, %v1279
    %v1322 = vpack.c.b16 %v1282, %v1280
    %v1323 = vpack.c.b16 %v1285, %v1283
    %v1324 = vpack.c.b16 %v1286, %v1284
    %v1325 = vpack.c.b16 %v1289, %v1287
    %v1326 = vpack.c.b16 %v1290, %v1288
    %v1327 = vpack.c.b16 %v1293, %v1291
    %v1328 = vpack.c.b16 %v1294, %v1292
    %v1329 = vpack.c.b16 %v1297, %v1295
    %v1330 = vpack.c.b16 %v1298, %v1296
    %1363 = vmatprep.subr.bf16.mxu0 %v1300
    %1364 = vmatpush1.bf16.msra.mxu0 %v1299
    %1365 = vmatprep.subr.bf16.mxu0 %v1302
    %1366 = vmatpush1.bf16.msra.mxu0 %v1301
    %1367 = vmatprep.subr.bf16.mxu0 %v1304
    %1368 = vmatpush1.bf16.msra.mxu0 %v1303
    %1369 = vmatprep.subr.bf16.mxu0 %v1306
    %1370 = vmatpush1.bf16.msra.mxu0 %v1305
    %1371 = vmatprep.subr.bf16.mxu0 %v1308
    %1372 = vmatpush1.bf16.msra.mxu0 %v1307
    %1373 = vmatprep.subr.bf16.mxu0 %v1310
    %1374 = vmatpush1.bf16.msra.mxu0 %v1309
    %1375 = vmatprep.subr.bf16.mxu0 %v1312
    %1376 = vmatpush1.bf16.msra.mxu0 %v1311
    %1377 = vmatprep.subr.bf16.mxu0 %v1314
    %1378 = vmatpush1.bf16.msra.mxu0 %v1313
    %1379 = vmatprep.subr.bf16.mxu0 %v1316
    %1380 = vmatpush1.bf16.msra.mxu0 %v1315
    %1381 = vmatprep.subr.bf16.mxu0 %v1318
    %1382 = vmatpush1.bf16.msra.mxu0 %v1317
    %1383 = vmatprep.subr.bf16.mxu0 %v1320
    %1384 = vmatpush1.bf16.msra.mxu0 %v1319
    %1385 = vmatprep.subr.bf16.mxu0 %v1322
    %1386 = vmatpush1.bf16.msra.mxu0 %v1321
    %1387 = vmatprep.subr.bf16.mxu0 %v1324
    %1388 = vmatpush1.bf16.msra.mxu0 %v1323
    %1389 = vmatprep.subr.bf16.mxu0 %v1326
    %1390 = vmatpush1.bf16.msra.mxu0 %v1325
    %1391 = vmatprep.subr.bf16.mxu0 %v1328
    %1392 = vmatpush1.bf16.msra.mxu0 %v1327
    %1393 = vmatprep.subr.bf16.mxu0 %v1330
    %1394 = vmatpush1.bf16.msra.mxu0 %v1329
    %1395 = vmatprep.mubr.bf16.mxu0 %v1169
    %1396 = vmatmul.mubr.bf16.gmra.mrb[0].mxu0 %v1168
    %v1397 = vpop.f32.mrb[0].mxu0
    %v1398 = vadd.f32 0.0, %v1397
    %v1399 = vpop.f32.mrb[0].mxu0
    %v1400 = vadd.f32 0.0, %v1399
    %v1401 = vpop.f32.mrb[0].mxu0
    %v1402 = vadd.f32 0.0, %v1401
    %v1403 = vpop.f32.mrb[0].mxu0
    %v1404 = vadd.f32 0.0, %v1403
    %1405 = vdwg.mxu0
    %v1406 = vadd.f32 %v1102, %v1398
    %v1407 = vadd.f32 %v1103, %v1400
    %v1408 = vadd.f32 %v1104, %v1402
    %v1409 = vadd.f32 %v1105, %v1404
    %s1410 = scalar_lea.vmem %s0, 64
    %v1411 = vld [vmem:[%s1410] sm:$0xff]
    %v1412 = vld [vmem:[%s1410 + $0x8] sm:$0xff]
    %v1415 = vunpack.c.l.b16 %v1411
    %v1416 = vunpack.c.h.b16 %v1411
    %v1417 = vunpack.c.l.b16 %v1412
    %v1418 = vunpack.c.h.b16 %v1412
    %v1419 = vpack.c.b16 %v1417, %v1415
    %v1420 = vpack.c.b16 %v1418, %v1416
    %v1423 = vsel %vm214, %v1420, 0
    %1425 = vmatprep.subr.bf16.mxu0 %v179
    %1426 = vmatpush1.bf16.msra.mxu0 %v178
    %1427 = vmatprep.subr.bf16.mxu0 %v181
    %1428 = vmatpush1.bf16.msra.mxu0 %v180
    %1429 = vmatprep.subr.bf16.mxu0 %v183
    %1430 = vmatpush1.bf16.msra.mxu0 %v182
    %1431 = vmatprep.subr.bf16.mxu0 %v185
    %1432 = vmatpush1.bf16.msra.mxu0 %v184
    %1433 = vmatprep.subr.bf16.mxu0 %v187
    %1434 = vmatpush1.bf16.msra.mxu0 %v186
    %1435 = vmatprep.subr.bf16.mxu0 %v189
    %1436 = vmatpush1.bf16.msra.mxu0 %v188
    %1437 = vmatprep.subr.bf16.mxu0 %v191
    %1438 = vmatpush1.bf16.msra.mxu0 %v190
    %1439 = vmatprep.subr.bf16.mxu0 %v193
    %1440 = vmatpush1.bf16.msra.mxu0 %v192
    %1441 = vmatprep.subr.bf16.mxu0 %v195
    %1442 = vmatpush1.bf16.msra.mxu0 %v194
    %1443 = vmatprep.subr.bf16.mxu0 0
    %1444 = vmatpush1.bf16.msra.mxu0 0
    %1445 = vmatprep.subr.bf16.mxu0 0
    %1446 = vmatpush1.bf16.msra.mxu0 0
    %1447 = vmatprep.subr.bf16.mxu0 0
    %1448 = vmatpush1.bf16.msra.mxu0 0
    %1449 = vmatprep.subr.bf16.mxu0 0
    %1450 = vmatpush1.bf16.msra.mxu0 0
    %1451 = vmatprep.subr.bf16.mxu0 0
    %1452 = vmatpush1.bf16.msra.mxu0 0
    %1453 = vmatprep.subr.bf16.mxu0 0
    %1454 = vmatpush1.bf16.msra.mxu0 0
    %1455 = vmatprep.subr.bf16.mxu0 0
    %1456 = vmatpush1.bf16.msra.mxu0 0
    %1457 = vmatprep.mubr.bf16.mxu0 %v1423
    %1458 = vmatmul.mubr.bf16.gmra.mrb[0].mxu0 %v1419
    %v1459 = vpop.f32.mrb[0].mxu0
    %v1460 = vadd.f32 %v108, %v1459
    %v1461 = vpop.f32.mrb[0].mxu0
    %v1462 = vadd.f32 %v112, %v1461
    %v1463 = vpop.f32.mrb[0].mxu0
    %v1464 = vadd.f32 %v108, %v1463
    %v1465 = vpop.f32.mrb[0].mxu0
    %v1466 = vadd.f32 %v112, %v1465
    %1467 = vdwg.mxu0
    %v1468 = vmax.f32 %v1460, 0.0
    %v1469 = vmax.f32 %v1462, 0.0
    %v1470 = vmax.f32 %v1464, 0.0
    %v1471 = vmax.f32 %v1466, 0.0
    %v1472 = vpack.c.bf16 %v1470, %v1468
    %v1473 = vpack.c.bf16 %v1471, %v1469
    %s1474 = scalar_lea.vmem [#allocation4], 1024
    %v1475 = vld [vmem:[%s1474] sm:$0xff]
    %v1476 = vld [vmem:[%s1474 + $0x8] sm:$0xff]
    %v1477 = vld [vmem:[%s1474 + $0x10] sm:$0xff]
    %v1478 = vld [vmem:[%s1474 + $0x18] sm:$0xff]
    %v1479 = vld [vmem:[%s1474 + $0x20] sm:$0xff]
    %v1480 = vld [vmem:[%s1474 + $0x28] sm:$0xff]
    %v1481 = vld [vmem:[%s1474 + $0x30] sm:$0xff]
    %v1482 = vld [vmem:[%s1474 + $0x38] sm:$0xff]
    %v1483 = vld [vmem:[%s1474 + $0x40] sm:$0xff]
    %v1484 = vld [vmem:[%s1474 + $0x48] sm:$0xff]
    %v1485 = vld [vmem:[%s1474 + $0x50] sm:$0xff]
    %v1486 = vld [vmem:[%s1474 + $0x58] sm:$0xff]
    %v1487 = vld [vmem:[%s1474 + $0x60] sm:$0xff]
    %v1488 = vld [vmem:[%s1474 + $0x68] sm:$0xff]
    %v1489 = vld [vmem:[%s1474 + $0x70] sm:$0xff]
    %v1490 = vld [vmem:[%s1474 + $0x78] sm:$0xff]
    %v1491 = vld [vmem:[%s1474 + $0x80] sm:$0xff]
    %v1492 = vld [vmem:[%s1474 + $0x88] sm:$0xff]
    %v1493 = vld [vmem:[%s1474 + $0x90] sm:$0xff]
    %v1494 = vld [vmem:[%s1474 + $0x98] sm:$0xff]
    %v1495 = vld [vmem:[%s1474 + $0xa0] sm:$0xff]
    %v1496 = vld [vmem:[%s1474 + $0xa8] sm:$0xff]
    %v1497 = vld [vmem:[%s1474 + $0xb0] sm:$0xff]
    %v1498 = vld [vmem:[%s1474 + $0xb8] sm:$0xff]
    %v1499 = vld [vmem:[%s1474 + $0xc0] sm:$0xff]
    %v1500 = vld [vmem:[%s1474 + $0xc8] sm:$0xff]
    %v1501 = vld [vmem:[%s1474 + $0xd0] sm:$0xff]
    %v1502 = vld [vmem:[%s1474 + $0xd8] sm:$0xff]
    %v1503 = vld [vmem:[%s1474 + $0xe0] sm:$0xff]
    %v1504 = vld [vmem:[%s1474 + $0xe8] sm:$0xff]
    %v1505 = vld [vmem:[%s1474 + $0xf0] sm:$0xff]
    %v1506 = vld [vmem:[%s1474 + $0xf8] sm:$0xff]
    %v1539 = vunpack.c.l.b16 %v1475
    %v1540 = vunpack.c.h.b16 %v1475
    %v1541 = vunpack.c.l.b16 %v1476
    %v1542 = vunpack.c.h.b16 %v1476
    %v1543 = vunpack.c.l.b16 %v1477
    %v1544 = vunpack.c.h.b16 %v1477
    %v1545 = vunpack.c.l.b16 %v1478
    %v1546 = vunpack.c.h.b16 %v1478
    %v1547 = vunpack.c.l.b16 %v1479
    %v1548 = vunpack.c.h.b16 %v1479
    %v1549 = vunpack.c.l.b16 %v1480
    %v1550 = vunpack.c.h.b16 %v1480
    %v1551 = vunpack.c.l.b16 %v1481
    %v1552 = vunpack.c.h.b16 %v1481
    %v1553 = vunpack.c.l.b16 %v1482
    %v1554 = vunpack.c.h.b16 %v1482
    %v1555 = vunpack.c.l.b16 %v1483
    %v1556 = vunpack.c.h.b16 %v1483
    %v1557 = vunpack.c.l.b16 %v1484
    %v1558 = vunpack.c.h.b16 %v1484
    %v1559 = vunpack.c.l.b16 %v1485
    %v1560 = vunpack.c.h.b16 %v1485
    %v1561 = vunpack.c.l.b16 %v1486
    %v1562 = vunpack.c.h.b16 %v1486
    %v1563 = vunpack.c.l.b16 %v1487
    %v1564 = vunpack.c.h.b16 %v1487
    %v1565 = vunpack.c.l.b16 %v1488
    %v1566 = vunpack.c.h.b16 %v1488
    %v1567 = vunpack.c.l.b16 %v1489
    %v1568 = vunpack.c.h.b16 %v1489
    %v1569 = vunpack.c.l.b16 %v1490
    %v1570 = vunpack.c.h.b16 %v1490
    %v1571 = vunpack.c.l.b16 %v1491
    %v1572 = vunpack.c.h.b16 %v1491
    %v1573 = vunpack.c.l.b16 %v1492
    %v1574 = vunpack.c.h.b16 %v1492
    %v1575 = vunpack.c.l.b16 %v1493
    %v1576 = vunpack.c.h.b16 %v1493
    %v1577 = vunpack.c.l.b16 %v1494
    %v1578 = vunpack.c.h.b16 %v1494
    %v1579 = vunpack.c.l.b16 %v1495
    %v1580 = vunpack.c.h.b16 %v1495
    %v1581 = vunpack.c.l.b16 %v1496
    %v1582 = vunpack.c.h.b16 %v1496
    %v1583 = vunpack.c.l.b16 %v1497
    %v1584 = vunpack.c.h.b16 %v1497
    %v1585 = vunpack.c.l.b16 %v1498
    %v1586 = vunpack.c.h.b16 %v1498
    %v1587 = vunpack.c.l.b16 %v1499
    %v1588 = vunpack.c.h.b16 %v1499
    %v1589 = vunpack.c.l.b16 %v1500
    %v1590 = vunpack.c.h.b16 %v1500
    %v1591 = vunpack.c.l.b16 %v1501
    %v1592 = vunpack.c.h.b16 %v1501
    %v1593 = vunpack.c.l.b16 %v1502
    %v1594 = vunpack.c.h.b16 %v1502
    %v1595 = vunpack.c.l.b16 %v1503
    %v1596 = vunpack.c.h.b16 %v1503
    %v1597 = vunpack.c.l.b16 %v1504
    %v1598 = vunpack.c.h.b16 %v1504
    %v1599 = vunpack.c.l.b16 %v1505
    %v1600 = vunpack.c.h.b16 %v1505
    %v1601 = vunpack.c.l.b16 %v1506
    %v1602 = vunpack.c.h.b16 %v1506
    %v1603 = vpack.c.b16 %v1541, %v1539
    %v1604 = vpack.c.b16 %v1542, %v1540
    %v1605 = vpack.c.b16 %v1545, %v1543
    %v1606 = vpack.c.b16 %v1546, %v1544
    %v1607 = vpack.c.b16 %v1549, %v1547
    %v1608 = vpack.c.b16 %v1550, %v1548
    %v1609 = vpack.c.b16 %v1553, %v1551
    %v1610 = vpack.c.b16 %v1554, %v1552
    %v1611 = vpack.c.b16 %v1557, %v1555
    %v1612 = vpack.c.b16 %v1558, %v1556
    %v1613 = vpack.c.b16 %v1561, %v1559
    %v1614 = vpack.c.b16 %v1562, %v1560
    %v1615 = vpack.c.b16 %v1565, %v1563
    %v1616 = vpack.c.b16 %v1566, %v1564
    %v1617 = vpack.c.b16 %v1569, %v1567
    %v1618 = vpack.c.b16 %v1570, %v1568
    %v1619 = vpack.c.b16 %v1573, %v1571
    %v1620 = vpack.c.b16 %v1574, %v1572
    %v1621 = vpack.c.b16 %v1577, %v1575
    %v1622 = vpack.c.b16 %v1578, %v1576
    %v1623 = vpack.c.b16 %v1581, %v1579
    %v1624 = vpack.c.b16 %v1582, %v1580
    %v1625 = vpack.c.b16 %v1585, %v1583
    %v1626 = vpack.c.b16 %v1586, %v1584
    %v1627 = vpack.c.b16 %v1589, %v1587
    %v1628 = vpack.c.b16 %v1590, %v1588
    %v1629 = vpack.c.b16 %v1593, %v1591
    %v1630 = vpack.c.b16 %v1594, %v1592
    %v1631 = vpack.c.b16 %v1597, %v1595
    %v1632 = vpack.c.b16 %v1598, %v1596
    %v1633 = vpack.c.b16 %v1601, %v1599
    %v1634 = vpack.c.b16 %v1602, %v1600
    %1667 = vmatprep.subr.bf16.mxu0 %v1604
    %1668 = vmatpush1.bf16.msra.mxu0 %v1603
    %1669 = vmatprep.subr.bf16.mxu0 %v1606
    %1670 = vmatpush1.bf16.msra.mxu0 %v1605
    %1671 = vmatprep.subr.bf16.mxu0 %v1608
    %1672 = vmatpush1.bf16.msra.mxu0 %v1607
    %1673 = vmatprep.subr.bf16.mxu0 %v1610
    %1674 = vmatpush1.bf16.msra.mxu0 %v1609
    %1675 = vmatprep.subr.bf16.mxu0 %v1612
    %1676 = vmatpush1.bf16.msra.mxu0 %v1611
    %1677 = vmatprep.subr.bf16.mxu0 %v1614
    %1678 = vmatpush1.bf16.msra.mxu0 %v1613
    %1679 = vmatprep.subr.bf16.mxu0 %v1616
    %1680 = vmatpush1.bf16.msra.mxu0 %v1615
    %1681 = vmatprep.subr.bf16.mxu0 %v1618
    %1682 = vmatpush1.bf16.msra.mxu0 %v1617
    %1683 = vmatprep.subr.bf16.mxu0 %v1620
    %1684 = vmatpush1.bf16.msra.mxu0 %v1619
    %1685 = vmatprep.subr.bf16.mxu0 %v1622
    %1686 = vmatpush1.bf16.msra.mxu0 %v1621
    %1687 = vmatprep.subr.bf16.mxu0 %v1624
    %1688 = vmatpush1.bf16.msra.mxu0 %v1623
    %1689 = vmatprep.subr.bf16.mxu0 %v1626
    %1690 = vmatpush1.bf16.msra.mxu0 %v1625
    %1691 = vmatprep.subr.bf16.mxu0 %v1628
    %1692 = vmatpush1.bf16.msra.mxu0 %v1627
    %1693 = vmatprep.subr.bf16.mxu0 %v1630
    %1694 = vmatpush1.bf16.msra.mxu0 %v1629
    %1695 = vmatprep.subr.bf16.mxu0 %v1632
    %1696 = vmatpush1.bf16.msra.mxu0 %v1631
    %1697 = vmatprep.subr.bf16.mxu0 %v1634
    %1698 = vmatpush1.bf16.msra.mxu0 %v1633
    %1699 = vmatprep.mubr.bf16.mxu0 %v1473
    %1700 = vmatmul.mubr.bf16.gmra.mrb[0].mxu0 %v1472
    %v1701 = vpop.f32.mrb[0].mxu0
    %v1702 = vadd.f32 0.0, %v1701
    %v1703 = vpop.f32.mrb[0].mxu0
    %v1704 = vadd.f32 0.0, %v1703
    %v1705 = vpop.f32.mrb[0].mxu0
    %v1706 = vadd.f32 0.0, %v1705
    %v1707 = vpop.f32.mrb[0].mxu0
    %v1708 = vadd.f32 0.0, %v1707
    %1709 = vdwg.mxu0
    %v1710 = vadd.f32 %v1406, %v1702
    %v1711 = vadd.f32 %v1407, %v1704
    %v1712 = vadd.f32 %v1408, %v1706
    %v1713 = vadd.f32 %v1409, %v1708
    %s1714 = scalar_lea.vmem %s0, 80
    %v1715 = vld [vmem:[%s1714] sm:$0xff]
    %v1716 = vld [vmem:[%s1714 + $0x8] sm:$0xff]
    %v1719 = vunpack.c.l.b16 %v1715
    %v1720 = vunpack.c.h.b16 %v1715
    %v1721 = vunpack.c.l.b16 %v1716
    %v1722 = vunpack.c.h.b16 %v1716
    %v1723 = vpack.c.b16 %v1721, %v1719
    %v1724 = vpack.c.b16 %v1722, %v1720
    %v1727 = vsel %vm214, %v1724, 0
    %1729 = vmatprep.subr.bf16.mxu0 %v179
    %1730 = vmatpush1.bf16.msra.mxu0 %v178
    %1731 = vmatprep.subr.bf16.mxu0 %v181
    %1732 = vmatpush1.bf16.msra.mxu0 %v180
    %1733 = vmatprep.subr.bf16.mxu0 %v183
    %1734 = vmatpush1.bf16.msra.mxu0 %v182
    %1735 = vmatprep.subr.bf16.mxu0 %v185
    %1736 = vmatpush1.bf16.msra.mxu0 %v184
    %1737 = vmatprep.subr.bf16.mxu0 %v187
    %1738 = vmatpush1.bf16.msra.mxu0 %v186
    %1739 = vmatprep.subr.bf16.mxu0 %v189
    %1740 = vmatpush1.bf16.msra.mxu0 %v188
    %1741 = vmatprep.subr.bf16.mxu0 %v191
    %1742 = vmatpush1.bf16.msra.mxu0 %v190
    %1743 = vmatprep.subr.bf16.mxu0 %v193
    %1744 = vmatpush1.bf16.msra.mxu0 %v192
    %1745 = vmatprep.subr.bf16.mxu0 %v195
    %1746 = vmatpush1.bf16.msra.mxu0 %v194
    %1747 = vmatprep.subr.bf16.mxu0 0
    %1748 = vmatpush1.bf16.msra.mxu0 0
    %1749 = vmatprep.subr.bf16.mxu0 0
    %1750 = vmatpush1.bf16.msra.mxu0 0
    %1751 = vmatprep.subr.bf16.mxu0 0
    %1752 = vmatpush1.bf16.msra.mxu0 0
    %1753 = vmatprep.subr.bf16.mxu0 0
    %1754 = vmatpush1.bf16.msra.mxu0 0
    %1755 = vmatprep.subr.bf16.mxu0 0
    %1756 = vmatpush1.bf16.msra.mxu0 0
    %1757 = vmatprep.subr.bf16.mxu0 0
    %1758 = vmatpush1.bf16.msra.mxu0 0
    %1759 = vmatprep.subr.bf16.mxu0 0
    %1760 = vmatpush1.bf16.msra.mxu0 0
    %1761 = vmatprep.mubr.bf16.mxu0 %v1727
    %1762 = vmatmul.mubr.bf16.gmra.mrb[0].mxu0 %v1723
    %v1763 = vpop.f32.mrb[0].mxu0
    %v1764 = vadd.f32 %v108, %v1763
    %v1765 = vpop.f32.mrb[0].mxu0
    %v1766 = vadd.f32 %v112, %v1765
    %v1767 = vpop.f32.mrb[0].mxu0
    %v1768 = vadd.f32 %v108, %v1767
    %v1769 = vpop.f32.mrb[0].mxu0
    %v1770 = vadd.f32 %v112, %v1769
    %1771 = vdwg.mxu0
    %v1772 = vmax.f32 %v1764, 0.0
    %v1773 = vmax.f32 %v1766, 0.0
    %v1774 = vmax.f32 %v1768, 0.0
    %v1775 = vmax.f32 %v1770, 0.0
    %v1776 = vpack.c.bf16 %v1774, %v1772
    %v1777 = vpack.c.bf16 %v1775, %v1773
    %s1778 = scalar_lea.vmem [#allocation4], 1280
    %v1779 = vld [vmem:[%s1778] sm:$0xff]
    %v1780 = vld [vmem:[%s1778 + $0x8] sm:$0xff]
    %v1781 = vld [vmem:[%s1778 + $0x10] sm:$0xff]
    %v1782 = vld [vmem:[%s1778 + $0x18] sm:$0xff]
    %v1783 = vld [vmem:[%s1778 + $0x20] sm:$0xff]
    %v1784 = vld [vmem:[%s1778 + $0x28] sm:$0xff]
    %v1785 = vld [vmem:[%s1778 + $0x30] sm:$0xff]
    %v1786 = vld [vmem:[%s1778 + $0x38] sm:$0xff]
    %v1787 = vld [vmem:[%s1778 + $0x40] sm:$0xff]
    %v1788 = vld [vmem:[%s1778 + $0x48] sm:$0xff]
    %v1789 = vld [vmem:[%s1778 + $0x50] sm:$0xff]
    %v1790 = vld [vmem:[%s1778 + $0x58] sm:$0xff]
    %v1791 = vld [vmem:[%s1778 + $0x60] sm:$0xff]
    %v1792 = vld [vmem:[%s1778 + $0x68] sm:$0xff]
    %v1793 = vld [vmem:[%s1778 + $0x70] sm:$0xff]
    %v1794 = vld [vmem:[%s1778 + $0x78] sm:$0xff]
    %v1795 = vld [vmem:[%s1778 + $0x80] sm:$0xff]
    %v1796 = vld [vmem:[%s1778 + $0x88] sm:$0xff]
    %v1797 = vld [vmem:[%s1778 + $0x90] sm:$0xff]
    %v1798 = vld [vmem:[%s1778 + $0x98] sm:$0xff]
    %v1799 = vld [vmem:[%s1778 + $0xa0] sm:$0xff]
    %v1800 = vld [vmem:[%s1778 + $0xa8] sm:$0xff]
    %v1801 = vld [vmem:[%s1778 + $0xb0] sm:$0xff]
    %v1802 = vld [vmem:[%s1778 + $0xb8] sm:$0xff]
    %v1803 = vld [vmem:[%s1778 + $0xc0] sm:$0xff]
    %v1804 = vld [vmem:[%s1778 + $0xc8] sm:$0xff]
    %v1805 = vld [vmem:[%s1778 + $0xd0] sm:$0xff]
    %v1806 = vld [vmem:[%s1778 + $0xd8] sm:$0xff]
    %v1807 = vld [vmem:[%s1778 + $0xe0] sm:$0xff]
    %v1808 = vld [vmem:[%s1778 + $0xe8] sm:$0xff]
    %v1809 = vld [vmem:[%s1778 + $0xf0] sm:$0xff]
    %v1810 = vld [vmem:[%s1778 + $0xf8] sm:$0xff]
    %v1843 = vunpack.c.l.b16 %v1779
    %v1844 = vunpack.c.h.b16 %v1779
    %v1845 = vunpack.c.l.b16 %v1780
    %v1846 = vunpack.c.h.b16 %v1780
    %v1847 = vunpack.c.l.b16 %v1781
    %v1848 = vunpack.c.h.b16 %v1781
    %v1849 = vunpack.c.l.b16 %v1782
    %v1850 = vunpack.c.h.b16 %v1782
    %v1851 = vunpack.c.l.b16 %v1783
    %v1852 = vunpack.c.h.b16 %v1783
    %v1853 = vunpack.c.l.b16 %v1784
    %v1854 = vunpack.c.h.b16 %v1784
    %v1855 = vunpack.c.l.b16 %v1785
    %v1856 = vunpack.c.h.b16 %v1785
    %v1857 = vunpack.c.l.b16 %v1786
    %v1858 = vunpack.c.h.b16 %v1786
    %v1859 = vunpack.c.l.b16 %v1787
    %v1860 = vunpack.c.h.b16 %v1787
    %v1861 = vunpack.c.l.b16 %v1788
    %v1862 = vunpack.c.h.b16 %v1788
    %v1863 = vunpack.c.l.b16 %v1789
    %v1864 = vunpack.c.h.b16 %v1789
    %v1865 = vunpack.c.l.b16 %v1790
    %v1866 = vunpack.c.h.b16 %v1790
    %v1867 = vunpack.c.l.b16 %v1791
    %v1868 = vunpack.c.h.b16 %v1791
    %v1869 = vunpack.c.l.b16 %v1792
    %v1870 = vunpack.c.h.b16 %v1792
    %v1871 = vunpack.c.l.b16 %v1793
    %v1872 = vunpack.c.h.b16 %v1793
    %v1873 = vunpack.c.l.b16 %v1794
    %v1874 = vunpack.c.h.b16 %v1794
    %v1875 = vunpack.c.l.b16 %v1795
    %v1876 = vunpack.c.h.b16 %v1795
    %v1877 = vunpack.c.l.b16 %v1796
    %v1878 = vunpack.c.h.b16 %v1796
    %v1879 = vunpack.c.l.b16 %v1797
    %v1880 = vunpack.c.h.b16 %v1797
    %v1881 = vunpack.c.l.b16 %v1798
    %v1882 = vunpack.c.h.b16 %v1798
    %v1883 = vunpack.c.l.b16 %v1799
    %v1884 = vunpack.c.h.b16 %v1799
    %v1885 = vunpack.c.l.b16 %v1800
    %v1886 = vunpack.c.h.b16 %v1800
    %v1887 = vunpack.c.l.b16 %v1801
    %v1888 = vunpack.c.h.b16 %v1801
    %v1889 = vunpack.c.l.b16 %v1802
    %v1890 = vunpack.c.h.b16 %v1802
    %v1891 = vunpack.c.l.b16 %v1803
    %v1892 = vunpack.c.h.b16 %v1803
    %v1893 = vunpack.c.l.b16 %v1804
    %v1894 = vunpack.c.h.b16 %v1804
    %v1895 = vunpack.c.l.b16 %v1805
    %v1896 = vunpack.c.h.b16 %v1805
    %v1897 = vunpack.c.l.b16 %v1806
    %v1898 = vunpack.c.h.b16 %v1806
    %v1899 = vunpack.c.l.b16 %v1807
    %v1900 = vunpack.c.h.b16 %v1807
    %v1901 = vunpack.c.l.b16 %v1808
    %v1902 = vunpack.c.h.b16 %v1808
    %v1903 = vunpack.c.l.b16 %v1809
    %v1904 = vunpack.c.h.b16 %v1809
    %v1905 = vunpack.c.l.b16 %v1810
    %v1906 = vunpack.c.h.b16 %v1810
    %v1907 = vpack.c.b16 %v1845, %v1843
    %v1908 = vpack.c.b16 %v1846, %v1844
    %v1909 = vpack.c.b16 %v1849, %v1847
    %v1910 = vpack.c.b16 %v1850, %v1848
    %v1911 = vpack.c.b16 %v1853, %v1851
    %v1912 = vpack.c.b16 %v1854, %v1852
    %v1913 = vpack.c.b16 %v1857, %v1855
    %v1914 = vpack.c.b16 %v1858, %v1856
    %v1915 = vpack.c.b16 %v1861, %v1859
    %v1916 = vpack.c.b16 %v1862, %v1860
    %v1917 = vpack.c.b16 %v1865, %v1863
    %v1918 = vpack.c.b16 %v1866, %v1864
    %v1919 = vpack.c.b16 %v1869, %v1867
    %v1920 = vpack.c.b16 %v1870, %v1868
    %v1921 = vpack.c.b16 %v1873, %v1871
    %v1922 = vpack.c.b16 %v1874, %v1872
    %v1923 = vpack.c.b16 %v1877, %v1875
    %v1924 = vpack.c.b16 %v1878, %v1876
    %v1925 = vpack.c.b16 %v1881, %v1879
    %v1926 = vpack.c.b16 %v1882, %v1880
    %v1927 = vpack.c.b16 %v1885, %v1883
    %v1928 = vpack.c.b16 %v1886, %v1884
    %v1929 = vpack.c.b16 %v1889, %v1887
    %v1930 = vpack.c.b16 %v1890, %v1888
    %v1931 = vpack.c.b16 %v1893, %v1891
    %v1932 = vpack.c.b16 %v1894, %v1892
    %v1933 = vpack.c.b16 %v1897, %v1895
    %v1934 = vpack.c.b16 %v1898, %v1896
    %v1935 = vpack.c.b16 %v1901, %v1899
    %v1936 = vpack.c.b16 %v1902, %v1900
    %v1937 = vpack.c.b16 %v1905, %v1903
    %v1938 = vpack.c.b16 %v1906, %v1904
    %1971 = vmatprep.subr.bf16.mxu0 %v1908
    %1972 = vmatpush1.bf16.msra.mxu0 %v1907
    %1973 = vmatprep.subr.bf16.mxu0 %v1910
    %1974 = vmatpush1.bf16.msra.mxu0 %v1909
    %1975 = vmatprep.subr.bf16.mxu0 %v1912
    %1976 = vmatpush1.bf16.msra.mxu0 %v1911
    %1977 = vmatprep.subr.bf16.mxu0 %v1914
    %1978 = vmatpush1.bf16.msra.mxu0 %v1913
    %1979 = vmatprep.subr.bf16.mxu0 %v1916
    %1980 = vmatpush1.bf16.msra.mxu0 %v1915
    %1981 = vmatprep.subr.bf16.mxu0 %v1918
    %1982 = vmatpush1.bf16.msra.mxu0 %v1917
    %1983 = vmatprep.subr.bf16.mxu0 %v1920
    %1984 = vmatpush1.bf16.msra.mxu0 %v1919
    %1985 = vmatprep.subr.bf16.mxu0 %v1922
    %1986 = vmatpush1.bf16.msra.mxu0 %v1921
    %1987 = vmatprep.subr.bf16.mxu0 %v1924
    %1988 = vmatpush1.bf16.msra.mxu0 %v1923
    %1989 = vmatprep.subr.bf16.mxu0 %v1926
    %1990 = vmatpush1.bf16.msra.mxu0 %v1925
    %1991 = vmatprep.subr.bf16.mxu0 %v1928
    %1992 = vmatpush1.bf16.msra.mxu0 %v1927
    %1993 = vmatprep.subr.bf16.mxu0 %v1930
    %1994 = vmatpush1.bf16.msra.mxu0 %v1929
    %1995 = vmatprep.subr.bf16.mxu0 %v1932
    %1996 = vmatpush1.bf16.msra.mxu0 %v1931
    %1997 = vmatprep.subr.bf16.mxu0 %v1934
    %1998 = vmatpush1.bf16.msra.mxu0 %v1933
    %1999 = vmatprep.subr.bf16.mxu0 %v1936
    %2000 = vmatpush1.bf16.msra.mxu0 %v1935
    %2001 = vmatprep.subr.bf16.mxu0 %v1938
    %2002 = vmatpush1.bf16.msra.mxu0 %v1937
    %2003 = vmatprep.mubr.bf16.mxu0 %v1777
    %2004 = vmatmul.mubr.bf16.gmra.mrb[0].mxu0 %v1776
    %v2005 = vpop.f32.mrb[0].mxu0
    %v2006 = vadd.f32 0.0, %v2005
    %v2007 = vpop.f32.mrb[0].mxu0
    %v2008 = vadd.f32 0.0, %v2007
    %v2009 = vpop.f32.mrb[0].mxu0
    %v2010 = vadd.f32 0.0, %v2009
    %v2011 = vpop.f32.mrb[0].mxu0
    %v2012 = vadd.f32 0.0, %v2011
    %2013 = vdwg.mxu0
    %v2014 = vadd.f32 %v1710, %v2006
    %v2015 = vadd.f32 %v1711, %v2008
    %v2016 = vadd.f32 %v1712, %v2010
    %v2017 = vadd.f32 %v1713, %v2012
    %s2018 = scalar_lea.vmem %s0, 96
    %v2019 = vld [vmem:[%s2018] sm:$0xff]
    %v2020 = vld [vmem:[%s2018 + $0x8] sm:$0xff]
    %v2023 = vunpack.c.l.b16 %v2019
    %v2024 = vunpack.c.h.b16 %v2019
    %v2025 = vunpack.c.l.b16 %v2020
    %v2026 = vunpack.c.h.b16 %v2020
    %v2027 = vpack.c.b16 %v2025, %v2023
    %v2028 = vpack.c.b16 %v2026, %v2024
    %v2031 = vsel %vm214, %v2028, 0
    %2033 = vmatprep.subr.bf16.mxu0 %v179
    %2034 = vmatpush1.bf16.msra.mxu0 %v178
    %2035 = vmatprep.subr.bf16.mxu0 %v181
    %2036 = vmatpush1.bf16.msra.mxu0 %v180
    %2037 = vmatprep.subr.bf16.mxu0 %v183
    %2038 = vmatpush1.bf16.msra.mxu0 %v182
    %2039 = vmatprep.subr.bf16.mxu0 %v185
    %2040 = vmatpush1.bf16.msra.mxu0 %v184
    %2041 = vmatprep.subr.bf16.mxu0 %v187
    %2042 = vmatpush1.bf16.msra.mxu0 %v186
    %2043 = vmatprep.subr.bf16.mxu0 %v189
    %2044 = vmatpush1.bf16.msra.mxu0 %v188
    %2045 = vmatprep.subr.bf16.mxu0 %v191
    %2046 = vmatpush1.bf16.msra.mxu0 %v190
    %2047 = vmatprep.subr.bf16.mxu0 %v193
    %2048 = vmatpush1.bf16.msra.mxu0 %v192
    %2049 = vmatprep.subr.bf16.mxu0 %v195
    %2050 = vmatpush1.bf16.msra.mxu0 %v194
    %2051 = vmatprep.subr.bf16.mxu0 0
    %2052 = vmatpush1.bf16.msra.mxu0 0
    %2053 = vmatprep.subr.bf16.mxu0 0
    %2054 = vmatpush1.bf16.msra.mxu0 0
    %2055 = vmatprep.subr.bf16.mxu0 0
    %2056 = vmatpush1.bf16.msra.mxu0 0
    %2057 = vmatprep.subr.bf16.mxu0 0
    %2058 = vmatpush1.bf16.msra.mxu0 0
    %2059 = vmatprep.subr.bf16.mxu0 0
    %2060 = vmatpush1.bf16.msra.mxu0 0
    %2061 = vmatprep.subr.bf16.mxu0 0
    %2062 = vmatpush1.bf16.msra.mxu0 0
    %2063 = vmatprep.subr.bf16.mxu0 0
    %2064 = vmatpush1.bf16.msra.mxu0 0
    %2065 = vmatprep.mubr.bf16.mxu0 %v2031
    %2066 = vmatmul.mubr.bf16.gmra.mrb[0].mxu0 %v2027
    %v2067 = vpop.f32.mrb[0].mxu0
    %v2068 = vadd.f32 %v108, %v2067
    %v2069 = vpop.f32.mrb[0].mxu0
    %v2070 = vadd.f32 %v112, %v2069
    %v2071 = vpop.f32.mrb[0].mxu0
    %v2072 = vadd.f32 %v108, %v2071
    %v2073 = vpop.f32.mrb[0].mxu0
    %v2074 = vadd.f32 %v112, %v2073
    %2075 = vdwg.mxu0
    %v2076 = vmax.f32 %v2068, 0.0
    %v2077 = vmax.f32 %v2070, 0.0
    %v2078 = vmax.f32 %v2072, 0.0
    %v2079 = vmax.f32 %v2074, 0.0
    %v2080 = vpack.c.bf16 %v2078, %v2076
    %v2081 = vpack.c.bf16 %v2079, %v2077
    %s2082 = scalar_lea.vmem [#allocation4], 1536
    %v2083 = vld [vmem:[%s2082] sm:$0xff]
    %v2084 = vld [vmem:[%s2082 + $0x8] sm:$0xff]
    %v2085 = vld [vmem:[%s2082 + $0x10] sm:$0xff]
    %v2086 = vld [vmem:[%s2082 + $0x18] sm:$0xff]
    %v2087 = vld [vmem:[%s2082 + $0x20] sm:$0xff]
    %v2088 = vld [vmem:[%s2082 + $0x28] sm:$0xff]
    %v2089 = vld [vmem:[%s2082 + $0x30] sm:$0xff]
    %v2090 = vld [vmem:[%s2082 + $0x38] sm:$0xff]
    %v2091 = vld [vmem:[%s2082 + $0x40] sm:$0xff]
    %v2092 = vld [vmem:[%s2082 + $0x48] sm:$0xff]
    %v2093 = vld [vmem:[%s2082 + $0x50] sm:$0xff]
    %v2094 = vld [vmem:[%s2082 + $0x58] sm:$0xff]
    %v2095 = vld [vmem:[%s2082 + $0x60] sm:$0xff]
    %v2096 = vld [vmem:[%s2082 + $0x68] sm:$0xff]
    %v2097 = vld [vmem:[%s2082 + $0x70] sm:$0xff]
    %v2098 = vld [vmem:[%s2082 + $0x78] sm:$0xff]
    %v2099 = vld [vmem:[%s2082 + $0x80] sm:$0xff]
    %v2100 = vld [vmem:[%s2082 + $0x88] sm:$0xff]
    %v2101 = vld [vmem:[%s2082 + $0x90] sm:$0xff]
    %v2102 = vld [vmem:[%s2082 + $0x98] sm:$0xff]
    %v2103 = vld [vmem:[%s2082 + $0xa0] sm:$0xff]
    %v2104 = vld [vmem:[%s2082 + $0xa8] sm:$0xff]
    %v2105 = vld [vmem:[%s2082 + $0xb0] sm:$0xff]
    %v2106 = vld [vmem:[%s2082 + $0xb8] sm:$0xff]
    %v2107 = vld [vmem:[%s2082 + $0xc0] sm:$0xff]
    %v2108 = vld [vmem:[%s2082 + $0xc8] sm:$0xff]
    %v2109 = vld [vmem:[%s2082 + $0xd0] sm:$0xff]
    %v2110 = vld [vmem:[%s2082 + $0xd8] sm:$0xff]
    %v2111 = vld [vmem:[%s2082 + $0xe0] sm:$0xff]
    %v2112 = vld [vmem:[%s2082 + $0xe8] sm:$0xff]
    %v2113 = vld [vmem:[%s2082 + $0xf0] sm:$0xff]
    %v2114 = vld [vmem:[%s2082 + $0xf8] sm:$0xff]
    %v2147 = vunpack.c.l.b16 %v2083
    %v2148 = vunpack.c.h.b16 %v2083
    %v2149 = vunpack.c.l.b16 %v2084
    %v2150 = vunpack.c.h.b16 %v2084
    %v2151 = vunpack.c.l.b16 %v2085
    %v2152 = vunpack.c.h.b16 %v2085
    %v2153 = vunpack.c.l.b16 %v2086
    %v2154 = vunpack.c.h.b16 %v2086
    %v2155 = vunpack.c.l.b16 %v2087
    %v2156 = vunpack.c.h.b16 %v2087
    %v2157 = vunpack.c.l.b16 %v2088
    %v2158 = vunpack.c.h.b16 %v2088
    %v2159 = vunpack.c.l.b16 %v2089
    %v2160 = vunpack.c.h.b16 %v2089
    %v2161 = vunpack.c.l.b16 %v2090
    %v2162 = vunpack.c.h.b16 %v2090
    %v2163 = vunpack.c.l.b16 %v2091
    %v2164 = vunpack.c.h.b16 %v2091
    %v2165 = vunpack.c.l.b16 %v2092
    %v2166 = vunpack.c.h.b16 %v2092
    %v2167 = vunpack.c.l.b16 %v2093
    %v2168 = vunpack.c.h.b16 %v2093
    %v2169 = vunpack.c.l.b16 %v2094
    %v2170 = vunpack.c.h.b16 %v2094
    %v2171 = vunpack.c.l.b16 %v2095
    %v2172 = vunpack.c.h.b16 %v2095
    %v2173 = vunpack.c.l.b16 %v2096
    %v2174 = vunpack.c.h.b16 %v2096
    %v2175 = vunpack.c.l.b16 %v2097
    %v2176 = vunpack.c.h.b16 %v2097
    %v2177 = vunpack.c.l.b16 %v2098
    %v2178 = vunpack.c.h.b16 %v2098
    %v2179 = vunpack.c.l.b16 %v2099
    %v2180 = vunpack.c.h.b16 %v2099
    %v2181 = vunpack.c.l.b16 %v2100
    %v2182 = vunpack.c.h.b16 %v2100
    %v2183 = vunpack.c.l.b16 %v2101
    %v2184 = vunpack.c.h.b16 %v2101
    %v2185 = vunpack.c.l.b16 %v2102
    %v2186 = vunpack.c.h.b16 %v2102
    %v2187 = vunpack.c.l.b16 %v2103
    %v2188 = vunpack.c.h.b16 %v2103
    %v2189 = vunpack.c.l.b16 %v2104
    %v2190 = vunpack.c.h.b16 %v2104
    %v2191 = vunpack.c.l.b16 %v2105
    %v2192 = vunpack.c.h.b16 %v2105
    %v2193 = vunpack.c.l.b16 %v2106
    %v2194 = vunpack.c.h.b16 %v2106
    %v2195 = vunpack.c.l.b16 %v2107
    %v2196 = vunpack.c.h.b16 %v2107
    %v2197 = vunpack.c.l.b16 %v2108
    %v2198 = vunpack.c.h.b16 %v2108
    %v2199 = vunpack.c.l.b16 %v2109
    %v2200 = vunpack.c.h.b16 %v2109
    %v2201 = vunpack.c.l.b16 %v2110
    %v2202 = vunpack.c.h.b16 %v2110
    %v2203 = vunpack.c.l.b16 %v2111
    %v2204 = vunpack.c.h.b16 %v2111
    %v2205 = vunpack.c.l.b16 %v2112
    %v2206 = vunpack.c.h.b16 %v2112
    %v2207 = vunpack.c.l.b16 %v2113
    %v2208 = vunpack.c.h.b16 %v2113
    %v2209 = vunpack.c.l.b16 %v2114
    %v2210 = vunpack.c.h.b16 %v2114
    %v2211 = vpack.c.b16 %v2149, %v2147
    %v2212 = vpack.c.b16 %v2150, %v2148
    %v2213 = vpack.c.b16 %v2153, %v2151
    %v2214 = vpack.c.b16 %v2154, %v2152
    %v2215 = vpack.c.b16 %v2157, %v2155
    %v2216 = vpack.c.b16 %v2158, %v2156
    %v2217 = vpack.c.b16 %v2161, %v2159
    %v2218 = vpack.c.b16 %v2162, %v2160
    %v2219 = vpack.c.b16 %v2165, %v2163
    %v2220 = vpack.c.b16 %v2166, %v2164
    %v2221 = vpack.c.b16 %v2169, %v2167
    %v2222 = vpack.c.b16 %v2170, %v2168
    %v2223 = vpack.c.b16 %v2173, %v2171
    %v2224 = vpack.c.b16 %v2174, %v2172
    %v2225 = vpack.c.b16 %v2177, %v2175
    %v2226 = vpack.c.b16 %v2178, %v2176
    %v2227 = vpack.c.b16 %v2181, %v2179
    %v2228 = vpack.c.b16 %v2182, %v2180
    %v2229 = vpack.c.b16 %v2185, %v2183
    %v2230 = vpack.c.b16 %v2186, %v2184
    %v2231 = vpack.c.b16 %v2189, %v2187
    %v2232 = vpack.c.b16 %v2190, %v2188
    %v2233 = vpack.c.b16 %v2193, %v2191
    %v2234 = vpack.c.b16 %v2194, %v2192
    %v2235 = vpack.c.b16 %v2197, %v2195
    %v2236 = vpack.c.b16 %v2198, %v2196
    %v2237 = vpack.c.b16 %v2201, %v2199
    %v2238 = vpack.c.b16 %v2202, %v2200
    %v2239 = vpack.c.b16 %v2205, %v2203
    %v2240 = vpack.c.b16 %v2206, %v2204
    %v2241 = vpack.c.b16 %v2209, %v2207
    %v2242 = vpack.c.b16 %v2210, %v2208
    %2275 = vmatprep.subr.bf16.mxu0 %v2212
    %2276 = vmatpush1.bf16.msra.mxu0 %v2211
    %2277 = vmatprep.subr.bf16.mxu0 %v2214
    %2278 = vmatpush1.bf16.msra.mxu0 %v2213
    %2279 = vmatprep.subr.bf16.mxu0 %v2216
    %2280 = vmatpush1.bf16.msra.mxu0 %v2215
    %2281 = vmatprep.subr.bf16.mxu0 %v2218
    %2282 = vmatpush1.bf16.msra.mxu0 %v2217
    %2283 = vmatprep.subr.bf16.mxu0 %v2220
    %2284 = vmatpush1.bf16.msra.mxu0 %v2219
    %2285 = vmatprep.subr.bf16.mxu0 %v2222
    %2286 = vmatpush1.bf16.msra.mxu0 %v2221
    %2287 = vmatprep.subr.bf16.mxu0 %v2224
    %2288 = vmatpush1.bf16.msra.mxu0 %v2223
    %2289 = vmatprep.subr.bf16.mxu0 %v2226
    %2290 = vmatpush1.bf16.msra.mxu0 %v2225
    %2291 = vmatprep.subr.bf16.mxu0 %v2228
    %2292 = vmatpush1.bf16.msra.mxu0 %v2227
    %2293 = vmatprep.subr.bf16.mxu0 %v2230
    %2294 = vmatpush1.bf16.msra.mxu0 %v2229
    %2295 = vmatprep.subr.bf16.mxu0 %v2232
    %2296 = vmatpush1.bf16.msra.mxu0 %v2231
    %2297 = vmatprep.subr.bf16.mxu0 %v2234
    %2298 = vmatpush1.bf16.msra.mxu0 %v2233
    %2299 = vmatprep.subr.bf16.mxu0 %v2236
    %2300 = vmatpush1.bf16.msra.mxu0 %v2235
    %2301 = vmatprep.subr.bf16.mxu0 %v2238
    %2302 = vmatpush1.bf16.msra.mxu0 %v2237
    %2303 = vmatprep.subr.bf16.mxu0 %v2240
    %2304 = vmatpush1.bf16.msra.mxu0 %v2239
    %2305 = vmatprep.subr.bf16.mxu0 %v2242
    %2306 = vmatpush1.bf16.msra.mxu0 %v2241
    %2307 = vmatprep.mubr.bf16.mxu0 %v2081
    %2308 = vmatmul.mubr.bf16.gmra.mrb[0].mxu0 %v2080
    %v2309 = vpop.f32.mrb[0].mxu0
    %v2310 = vadd.f32 0.0, %v2309
    %v2311 = vpop.f32.mrb[0].mxu0
    %v2312 = vadd.f32 0.0, %v2311
    %v2313 = vpop.f32.mrb[0].mxu0
    %v2314 = vadd.f32 0.0, %v2313
    %v2315 = vpop.f32.mrb[0].mxu0
    %v2316 = vadd.f32 0.0, %v2315
    %2317 = vdwg.mxu0
    %v2318 = vadd.f32 %v2014, %v2310
    %v2319 = vadd.f32 %v2015, %v2312
    %v2320 = vadd.f32 %v2016, %v2314
    %v2321 = vadd.f32 %v2017, %v2316
    %v2322 = vld [vmem:[%s4] sm:$0x3]
    %v2324 = vlaneseq
    %v2325 = vshrl.u32 %v2324, 7
    %v2326 = vsub.s32 0, %v2325
    %v2327 = vrot.slane %v2322, %v2326
    %v2328 = vlaneseq
    %v2329 = vshrl.u32 %v2328, 7
    %v2330 = vsub.s32 1, %v2329
    %v2331 = vrot.slane %v2322, %v2330
    %v2334 = vadd.f32 %v2318, %v2327
    %v2335 = vadd.f32 %v2319, %v2331
    %v2336 = vadd.f32 %v2320, %v2327
    %v2337 = vadd.f32 %v2321, %v2331
    %v2338 = vmax.f32 %v2334, 0.0
    %v2339 = vmax.f32 %v2335, 0.0
    %v2340 = vmax.f32 %v2336, 0.0
    %v2341 = vmax.f32 %v2337, 0.0
    %v2342 = vpack.c.bf16 %v2340, %v2338
    %v2343 = vpack.c.bf16 %v2341, %v2339
    %v2344 = vld [vmem:[%s5] sm:$0xff]
    %v2345 = vld [vmem:[%s5 + $0x8] sm:$0xff]
    %v2346 = vld [vmem:[%s5 + $0x10] sm:$0xff]
    %v2347 = vld [vmem:[%s5 + $0x18] sm:$0xff]
    %v2348 = vld [vmem:[%s5 + $0x20] sm:$0xff]
    %v2349 = vld [vmem:[%s5 + $0x28] sm:$0xff]
    %v2350 = vld [vmem:[%s5 + $0x30] sm:$0xff]
    %v2351 = vld [vmem:[%s5 + $0x38] sm:$0xff]
    %v2352 = vld [vmem:[%s5 + $0x40] sm:$0xff]
    %v2353 = vld [vmem:[%s5 + $0x48] sm:$0xff]
    %v2354 = vld [vmem:[%s5 + $0x50] sm:$0xff]
    %v2355 = vld [vmem:[%s5 + $0x58] sm:$0xff]
    %v2356 = vld [vmem:[%s5 + $0x60] sm:$0xff]
    %v2357 = vld [vmem:[%s5 + $0x68] sm:$0xff]
    %v2358 = vld [vmem:[%s5 + $0x70] sm:$0xff]
    %v2359 = vld [vmem:[%s5 + $0x78] sm:$0xff]
    %v2360 = vld [vmem:[%s5 + $0x80] sm:$0xff]
    %v2361 = vld [vmem:[%s5 + $0x88] sm:$0xff]
    %v2362 = vld [vmem:[%s5 + $0x90] sm:$0xff]
    %v2363 = vld [vmem:[%s5 + $0x98] sm:$0xff]
    %v2364 = vld [vmem:[%s5 + $0xa0] sm:$0xff]
    %v2365 = vld [vmem:[%s5 + $0xa8] sm:$0xff]
    %v2366 = vld [vmem:[%s5 + $0xb0] sm:$0xff]
    %v2367 = vld [vmem:[%s5 + $0xb8] sm:$0xff]
    %v2368 = vld [vmem:[%s5 + $0xc0] sm:$0xff]
    %v2369 = vld [vmem:[%s5 + $0xc8] sm:$0xff]
    %v2370 = vld [vmem:[%s5 + $0xd0] sm:$0xff]
    %v2371 = vld [vmem:[%s5 + $0xd8] sm:$0xff]
    %v2372 = vld [vmem:[%s5 + $0xe0] sm:$0xff]
    %v2373 = vld [vmem:[%s5 + $0xe8] sm:$0xff]
    %v2374 = vld [vmem:[%s5 + $0xf0] sm:$0xff]
    %v2375 = vld [vmem:[%s5 + $0xf8] sm:$0xff]
    %v2376 = vld [vmem:[%s5 + $0x100] sm:$0xff]
    %v2377 = vld [vmem:[%s5 + $0x108] sm:$0xff]
    %v2378 = vld [vmem:[%s5 + $0x110] sm:$0xff]
    %v2379 = vld [vmem:[%s5 + $0x118] sm:$0xff]
    %v2380 = vld [vmem:[%s5 + $0x120] sm:$0xff]
    %v2381 = vld [vmem:[%s5 + $0x128] sm:$0xff]
    %v2382 = vld [vmem:[%s5 + $0x130] sm:$0xff]
    %v2383 = vld [vmem:[%s5 + $0x138] sm:$0xff]
    %v2384 = vld [vmem:[%s5 + $0x140] sm:$0xff]
    %v2385 = vld [vmem:[%s5 + $0x148] sm:$0xff]
    %v2386 = vld [vmem:[%s5 + $0x150] sm:$0xff]
    %v2387 = vld [vmem:[%s5 + $0x158] sm:$0xff]
    %v2388 = vld [vmem:[%s5 + $0x160] sm:$0xff]
    %v2389 = vld [vmem:[%s5 + $0x168] sm:$0xff]
    %v2390 = vld [vmem:[%s5 + $0x170] sm:$0xff]
    %v2391 = vld [vmem:[%s5 + $0x178] sm:$0xff]
    %v2392 = vld [vmem:[%s5 + $0x180] sm:$0xff]
    %v2393 = vld [vmem:[%s5 + $0x188] sm:$0xff]
    %v2394 = vld [vmem:[%s5 + $0x190] sm:$0xff]
    %v2395 = vld [vmem:[%s5 + $0x198] sm:$0xff]
    %v2396 = vld [vmem:[%s5 + $0x1a0] sm:$0xff]
    %v2397 = vld [vmem:[%s5 + $0x1a8] sm:$0xff]
    %v2398 = vld [vmem:[%s5 + $0x1b0] sm:$0xff]
    %v2399 = vld [vmem:[%s5 + $0x1b8] sm:$0xff]
    %v2400 = vld [vmem:[%s5 + $0x1c0] sm:$0xff]
    %v2401 = vld [vmem:[%s5 + $0x1c8] sm:$0xff]
    %v2402 = vld [vmem:[%s5 + $0x1d0] sm:$0xff]
    %v2403 = vld [vmem:[%s5 + $0x1d8] sm:$0xff]
    %v2404 = vld [vmem:[%s5 + $0x1e0] sm:$0xff]
    %v2405 = vld [vmem:[%s5 + $0x1e8] sm:$0xff]
    %v2406 = vld [vmem:[%s5 + $0x1f0] sm:$0xff]
    %v2407 = vld [vmem:[%s5 + $0x1f8] sm:$0xff]
    %v2408 = vld [vmem:[%s6] sm:$0xf]
    %v2410 = vlaneseq
    %v2411 = vshrl.u32 %v2410, 7
    %v2412 = vsub.s32 0, %v2411
    %v2413 = vrot.slane %v2408, %v2412
    %v2414 = vlaneseq
    %v2415 = vshrl.u32 %v2414, 7
    %v2416 = vsub.s32 1, %v2415
    %v2417 = vrot.slane %v2408, %v2416
    %v2418 = vlaneseq
    %v2419 = vshrl.u32 %v2418, 7
    %v2420 = vsub.s32 2, %v2419
    %v2421 = vrot.slane %v2408, %v2420
    %v2422 = vlaneseq
    %v2423 = vshrl.u32 %v2422, 7
    %v2424 = vsub.s32 3, %v2423
    %v2425 = vrot.slane %v2408, %v2424
    %v2494 = vunpack.c.l.b16 %v2344
    %v2495 = vunpack.c.h.b16 %v2344
    %v2496 = vunpack.c.l.b16 %v2345
    %v2497 = vunpack.c.h.b16 %v2345
    %v2498 = vunpack.c.l.b16 %v2346
    %v2499 = vunpack.c.h.b16 %v2346
    %v2500 = vunpack.c.l.b16 %v2347
    %v2501 = vunpack.c.h.b16 %v2347
    %v2502 = vunpack.c.l.b16 %v2348
    %v2503 = vunpack.c.h.b16 %v2348
    %v2504 = vunpack.c.l.b16 %v2349
    %v2505 = vunpack.c.h.b16 %v2349
    %v2506 = vunpack.c.l.b16 %v2350
    %v2507 = vunpack.c.h.b16 %v2350
    %v2508 = vunpack.c.l.b16 %v2351
    %v2509 = vunpack.c.h.b16 %v2351
    %v2510 = vunpack.c.l.b16 %v2352
    %v2511 = vunpack.c.h.b16 %v2352
    %v2512 = vunpack.c.l.b16 %v2353
    %v2513 = vunpack.c.h.b16 %v2353
    %v2514 = vunpack.c.l.b16 %v2354
    %v2515 = vunpack.c.h.b16 %v2354
    %v2516 = vunpack.c.l.b16 %v2355
    %v2517 = vunpack.c.h.b16 %v2355
    %v2518 = vunpack.c.l.b16 %v2356
    %v2519 = vunpack.c.h.b16 %v2356
    %v2520 = vunpack.c.l.b16 %v2357
    %v2521 = vunpack.c.h.b16 %v2357
    %v2522 = vunpack.c.l.b16 %v2358
    %v2523 = vunpack.c.h.b16 %v2358
    %v2524 = vunpack.c.l.b16 %v2359
    %v2525 = vunpack.c.h.b16 %v2359
    %v2526 = vunpack.c.l.b16 %v2360
    %v2527 = vunpack.c.h.b16 %v2360
    %v2528 = vunpack.c.l.b16 %v2361
    %v2529 = vunpack.c.h.b16 %v2361
    %v2530 = vunpack.c.l.b16 %v2362
    %v2531 = vunpack.c.h.b16 %v2362
    %v2532 = vunpack.c.l.b16 %v2363
    %v2533 = vunpack.c.h.b16 %v2363
    %v2534 = vunpack.c.l.b16 %v2364
    %v2535 = vunpack.c.h.b16 %v2364
    %v2536 = vunpack.c.l.b16 %v2365
    %v2537 = vunpack.c.h.b16 %v2365
    %v2538 = vunpack.c.l.b16 %v2366
    %v2539 = vunpack.c.h.b16 %v2366
    %v2540 = vunpack.c.l.b16 %v2367
    %v2541 = vunpack.c.h.b16 %v2367
    %v2542 = vunpack.c.l.b16 %v2368
    %v2543 = vunpack.c.h.b16 %v2368
    %v2544 = vunpack.c.l.b16 %v2369
    %v2545 = vunpack.c.h.b16 %v2369
    %v2546 = vunpack.c.l.b16 %v2370
    %v2547 = vunpack.c.h.b16 %v2370
    %v2548 = vunpack.c.l.b16 %v2371
    %v2549 = vunpack.c.h.b16 %v2371
    %v2550 = vunpack.c.l.b16 %v2372
    %v2551 = vunpack.c.h.b16 %v2372
    %v2552 = vunpack.c.l.b16 %v2373
    %v2553 = vunpack.c.h.b16 %v2373
    %v2554 = vunpack.c.l.b16 %v2374
    %v2555 = vunpack.c.h.b16 %v2374
    %v2556 = vunpack.c.l.b16 %v2375
    %v2557 = vunpack.c.h.b16 %v2375
    %v2558 = vunpack.c.l.b16 %v2376
    %v2559 = vunpack.c.h.b16 %v2376
    %v2560 = vunpack.c.l.b16 %v2377
    %v2561 = vunpack.c.h.b16 %v2377
    %v2562 = vunpack.c.l.b16 %v2378
    %v2563 = vunpack.c.h.b16 %v2378
    %v2564 = vunpack.c.l.b16 %v2379
    %v2565 = vunpack.c.h.b16 %v2379
    %v2566 = vunpack.c.l.b16 %v2380
    %v2567 = vunpack.c.h.b16 %v2380
    %v2568 = vunpack.c.l.b16 %v2381
    %v2569 = vunpack.c.h.b16 %v2381
    %v2570 = vunpack.c.l.b16 %v2382
    %v2571 = vunpack.c.h.b16 %v2382
    %v2572 = vunpack.c.l.b16 %v2383
    %v2573 = vunpack.c.h.b16 %v2383
    %v2574 = vunpack.c.l.b16 %v2384
    %v2575 = vunpack.c.h.b16 %v2384
    %v2576 = vunpack.c.l.b16 %v2385
    %v2577 = vunpack.c.h.b16 %v2385
    %v2578 = vunpack.c.l.b16 %v2386
    %v2579 = vunpack.c.h.b16 %v2386
    %v2580 = vunpack.c.l.b16 %v2387
    %v2581 = vunpack.c.h.b16 %v2387
    %v2582 = vunpack.c.l.b16 %v2388
    %v2583 = vunpack.c.h.b16 %v2388
    %v2584 = vunpack.c.l.b16 %v2389
    %v2585 = vunpack.c.h.b16 %v2389
    %v2586 = vunpack.c.l.b16 %v2390
    %v2587 = vunpack.c.h.b16 %v2390
    %v2588 = vunpack.c.l.b16 %v2391
    %v2589 = vunpack.c.h.b16 %v2391
    %v2590 = vunpack.c.l.b16 %v2392
    %v2591 = vunpack.c.h.b16 %v2392
    %v2592 = vunpack.c.l.b16 %v2393
    %v2593 = vunpack.c.h.b16 %v2393
    %v2594 = vunpack.c.l.b16 %v2394
    %v2595 = vunpack.c.h.b16 %v2394
    %v2596 = vunpack.c.l.b16 %v2395
    %v2597 = vunpack.c.h.b16 %v2395
    %v2598 = vunpack.c.l.b16 %v2396
    %v2599 = vunpack.c.h.b16 %v2396
    %v2600 = vunpack.c.l.b16 %v2397
    %v2601 = vunpack.c.h.b16 %v2397
    %v2602 = vunpack.c.l.b16 %v2398
    %v2603 = vunpack.c.h.b16 %v2398
    %v2604 = vunpack.c.l.b16 %v2399
    %v2605 = vunpack.c.h.b16 %v2399
    %v2606 = vunpack.c.l.b16 %v2400
    %v2607 = vunpack.c.h.b16 %v2400
    %v2608 = vunpack.c.l.b16 %v2401
    %v2609 = vunpack.c.h.b16 %v2401
    %v2610 = vunpack.c.l.b16 %v2402
    %v2611 = vunpack.c.h.b16 %v2402
    %v2612 = vunpack.c.l.b16 %v2403
    %v2613 = vunpack.c.h.b16 %v2403
    %v2614 = vunpack.c.l.b16 %v2404
    %v2615 = vunpack.c.h.b16 %v2404
    %v2616 = vunpack.c.l.b16 %v2405
    %v2617 = vunpack.c.h.b16 %v2405
    %v2618 = vunpack.c.l.b16 %v2406
    %v2619 = vunpack.c.h.b16 %v2406
    %v2620 = vunpack.c.l.b16 %v2407
    %v2621 = vunpack.c.h.b16 %v2407
    %v2622 = vpack.c.b16 %v2498, %v2494
    %v2623 = vpack.c.b16 %v2499, %v2495
    %v2624 = vpack.c.b16 %v2500, %v2496
    %v2625 = vpack.c.b16 %v2501, %v2497
    %v2626 = vpack.c.b16 %v2506, %v2502
    %v2627 = vpack.c.b16 %v2507, %v2503
    %v2628 = vpack.c.b16 %v2508, %v2504
    %v2629 = vpack.c.b16 %v2509, %v2505
    %v2630 = vpack.c.b16 %v2514, %v2510
    %v2631 = vpack.c.b16 %v2515, %v2511
    %v2632 = vpack.c.b16 %v2516, %v2512
    %v2633 = vpack.c.b16 %v2517, %v2513
    %v2634 = vpack.c.b16 %v2522, %v2518
    %v2635 = vpack.c.b16 %v2523, %v2519
    %v2636 = vpack.c.b16 %v2524, %v2520
    %v2637 = vpack.c.b16 %v2525, %v2521
    %v2638 = vpack.c.b16 %v2530, %v2526
    %v2639 = vpack.c.b16 %v2531, %v2527
    %v2640 = vpack.c.b16 %v2532, %v2528
    %v2641 = vpack.c.b16 %v2533, %v2529
    %v2642 = vpack.c.b16 %v2538, %v2534
    %v2643 = vpack.c.b16 %v2539, %v2535
    %v2644 = vpack.c.b16 %v2540, %v2536
    %v2645 = vpack.c.b16 %v2541, %v2537
    %v2646 = vpack.c.b16 %v2546, %v2542
    %v2647 = vpack.c.b16 %v2547, %v2543
    %v2648 = vpack.c.b16 %v2548, %v2544
    %v2649 = vpack.c.b16 %v2549, %v2545
    %v2650 = vpack.c.b16 %v2554, %v2550
    %v2651 = vpack.c.b16 %v2555, %v2551
    %v2652 = vpack.c.b16 %v2556, %v2552
    %v2653 = vpack.c.b16 %v2557, %v2553
    %v2654 = vpack.c.b16 %v2562, %v2558
    %v2655 = vpack.c.b16 %v2563, %v2559
    %v2656 = vpack.c.b16 %v2564, %v2560
    %v2657 = vpack.c.b16 %v2565, %v2561
    %v2658 = vpack.c.b16 %v2570, %v2566
    %v2659 = vpack.c.b16 %v2571, %v2567
    %v2660 = vpack.c.b16 %v2572, %v2568
    %v2661 = vpack.c.b16 %v2573, %v2569
    %v2662 = vpack.c.b16 %v2578, %v2574
    %v2663 = vpack.c.b16 %v2579, %v2575
    %v2664 = vpack.c.b16 %v2580, %v2576
    %v2665 = vpack.c.b16 %v2581, %v2577
    %v2666 = vpack.c.b16 %v2586, %v2582
    %v2667 = vpack.c.b16 %v2587, %v2583
    %v2668 = vpack.c.b16 %v2588, %v2584
    %v2669 = vpack.c.b16 %v2589, %v2585
    %v2670 = vpack.c.b16 %v2594, %v2590
    %v2671 = vpack.c.b16 %v2595, %v2591
    %v2672 = vpack.c.b16 %v2596, %v2592
    %v2673 = vpack.c.b16 %v2597, %v2593
    %v2674 = vpack.c.b16 %v2602, %v2598
    %v2675 = vpack.c.b16 %v2603, %v2599
    %v2676 = vpack.c.b16 %v2604, %v2600
    %v2677 = vpack.c.b16 %v2605, %v2601
    %v2678 = vpack.c.b16 %v2610, %v2606
    %v2679 = vpack.c.b16 %v2611, %v2607
    %v2680 = vpack.c.b16 %v2612, %v2608
    %v2681 = vpack.c.b16 %v2613, %v2609
    %v2682 = vpack.c.b16 %v2618, %v2614
    %v2683 = vpack.c.b16 %v2619, %v2615
    %v2684 = vpack.c.b16 %v2620, %v2616
    %v2685 = vpack.c.b16 %v2621, %v2617
    %2750 = vmatprep.subr.bf16.mxu0 %v2623
    %2751 = vmatpush1.bf16.msra.mxu0 %v2622
    %2752 = vmatprep.subr.bf16.mxu0 %v2627
    %2753 = vmatpush1.bf16.msra.mxu0 %v2626
    %2754 = vmatprep.subr.bf16.mxu0 %v2631
    %2755 = vmatpush1.bf16.msra.mxu0 %v2630
    %2756 = vmatprep.subr.bf16.mxu0 %v2635
    %2757 = vmatpush1.bf16.msra.mxu0 %v2634
    %2758 = vmatprep.subr.bf16.mxu0 %v2639
    %2759 = vmatpush1.bf16.msra.mxu0 %v2638
    %2760 = vmatprep.subr.bf16.mxu0 %v2643
    %2761 = vmatpush1.bf16.msra.mxu0 %v2642
    %2762 = vmatprep.subr.bf16.mxu0 %v2647
    %2763 = vmatpush1.bf16.msra.mxu0 %v2646
    %2764 = vmatprep.subr.bf16.mxu0 %v2651
    %2765 = vmatpush1.bf16.msra.mxu0 %v2650
    %2766 = vmatprep.subr.bf16.mxu0 %v2655
    %2767 = vmatpush1.bf16.msra.mxu0 %v2654
    %2768 = vmatprep.subr.bf16.mxu0 %v2659
    %2769 = vmatpush1.bf16.msra.mxu0 %v2658
    %2770 = vmatprep.subr.bf16.mxu0 %v2663
    %2771 = vmatpush1.bf16.msra.mxu0 %v2662
    %2772 = vmatprep.subr.bf16.mxu0 %v2667
    %2773 = vmatpush1.bf16.msra.mxu0 %v2666
    %2774 = vmatprep.subr.bf16.mxu0 %v2671
    %2775 = vmatpush1.bf16.msra.mxu0 %v2670
    %2776 = vmatprep.subr.bf16.mxu0 %v2675
    %2777 = vmatpush1.bf16.msra.mxu0 %v2674
    %2778 = vmatprep.subr.bf16.mxu0 %v2679
    %2779 = vmatpush1.bf16.msra.mxu0 %v2678
    %2780 = vmatprep.subr.bf16.mxu0 %v2683
    %2781 = vmatpush1.bf16.msra.mxu0 %v2682
    %2782 = vmatprep.mubr.bf16.mxu0 %v2343
    %2783 = vmatmul.mubr.bf16.gmra.mrb[0].mxu0 %v2342
    %v2784 = vpop.f32.mrb[0].mxu0
    %v2785 = vadd.f32 %v2413, %v2784
    %v2786 = vpop.f32.mrb[0].mxu0
    %v2787 = vadd.f32 %v2417, %v2786
    %v2788 = vpop.f32.mrb[0].mxu0
    %v2789 = vadd.f32 %v2413, %v2788
    %v2790 = vpop.f32.mrb[0].mxu0
    %v2791 = vadd.f32 %v2417, %v2790
    %2792 = vdwg.mxu0
    %2793 = vmatprep.subr.bf16.mxu0 %v2625
    %2794 = vmatpush1.bf16.msra.mxu0 %v2624
    %2795 = vmatprep.subr.bf16.mxu0 %v2629
    %2796 = vmatpush1.bf16.msra.mxu0 %v2628
    %2797 = vmatprep.subr.bf16.mxu0 %v2633
    %2798 = vmatpush1.bf16.msra.mxu0 %v2632
    %2799 = vmatprep.subr.bf16.mxu0 %v2637
    %2800 = vmatpush1.bf16.msra.mxu0 %v2636
    %2801 = vmatprep.subr.bf16.mxu0 %v2641
    %2802 = vmatpush1.bf16.msra.mxu0 %v2640
    %2803 = vmatprep.subr.bf16.mxu0 %v2645
    %2804 = vmatpush1.bf16.msra.mxu0 %v2644
    %2805 = vmatprep.subr.bf16.mxu0 %v2649
    %2806 = vmatpush1.bf16.msra.mxu0 %v2648
    %2807 = vmatprep.subr.bf16.mxu0 %v2653
    %2808 = vmatpush1.bf16.msra.mxu0 %v2652
    %2809 = vmatprep.subr.bf16.mxu0 %v2657
    %2810 = vmatpush1.bf16.msra.mxu0 %v2656
    %2811 = vmatprep.subr.bf16.mxu0 %v2661
    %2812 = vmatpush1.bf16.msra.mxu0 %v2660
    %2813 = vmatprep.subr.bf16.mxu0 %v2665
    %2814 = vmatpush1.bf16.msra.mxu0 %v2664
    %2815 = vmatprep.subr.bf16.mxu0 %v2669
    %2816 = vmatpush1.bf16.msra.mxu0 %v2668
    %2817 = vmatprep.subr.bf16.mxu0 %v2673
    %2818 = vmatpush1.bf16.msra.mxu0 %v2672
    %2819 = vmatprep.subr.bf16.mxu0 %v2677
    %2820 = vmatpush1.bf16.msra.mxu0 %v2676
    %2821 = vmatprep.subr.bf16.mxu0 %v2681
    %2822 = vmatpush1.bf16.msra.mxu0 %v2680
    %2823 = vmatprep.subr.bf16.mxu0 %v2685
    %2824 = vmatpush1.bf16.msra.mxu0 %v2684
    %2825 = vmatprep.mubr.bf16.mxu0 %v2343
    %2826 = vmatmul.mubr.bf16.gmra.mrb[0].mxu0 %v2342
    %v2827 = vpop.f32.mrb[0].mxu0
    %v2828 = vadd.f32 %v2421, %v2827
    %v2829 = vpop.f32.mrb[0].mxu0
    %v2830 = vadd.f32 %v2425, %v2829
    %v2831 = vpop.f32.mrb[0].mxu0
    %v2832 = vadd.f32 %v2421, %v2831
    %v2833 = vpop.f32.mrb[0].mxu0
    %v2834 = vadd.f32 %v2425, %v2833
    %2835 = vdwg.mxu0
    %v2836 = vmax.f32 %v2785, 0.0
    %v2837 = vmax.f32 %v2787, 0.0
    %v2838 = vmax.f32 %v2828, 0.0
    %v2839 = vmax.f32 %v2830, 0.0
    %v2840 = vmax.f32 %v2789, 0.0
    %v2841 = vmax.f32 %v2791, 0.0
    %v2842 = vmax.f32 %v2832, 0.0
    %v2843 = vmax.f32 %v2834, 0.0
    %v2844 = vpack.c.bf16 %v2840, %v2836
    %v2845 = vpack.c.bf16 %v2841, %v2837
    %v2846 = vpack.c.bf16 %v2842, %v2838
    %v2847 = vpack.c.bf16 %v2843, %v2839
    %v2848 = vld [vmem:[#allocation6] sm:$0xff]
    %v2849 = vld [vmem:[#allocation6 + $0x8] sm:$0xff]
    %v2850 = vld [vmem:[#allocation6 + $0x10] sm:$0xff]
    %v2851 = vld [vmem:[#allocation6 + $0x18] sm:$0xff]
    %v2852 = vld [vmem:[#allocation6 + $0x20] sm:$0xff]
    %v2853 = vld [vmem:[#allocation6 + $0x28] sm:$0xff]
    %v2854 = vld [vmem:[#allocation6 + $0x30] sm:$0xff]
    %v2855 = vld [vmem:[#allocation6 + $0x38] sm:$0xff]
    %v2856 = vld [vmem:[#allocation6 + $0x40] sm:$0xff]
    %v2857 = vld [vmem:[#allocation6 + $0x48] sm:$0xff]
    %v2858 = vld [vmem:[#allocation6 + $0x50] sm:$0xff]
    %v2859 = vld [vmem:[#allocation6 + $0x58] sm:$0xff]
    %v2860 = vld [vmem:[#allocation6 + $0x60] sm:$0xff]
    %v2861 = vld [vmem:[#allocation6 + $0x68] sm:$0xff]
    %v2862 = vld [vmem:[#allocation6 + $0x70] sm:$0xff]
    %v2863 = vld [vmem:[#allocation6 + $0x78] sm:$0xff]
    %v2864 = vld [vmem:[#allocation6 + $0x80] sm:$0xff]
    %v2865 = vld [vmem:[#allocation6 + $0x88] sm:$0xff]
    %v2866 = vld [vmem:[#allocation6 + $0x90] sm:$0xff]
    %v2867 = vld [vmem:[#allocation6 + $0x98] sm:$0xff]
    %v2868 = vld [vmem:[#allocation6 + $0xa0] sm:$0xff]
    %v2869 = vld [vmem:[#allocation6 + $0xa8] sm:$0xff]
    %v2870 = vld [vmem:[#allocation6 + $0xb0] sm:$0xff]
    %v2871 = vld [vmem:[#allocation6 + $0xb8] sm:$0xff]
    %v2872 = vld [vmem:[#allocation6 + $0xc0] sm:$0xff]
    %v2873 = vld [vmem:[#allocation6 + $0xc8] sm:$0xff]
    %v2874 = vld [vmem:[#allocation6 + $0xd0] sm:$0xff]
    %v2875 = vld [vmem:[#allocation6 + $0xd8] sm:$0xff]
    %v2876 = vld [vmem:[#allocation6 + $0xe0] sm:$0xff]
    %v2877 = vld [vmem:[#allocation6 + $0xe8] sm:$0xff]
    %v2878 = vld [vmem:[#allocation6 + $0xf0] sm:$0xff]
    %v2879 = vld [vmem:[#allocation6 + $0xf8] sm:$0xff]
    %v2880 = vld [vmem:[#allocation6 + $0x100] sm:$0xff]
    %v2881 = vld [vmem:[#allocation6 + $0x108] sm:$0xff]
    %v2882 = vld [vmem:[#allocation6 + $0x110] sm:$0xff]
    %v2883 = vld [vmem:[#allocation6 + $0x118] sm:$0xff]
    %v2884 = vld [vmem:[#allocation6 + $0x120] sm:$0xff]
    %v2885 = vld [vmem:[#allocation6 + $0x128] sm:$0xff]
    %v2886 = vld [vmem:[#allocation6 + $0x130] sm:$0xff]
    %v2887 = vld [vmem:[#allocation6 + $0x138] sm:$0xff]
    %v2888 = vld [vmem:[#allocation6 + $0x140] sm:$0xff]
    %v2889 = vld [vmem:[#allocation6 + $0x148] sm:$0xff]
    %v2890 = vld [vmem:[#allocation6 + $0x150] sm:$0xff]
    %v2891 = vld [vmem:[#allocation6 + $0x158] sm:$0xff]
    %v2892 = vld [vmem:[#allocation6 + $0x160] sm:$0xff]
    %v2893 = vld [vmem:[#allocation6 + $0x168] sm:$0xff]
    %v2894 = vld [vmem:[#allocation6 + $0x170] sm:$0xff]
    %v2895 = vld [vmem:[#allocation6 + $0x178] sm:$0xff]
    %v2896 = vld [vmem:[#allocation6 + $0x180] sm:$0xff]
    %v2897 = vld [vmem:[#allocation6 + $0x188] sm:$0xff]
    %v2898 = vld [vmem:[#allocation6 + $0x190] sm:$0xff]
    %v2899 = vld [vmem:[#allocation6 + $0x198] sm:$0xff]
    %v2900 = vld [vmem:[#allocation6 + $0x1a0] sm:$0xff]
    %v2901 = vld [vmem:[#allocation6 + $0x1a8] sm:$0xff]
    %v2902 = vld [vmem:[#allocation6 + $0x1b0] sm:$0xff]
    %v2903 = vld [vmem:[#allocation6 + $0x1b8] sm:$0xff]
    %v2904 = vld [vmem:[#allocation6 + $0x1c0] sm:$0xff]
    %v2905 = vld [vmem:[#allocation6 + $0x1c8] sm:$0xff]
    %v2906 = vld [vmem:[#allocation6 + $0x1d0] sm:$0xff]
    %v2907 = vld [vmem:[#allocation6 + $0x1d8] sm:$0xff]
    %v2908 = vld [vmem:[#allocation6 + $0x1e0] sm:$0xff]
    %v2909 = vld [vmem:[#allocation6 + $0x1e8] sm:$0xff]
    %v2910 = vld [vmem:[#allocation6 + $0x1f0] sm:$0xff]
    %v2911 = vld [vmem:[#allocation6 + $0x1f8] sm:$0xff]
    %v2912 = vld [vmem:[#allocation6 + $0x200] sm:$0xff]
    %v2913 = vld [vmem:[#allocation6 + $0x208] sm:$0xff]
    %v2914 = vld [vmem:[#allocation6 + $0x210] sm:$0xff]
    %v2915 = vld [vmem:[#allocation6 + $0x218] sm:$0xff]
    %v2916 = vld [vmem:[#allocation6 + $0x220] sm:$0xff]
    %v2917 = vld [vmem:[#allocation6 + $0x228] sm:$0xff]
    %v2918 = vld [vmem:[#allocation6 + $0x230] sm:$0xff]
    %v2919 = vld [vmem:[#allocation6 + $0x238] sm:$0xff]
    %v2920 = vld [vmem:[#allocation6 + $0x240] sm:$0xff]
    %v2921 = vld [vmem:[#allocation6 + $0x248] sm:$0xff]
    %v2922 = vld [vmem:[#allocation6 + $0x250] sm:$0xff]
    %v2923 = vld [vmem:[#allocation6 + $0x258] sm:$0xff]
    %v2924 = vld [vmem:[#allocation6 + $0x260] sm:$0xff]
    %v2925 = vld [vmem:[#allocation6 + $0x268] sm:$0xff]
    %v2926 = vld [vmem:[#allocation6 + $0x270] sm:$0xff]
    %v2927 = vld [vmem:[#allocation6 + $0x278] sm:$0xff]
    %v2928 = vld [vmem:[#allocation6 + $0x280] sm:$0xff]
    %v2929 = vld [vmem:[#allocation6 + $0x288] sm:$0xff]
    %v2930 = vld [vmem:[#allocation6 + $0x290] sm:$0xff]
    %v2931 = vld [vmem:[#allocation6 + $0x298] sm:$0xff]
    %v2932 = vld [vmem:[#allocation6 + $0x2a0] sm:$0xff]
    %v2933 = vld [vmem:[#allocation6 + $0x2a8] sm:$0xff]
    %v2934 = vld [vmem:[#allocation6 + $0x2b0] sm:$0xff]
    %v2935 = vld [vmem:[#allocation6 + $0x2b8] sm:$0xff]
    %v2936 = vld [vmem:[#allocation6 + $0x2c0] sm:$0xff]
    %v2937 = vld [vmem:[#allocation6 + $0x2c8] sm:$0xff]
    %v2938 = vld [vmem:[#allocation6 + $0x2d0] sm:$0xff]
    %v2939 = vld [vmem:[#allocation6 + $0x2d8] sm:$0xff]
    %v2940 = vld [vmem:[#allocation6 + $0x2e0] sm:$0xff]
    %v2941 = vld [vmem:[#allocation6 + $0x2e8] sm:$0xff]
    %v2942 = vld [vmem:[#allocation6 + $0x2f0] sm:$0xff]
    %v2943 = vld [vmem:[#allocation6 + $0x2f8] sm:$0xff]
    %v2944 = vld [vmem:[#allocation6 + $0x300] sm:$0xff]
    %v2945 = vld [vmem:[#allocation6 + $0x308] sm:$0xff]
    %v2946 = vld [vmem:[#allocation6 + $0x310] sm:$0xff]
    %v2947 = vld [vmem:[#allocation6 + $0x318] sm:$0xff]
    %v2948 = vld [vmem:[#allocation6 + $0x320] sm:$0xff]
    %v2949 = vld [vmem:[#allocation6 + $0x328] sm:$0xff]
    %v2950 = vld [vmem:[#allocation6 + $0x330] sm:$0xff]
    %v2951 = vld [vmem:[#allocation6 + $0x338] sm:$0xff]
    %v2952 = vld [vmem:[#allocation6 + $0x340] sm:$0xff]
    %v2953 = vld [vmem:[#allocation6 + $0x348] sm:$0xff]
    %v2954 = vld [vmem:[#allocation6 + $0x350] sm:$0xff]
    %v2955 = vld [vmem:[#allocation6 + $0x358] sm:$0xff]
    %v2956 = vld [vmem:[#allocation6 + $0x360] sm:$0xff]
    %v2957 = vld [vmem:[#allocation6 + $0x368] sm:$0xff]
    %v2958 = vld [vmem:[#allocation6 + $0x370] sm:$0xff]
    %v2959 = vld [vmem:[#allocation6 + $0x378] sm:$0xff]
    %v2960 = vld [vmem:[#allocation6 + $0x380] sm:$0xff]
    %v2961 = vld [vmem:[#allocation6 + $0x388] sm:$0xff]
    %v2962 = vld [vmem:[#allocation6 + $0x390] sm:$0xff]
    %v2963 = vld [vmem:[#allocation6 + $0x398] sm:$0xff]
    %v2964 = vld [vmem:[#allocation6 + $0x3a0] sm:$0xff]
    %v2965 = vld [vmem:[#allocation6 + $0x3a8] sm:$0xff]
    %v2966 = vld [vmem:[#allocation6 + $0x3b0] sm:$0xff]
    %v2967 = vld [vmem:[#allocation6 + $0x3b8] sm:$0xff]
    %v2968 = vld [vmem:[#allocation6 + $0x3c0] sm:$0xff]
    %v2969 = vld [vmem:[#allocation6 + $0x3c8] sm:$0xff]
    %v2970 = vld [vmem:[#allocation6 + $0x3d0] sm:$0xff]
    %v2971 = vld [vmem:[#allocation6 + $0x3d8] sm:$0xff]
    %v2972 = vld [vmem:[#allocation6 + $0x3e0] sm:$0xff]
    %v2973 = vld [vmem:[#allocation6 + $0x3e8] sm:$0xff]
    %v2974 = vld [vmem:[#allocation6 + $0x3f0] sm:$0xff]
    %v2975 = vld [vmem:[#allocation6 + $0x3f8] sm:$0xff]
    %v2976 = vld [vmem:[#allocation6 + $0x400] sm:$0xff]
    %v2977 = vld [vmem:[#allocation6 + $0x408] sm:$0xff]
    %v2978 = vld [vmem:[#allocation6 + $0x410] sm:$0xff]
    %v2979 = vld [vmem:[#allocation6 + $0x418] sm:$0xff]
    %v2980 = vld [vmem:[#allocation6 + $0x420] sm:$0xff]
    %v2981 = vld [vmem:[#allocation6 + $0x428] sm:$0xff]
    %v2982 = vld [vmem:[#allocation6 + $0x430] sm:$0xff]
    %v2983 = vld [vmem:[#allocation6 + $0x438] sm:$0xff]
    %v2984 = vld [vmem:[#allocation6 + $0x440] sm:$0xff]
    %v2985 = vld [vmem:[#allocation6 + $0x448] sm:$0xff]
    %v2986 = vld [vmem:[#allocation6 + $0x450] sm:$0xff]
    %v2987 = vld [vmem:[#allocation6 + $0x458] sm:$0xff]
    %v2988 = vld [vmem:[#allocation6 + $0x460] sm:$0xff]
    %v2989 = vld [vmem:[#allocation6 + $0x468] sm:$0xff]
    %v2990 = vld [vmem:[#allocation6 + $0x470] sm:$0xff]
    %v2991 = vld [vmem:[#allocation6 + $0x478] sm:$0xff]
    %v2992 = vld [vmem:[#allocation6 + $0x480] sm:$0xff]
    %v2993 = vld [vmem:[#allocation6 + $0x488] sm:$0xff]
    %v2994 = vld [vmem:[#allocation6 + $0x490] sm:$0xff]
    %v2995 = vld [vmem:[#allocation6 + $0x498] sm:$0xff]
    %v2996 = vld [vmem:[#allocation6 + $0x4a0] sm:$0xff]
    %v2997 = vld [vmem:[#allocation6 + $0x4a8] sm:$0xff]
    %v2998 = vld [vmem:[#allocation6 + $0x4b0] sm:$0xff]
    %v2999 = vld [vmem:[#allocation6 + $0x4b8] sm:$0xff]
    %v3000 = vld [vmem:[#allocation6 + $0x4c0] sm:$0xff]
    %v3001 = vld [vmem:[#allocation6 + $0x4c8] sm:$0xff]
    %v3002 = vld [vmem:[#allocation6 + $0x4d0] sm:$0xff]
    %v3003 = vld [vmem:[#allocation6 + $0x4d8] sm:$0xff]
    %v3004 = vld [vmem:[#allocation6 + $0x4e0] sm:$0xff]
    %v3005 = vld [vmem:[#allocation6 + $0x4e8] sm:$0xff]
    %v3006 = vld [vmem:[#allocation6 + $0x4f0] sm:$0xff]
    %v3007 = vld [vmem:[#allocation6 + $0x4f8] sm:$0xff]
    %v3008 = vld [vmem:[#allocation6 + $0x500] sm:$0xff]
    %v3009 = vld [vmem:[#allocation6 + $0x508] sm:$0xff]
    %v3010 = vld [vmem:[#allocation6 + $0x510] sm:$0xff]
    %v3011 = vld [vmem:[#allocation6 + $0x518] sm:$0xff]
    %v3012 = vld [vmem:[#allocation6 + $0x520] sm:$0xff]
    %v3013 = vld [vmem:[#allocation6 + $0x528] sm:$0xff]
    %v3014 = vld [vmem:[#allocation6 + $0x530] sm:$0xff]
    %v3015 = vld [vmem:[#allocation6 + $0x538] sm:$0xff]
    %v3016 = vld [vmem:[#allocation6 + $0x540] sm:$0xff]
    %v3017 = vld [vmem:[#allocation6 + $0x548] sm:$0xff]
    %v3018 = vld [vmem:[#allocation6 + $0x550] sm:$0xff]
    %v3019 = vld [vmem:[#allocation6 + $0x558] sm:$0xff]
    %v3020 = vld [vmem:[#allocation6 + $0x560] sm:$0xff]
    %v3021 = vld [vmem:[#allocation6 + $0x568] sm:$0xff]
    %v3022 = vld [vmem:[#allocation6 + $0x570] sm:$0xff]
    %v3023 = vld [vmem:[#allocation6 + $0x578] sm:$0xff]
    %v3024 = vld [vmem:[#allocation6 + $0x580] sm:$0xff]
    %v3025 = vld [vmem:[#allocation6 + $0x588] sm:$0xff]
    %v3026 = vld [vmem:[#allocation6 + $0x590] sm:$0xff]
    %v3027 = vld [vmem:[#allocation6 + $0x598] sm:$0xff]
    %v3028 = vld [vmem:[#allocation6 + $0x5a0] sm:$0xff]
    %v3029 = vld [vmem:[#allocation6 + $0x5a8] sm:$0xff]
    %v3030 = vld [vmem:[#allocation6 + $0x5b0] sm:$0xff]
    %v3031 = vld [vmem:[#allocation6 + $0x5b8] sm:$0xff]
    %v3032 = vld [vmem:[#allocation6 + $0x5c0] sm:$0xff]
    %v3033 = vld [vmem:[#allocation6 + $0x5c8] sm:$0xff]
    %v3034 = vld [vmem:[#allocation6 + $0x5d0] sm:$0xff]
    %v3035 = vld [vmem:[#allocation6 + $0x5d8] sm:$0xff]
    %v3036 = vld [vmem:[#allocation6 + $0x5e0] sm:$0xff]
    %v3037 = vld [vmem:[#allocation6 + $0x5e8] sm:$0xff]
    %v3038 = vld [vmem:[#allocation6 + $0x5f0] sm:$0xff]
    %v3039 = vld [vmem:[#allocation6 + $0x5f8] sm:$0xff]
    %v3040 = vld [vmem:[#allocation6 + $0x600] sm:$0xff]
    %v3041 = vld [vmem:[#allocation6 + $0x608] sm:$0xff]
    %v3042 = vld [vmem:[#allocation6 + $0x610] sm:$0xff]
    %v3043 = vld [vmem:[#allocation6 + $0x618] sm:$0xff]
    %v3044 = vld [vmem:[#allocation6 + $0x620] sm:$0xff]
    %v3045 = vld [vmem:[#allocation6 + $0x628] sm:$0xff]
    %v3046 = vld [vmem:[#allocation6 + $0x630] sm:$0xff]
    %v3047 = vld [vmem:[#allocation6 + $0x638] sm:$0xff]
    %v3048 = vld [vmem:[#allocation6 + $0x640] sm:$0xff]
    %v3049 = vld [vmem:[#allocation6 + $0x648] sm:$0xff]
    %v3050 = vld [vmem:[#allocation6 + $0x650] sm:$0xff]
    %v3051 = vld [vmem:[#allocation6 + $0x658] sm:$0xff]
    %v3052 = vld [vmem:[#allocation6 + $0x660] sm:$0xff]
    %v3053 = vld [vmem:[#allocation6 + $0x668] sm:$0xff]
    %v3054 = vld [vmem:[#allocation6 + $0x670] sm:$0xff]
    %v3055 = vld [vmem:[#allocation6 + $0x678] sm:$0xff]
    %v3056 = vld [vmem:[#allocation6 + $0x680] sm:$0xff]
    %v3057 = vld [vmem:[#allocation6 + $0x688] sm:$0xff]
    %v3058 = vld [vmem:[#allocation6 + $0x690] sm:$0xff]
    %v3059 = vld [vmem:[#allocation6 + $0x698] sm:$0xff]
    %v3060 = vld [vmem:[#allocation6 + $0x6a0] sm:$0xff]
    %v3061 = vld [vmem:[#allocation6 + $0x6a8] sm:$0xff]
    %v3062 = vld [vmem:[#allocation6 + $0x6b0] sm:$0xff]
    %v3063 = vld [vmem:[#allocation6 + $0x6b8] sm:$0xff]
    %v3064 = vld [vmem:[#allocation6 + $0x6c0] sm:$0xff]
    %v3065 = vld [vmem:[#allocation6 + $0x6c8] sm:$0xff]
    %v3066 = vld [vmem:[#allocation6 + $0x6d0] sm:$0xff]
    %v3067 = vld [vmem:[#allocation6 + $0x6d8] sm:$0xff]
    %v3068 = vld [vmem:[#allocation6 + $0x6e0] sm:$0xff]
    %v3069 = vld [vmem:[#allocation6 + $0x6e8] sm:$0xff]
    %v3070 = vld [vmem:[#allocation6 + $0x6f0] sm:$0xff]
    %v3071 = vld [vmem:[#allocation6 + $0x6f8] sm:$0xff]
    %v3072 = vld [vmem:[#allocation6 + $0x700] sm:$0xff]
    %v3073 = vld [vmem:[#allocation6 + $0x708] sm:$0xff]
    %v3074 = vld [vmem:[#allocation6 + $0x710] sm:$0xff]
    %v3075 = vld [vmem:[#allocation6 + $0x718] sm:$0xff]
    %v3076 = vld [vmem:[#allocation6 + $0x720] sm:$0xff]
    %v3077 = vld [vmem:[#allocation6 + $0x728] sm:$0xff]
    %v3078 = vld [vmem:[#allocation6 + $0x730] sm:$0xff]
    %v3079 = vld [vmem:[#allocation6 + $0x738] sm:$0xff]
    %v3080 = vld [vmem:[#allocation6 + $0x740] sm:$0xff]
    %v3081 = vld [vmem:[#allocation6 + $0x748] sm:$0xff]
    %v3082 = vld [vmem:[#allocation6 + $0x750] sm:$0xff]
    %v3083 = vld [vmem:[#allocation6 + $0x758] sm:$0xff]
    %v3084 = vld [vmem:[#allocation6 + $0x760] sm:$0xff]
    %v3085 = vld [vmem:[#allocation6 + $0x768] sm:$0xff]
    %v3086 = vld [vmem:[#allocation6 + $0x770] sm:$0xff]
    %v3087 = vld [vmem:[#allocation6 + $0x778] sm:$0xff]
    %v3088 = vld [vmem:[#allocation6 + $0x780] sm:$0xff]
    %v3089 = vld [vmem:[#allocation6 + $0x788] sm:$0xff]
    %v3090 = vld [vmem:[#allocation6 + $0x790] sm:$0xff]
    %v3091 = vld [vmem:[#allocation6 + $0x798] sm:$0xff]
    %v3092 = vld [vmem:[#allocation6 + $0x7a0] sm:$0xff]
    %v3093 = vld [vmem:[#allocation6 + $0x7a8] sm:$0xff]
    %v3094 = vld [vmem:[#allocation6 + $0x7b0] sm:$0xff]
    %v3095 = vld [vmem:[#allocation6 + $0x7b8] sm:$0xff]
    %v3096 = vld [vmem:[#allocation6 + $0x7c0] sm:$0xff]
    %v3097 = vld [vmem:[#allocation6 + $0x7c8] sm:$0xff]
    %v3098 = vld [vmem:[#allocation6 + $0x7d0] sm:$0xff]
    %v3099 = vld [vmem:[#allocation6 + $0x7d8] sm:$0xff]
    %v3100 = vld [vmem:[#allocation6 + $0x7e0] sm:$0xff]
    %v3101 = vld [vmem:[#allocation6 + $0x7e8] sm:$0xff]
    %v3102 = vld [vmem:[#allocation6 + $0x7f0] sm:$0xff]
    %v3103 = vld [vmem:[#allocation6 + $0x7f8] sm:$0xff]
    %v3104 = vld [vmem:[%s8] sm:$0xff]
    %v3106 = vlaneseq
    %v3107 = vshrl.u32 %v3106, 7
    %v3108 = vsub.s32 0, %v3107
    %v3109 = vrot.slane %v3104, %v3108
    %v3110 = vlaneseq
    %v3111 = vshrl.u32 %v3110, 7
    %v3112 = vsub.s32 1, %v3111
    %v3113 = vrot.slane %v3104, %v3112
    %v3114 = vlaneseq
    %v3115 = vshrl.u32 %v3114, 7
    %v3116 = vsub.s32 2, %v3115
    %v3117 = vrot.slane %v3104, %v3116
    %v3118 = vlaneseq
    %v3119 = vshrl.u32 %v3118, 7
    %v3120 = vsub.s32 3, %v3119
    %v3121 = vrot.slane %v3104, %v3120
    %v3122 = vlaneseq
    %v3123 = vshrl.u32 %v3122, 7
    %v3124 = vsub.s32 4, %v3123
    %v3125 = vrot.slane %v3104, %v3124
    %v3126 = vlaneseq
    %v3127 = vshrl.u32 %v3126, 7
    %v3128 = vsub.s32 5, %v3127
    %v3129 = vrot.slane %v3104, %v3128
    %v3130 = vlaneseq
    %v3131 = vshrl.u32 %v3130, 7
    %v3132 = vsub.s32 6, %v3131
    %v3133 = vrot.slane %v3104, %v3132
    %v3134 = vlaneseq
    %v3135 = vshrl.u32 %v3134, 7
    %v3136 = vsub.s32 7, %v3135
    %v3137 = vrot.slane %v3104, %v3136
    %v3402 = vunpack.c.l.b16 %v2848
    %v3403 = vunpack.c.h.b16 %v2848
    %v3404 = vunpack.c.l.b16 %v2849
    %v3405 = vunpack.c.h.b16 %v2849
    %v3406 = vunpack.c.l.b16 %v2850
    %v3407 = vunpack.c.h.b16 %v2850
    %v3408 = vunpack.c.l.b16 %v2851
    %v3409 = vunpack.c.h.b16 %v2851
    %v3410 = vunpack.c.l.b16 %v2852
    %v3411 = vunpack.c.h.b16 %v2852
    %v3412 = vunpack.c.l.b16 %v2853
    %v3413 = vunpack.c.h.b16 %v2853
    %v3414 = vunpack.c.l.b16 %v2854
    %v3415 = vunpack.c.h.b16 %v2854
    %v3416 = vunpack.c.l.b16 %v2855
    %v3417 = vunpack.c.h.b16 %v2855
    %v3418 = vunpack.c.l.b16 %v2856
    %v3419 = vunpack.c.h.b16 %v2856
    %v3420 = vunpack.c.l.b16 %v2857
    %v3421 = vunpack.c.h.b16 %v2857
    %v3422 = vunpack.c.l.b16 %v2858
    %v3423 = vunpack.c.h.b16 %v2858
    %v3424 = vunpack.c.l.b16 %v2859
    %v3425 = vunpack.c.h.b16 %v2859
    %v3426 = vunpack.c.l.b16 %v2860
    %v3427 = vunpack.c.h.b16 %v2860
    %v3428 = vunpack.c.l.b16 %v2861
    %v3429 = vunpack.c.h.b16 %v2861
    %v3430 = vunpack.c.l.b16 %v2862
    %v3431 = vunpack.c.h.b16 %v2862
    %v3432 = vunpack.c.l.b16 %v2863
    %v3433 = vunpack.c.h.b16 %v2863
    %v3434 = vunpack.c.l.b16 %v2864
    %v3435 = vunpack.c.h.b16 %v2864
    %v3436 = vunpack.c.l.b16 %v2865
    %v3437 = vunpack.c.h.b16 %v2865
    %v3438 = vunpack.c.l.b16 %v2866
    %v3439 = vunpack.c.h.b16 %v2866
    %v3440 = vunpack.c.l.b16 %v2867
    %v3441 = vunpack.c.h.b16 %v2867
    %v3442 = vunpack.c.l.b16 %v2868
    %v3443 = vunpack.c.h.b16 %v2868
    %v3444 = vunpack.c.l.b16 %v2869
    %v3445 = vunpack.c.h.b16 %v2869
    %v3446 = vunpack.c.l.b16 %v2870
    %v3447 = vunpack.c.h.b16 %v2870
    %v3448 = vunpack.c.l.b16 %v2871
    %v3449 = vunpack.c.h.b16 %v2871
    %v3450 = vunpack.c.l.b16 %v2872
    %v3451 = vunpack.c.h.b16 %v2872
    %v3452 = vunpack.c.l.b16 %v2873
    %v3453 = vunpack.c.h.b16 %v2873
    %v3454 = vunpack.c.l.b16 %v2874
    %v3455 = vunpack.c.h.b16 %v2874
    %v3456 = vunpack.c.l.b16 %v2875
    %v3457 = vunpack.c.h.b16 %v2875
    %v3458 = vunpack.c.l.b16 %v2876
    %v3459 = vunpack.c.h.b16 %v2876
    %v3460 = vunpack.c.l.b16 %v2877
    %v3461 = vunpack.c.h.b16 %v2877
    %v3462 = vunpack.c.l.b16 %v2878
    %v3463 = vunpack.c.h.b16 %v2878
    %v3464 = vunpack.c.l.b16 %v2879
    %v3465 = vunpack.c.h.b16 %v2879
    %v3466 = vunpack.c.l.b16 %v2880
    %v3467 = vunpack.c.h.b16 %v2880
    %v3468 = vunpack.c.l.b16 %v2881
    %v3469 = vunpack.c.h.b16 %v2881
    %v3470 = vunpack.c.l.b16 %v2882
    %v3471 = vunpack.c.h.b16 %v2882
    %v3472 = vunpack.c.l.b16 %v2883
    %v3473 = vunpack.c.h.b16 %v2883
    %v3474 = vunpack.c.l.b16 %v2884
    %v3475 = vunpack.c.h.b16 %v2884
    %v3476 = vunpack.c.l.b16 %v2885
    %v3477 = vunpack.c.h.b16 %v2885
    %v3478 = vunpack.c.l.b16 %v2886
    %v3479 = vunpack.c.h.b16 %v2886
    %v3480 = vunpack.c.l.b16 %v2887
    %v3481 = vunpack.c.h.b16 %v2887
    %v3482 = vunpack.c.l.b16 %v2888
    %v3483 = vunpack.c.h.b16 %v2888
    %v3484 = vunpack.c.l.b16 %v2889
    %v3485 = vunpack.c.h.b16 %v2889
    %v3486 = vunpack.c.l.b16 %v2890
    %v3487 = vunpack.c.h.b16 %v2890
    %v3488 = vunpack.c.l.b16 %v2891
    %v3489 = vunpack.c.h.b16 %v2891
    %v3490 = vunpack.c.l.b16 %v2892
    %v3491 = vunpack.c.h.b16 %v2892
    %v3492 = vunpack.c.l.b16 %v2893
    %v3493 = vunpack.c.h.b16 %v2893
    %v3494 = vunpack.c.l.b16 %v2894
    %v3495 = vunpack.c.h.b16 %v2894
    %v3496 = vunpack.c.l.b16 %v2895
    %v3497 = vunpack.c.h.b16 %v2895
    %v3498 = vunpack.c.l.b16 %v2896
    %v3499 = vunpack.c.h.b16 %v2896
    %v3500 = vunpack.c.l.b16 %v2897
    %v3501 = vunpack.c.h.b16 %v2897
    %v3502 = vunpack.c.l.b16 %v2898
    %v3503 = vunpack.c.h.b16 %v2898
    %v3504 = vunpack.c.l.b16 %v2899
    %v3505 = vunpack.c.h.b16 %v2899
    %v3506 = vunpack.c.l.b16 %v2900
    %v3507 = vunpack.c.h.b16 %v2900
    %v3508 = vunpack.c.l.b16 %v2901
    %v3509 = vunpack.c.h.b16 %v2901
    %v3510 = vunpack.c.l.b16 %v2902
    %v3511 = vunpack.c.h.b16 %v2902
    %v3512 = vunpack.c.l.b16 %v2903
    %v3513 = vunpack.c.h.b16 %v2903
    %v3514 = vunpack.c.l.b16 %v2904
    %v3515 = vunpack.c.h.b16 %v2904
    %v3516 = vunpack.c.l.b16 %v2905
    %v3517 = vunpack.c.h.b16 %v2905
    %v3518 = vunpack.c.l.b16 %v2906
    %v3519 = vunpack.c.h.b16 %v2906
    %v3520 = vunpack.c.l.b16 %v2907
    %v3521 = vunpack.c.h.b16 %v2907
    %v3522 = vunpack.c.l.b16 %v2908
    %v3523 = vunpack.c.h.b16 %v2908
    %v3524 = vunpack.c.l.b16 %v2909
    %v3525 = vunpack.c.h.b16 %v2909
    %v3526 = vunpack.c.l.b16 %v2910
    %v3527 = vunpack.c.h.b16 %v2910
    %v3528 = vunpack.c.l.b16 %v2911
    %v3529 = vunpack.c.h.b16 %v2911
    %v3530 = vunpack.c.l.b16 %v2912
    %v3531 = vunpack.c.h.b16 %v2912
    %v3532 = vunpack.c.l.b16 %v2913
    %v3533 = vunpack.c.h.b16 %v2913
    %v3534 = vunpack.c.l.b16 %v2914
    %v3535 = vunpack.c.h.b16 %v2914
    %v3536 = vunpack.c.l.b16 %v2915
    %v3537 = vunpack.c.h.b16 %v2915
    %v3538 = vunpack.c.l.b16 %v2916
    %v3539 = vunpack.c.h.b16 %v2916
    %v3540 = vunpack.c.l.b16 %v2917
    %v3541 = vunpack.c.h.b16 %v2917
    %v3542 = vunpack.c.l.b16 %v2918
    %v3543 = vunpack.c.h.b16 %v2918
    %v3544 = vunpack.c.l.b16 %v2919
    %v3545 = vunpack.c.h.b16 %v2919
    %v3546 = vunpack.c.l.b16 %v2920
    %v3547 = vunpack.c.h.b16 %v2920
    %v3548 = vunpack.c.l.b16 %v2921
    %v3549 = vunpack.c.h.b16 %v2921
    %v3550 = vunpack.c.l.b16 %v2922
    %v3551 = vunpack.c.h.b16 %v2922
    %v3552 = vunpack.c.l.b16 %v2923
    %v3553 = vunpack.c.h.b16 %v2923
    %v3554 = vunpack.c.l.b16 %v2924
    %v3555 = vunpack.c.h.b16 %v2924
    %v3556 = vunpack.c.l.b16 %v2925
    %v3557 = vunpack.c.h.b16 %v2925
    %v3558 = vunpack.c.l.b16 %v2926
    %v3559 = vunpack.c.h.b16 %v2926
    %v3560 = vunpack.c.l.b16 %v2927
    %v3561 = vunpack.c.h.b16 %v2927
    %v3562 = vunpack.c.l.b16 %v2928
    %v3563 = vunpack.c.h.b16 %v2928
    %v3564 = vunpack.c.l.b16 %v2929
    %v3565 = vunpack.c.h.b16 %v2929
    %v3566 = vunpack.c.l.b16 %v2930
    %v3567 = vunpack.c.h.b16 %v2930
    %v3568 = vunpack.c.l.b16 %v2931
    %v3569 = vunpack.c.h.b16 %v2931
    %v3570 = vunpack.c.l.b16 %v2932
    %v3571 = vunpack.c.h.b16 %v2932
    %v3572 = vunpack.c.l.b16 %v2933
    %v3573 = vunpack.c.h.b16 %v2933
    %v3574 = vunpack.c.l.b16 %v2934
    %v3575 = vunpack.c.h.b16 %v2934
    %v3576 = vunpack.c.l.b16 %v2935
    %v3577 = vunpack.c.h.b16 %v2935
    %v3578 = vunpack.c.l.b16 %v2936
    %v3579 = vunpack.c.h.b16 %v2936
    %v3580 = vunpack.c.l.b16 %v2937
    %v3581 = vunpack.c.h.b16 %v2937
    %v3582 = vunpack.c.l.b16 %v2938
    %v3583 = vunpack.c.h.b16 %v2938
    %v3584 = vunpack.c.l.b16 %v2939
    %v3585 = vunpack.c.h.b16 %v2939
    %v3586 = vunpack.c.l.b16 %v2940
    %v3587 = vunpack.c.h.b16 %v2940
    %v3588 = vunpack.c.l.b16 %v2941
    %v3589 = vunpack.c.h.b16 %v2941
    %v3590 = vunpack.c.l.b16 %v2942
    %v3591 = vunpack.c.h.b16 %v2942
    %v3592 = vunpack.c.l.b16 %v2943
    %v3593 = vunpack.c.h.b16 %v2943
    %v3594 = vunpack.c.l.b16 %v2944
    %v3595 = vunpack.c.h.b16 %v2944
    %v3596 = vunpack.c.l.b16 %v2945
    %v3597 = vunpack.c.h.b16 %v2945
    %v3598 = vunpack.c.l.b16 %v2946
    %v3599 = vunpack.c.h.b16 %v2946
    %v3600 = vunpack.c.l.b16 %v2947
    %v3601 = vunpack.c.h.b16 %v2947
    %v3602 = vunpack.c.l.b16 %v2948
    %v3603 = vunpack.c.h.b16 %v2948
    %v3604 = vunpack.c.l.b16 %v2949
    %v3605 = vunpack.c.h.b16 %v2949
    %v3606 = vunpack.c.l.b16 %v2950
    %v3607 = vunpack.c.h.b16 %v2950
    %v3608 = vunpack.c.l.b16 %v2951
    %v3609 = vunpack.c.h.b16 %v2951
    %v3610 = vunpack.c.l.b16 %v2952
    %v3611 = vunpack.c.h.b16 %v2952
    %v3612 = vunpack.c.l.b16 %v2953
    %v3613 = vunpack.c.h.b16 %v2953
    %v3614 = vunpack.c.l.b16 %v2954
    %v3615 = vunpack.c.h.b16 %v2954
    %v3616 = vunpack.c.l.b16 %v2955
    %v3617 = vunpack.c.h.b16 %v2955
    %v3618 = vunpack.c.l.b16 %v2956
    %v3619 = vunpack.c.h.b16 %v2956
    %v3620 = vunpack.c.l.b16 %v2957
    %v3621 = vunpack.c.h.b16 %v2957
    %v3622 = vunpack.c.l.b16 %v2958
    %v3623 = vunpack.c.h.b16 %v2958
    %v3624 = vunpack.c.l.b16 %v2959
    %v3625 = vunpack.c.h.b16 %v2959
    %v3626 = vunpack.c.l.b16 %v2960
    %v3627 = vunpack.c.h.b16 %v2960
    %v3628 = vunpack.c.l.b16 %v2961
    %v3629 = vunpack.c.h.b16 %v2961
    %v3630 = vunpack.c.l.b16 %v2962
    %v3631 = vunpack.c.h.b16 %v2962
    %v3632 = vunpack.c.l.b16 %v2963
    %v3633 = vunpack.c.h.b16 %v2963
    %v3634 = vunpack.c.l.b16 %v2964
    %v3635 = vunpack.c.h.b16 %v2964
    %v3636 = vunpack.c.l.b16 %v2965
    %v3637 = vunpack.c.h.b16 %v2965
    %v3638 = vunpack.c.l.b16 %v2966
    %v3639 = vunpack.c.h.b16 %v2966
    %v3640 = vunpack.c.l.b16 %v2967
    %v3641 = vunpack.c.h.b16 %v2967
    %v3642 = vunpack.c.l.b16 %v2968
    %v3643 = vunpack.c.h.b16 %v2968
    %v3644 = vunpack.c.l.b16 %v2969
    %v3645 = vunpack.c.h.b16 %v2969
    %v3646 = vunpack.c.l.b16 %v2970
    %v3647 = vunpack.c.h.b16 %v2970
    %v3648 = vunpack.c.l.b16 %v2971
    %v3649 = vunpack.c.h.b16 %v2971
    %v3650 = vunpack.c.l.b16 %v2972
    %v3651 = vunpack.c.h.b16 %v2972
    %v3652 = vunpack.c.l.b16 %v2973
    %v3653 = vunpack.c.h.b16 %v2973
    %v3654 = vunpack.c.l.b16 %v2974
    %v3655 = vunpack.c.h.b16 %v2974
    %v3656 = vunpack.c.l.b16 %v2975
    %v3657 = vunpack.c.h.b16 %v2975
    %v3658 = vunpack.c.l.b16 %v2976
    %v3659 = vunpack.c.h.b16 %v2976
    %v3660 = vunpack.c.l.b16 %v2977
    %v3661 = vunpack.c.h.b16 %v2977
    %v3662 = vunpack.c.l.b16 %v2978
    %v3663 = vunpack.c.h.b16 %v2978
    %v3664 = vunpack.c.l.b16 %v2979
    %v3665 = vunpack.c.h.b16 %v2979
    %v3666 = vunpack.c.l.b16 %v2980
    %v3667 = vunpack.c.h.b16 %v2980
    %v3668 = vunpack.c.l.b16 %v2981
    %v3669 = vunpack.c.h.b16 %v2981
    %v3670 = vunpack.c.l.b16 %v2982
    %v3671 = vunpack.c.h.b16 %v2982
    %v3672 = vunpack.c.l.b16 %v2983
    %v3673 = vunpack.c.h.b16 %v2983
    %v3674 = vunpack.c.l.b16 %v2984
    %v3675 = vunpack.c.h.b16 %v2984
    %v3676 = vunpack.c.l.b16 %v2985
    %v3677 = vunpack.c.h.b16 %v2985
    %v3678 = vunpack.c.l.b16 %v2986
    %v3679 = vunpack.c.h.b16 %v2986
    %v3680 = vunpack.c.l.b16 %v2987
    %v3681 = vunpack.c.h.b16 %v2987
    %v3682 = vunpack.c.l.b16 %v2988
    %v3683 = vunpack.c.h.b16 %v2988
    %v3684 = vunpack.c.l.b16 %v2989
    %v3685 = vunpack.c.h.b16 %v2989
    %v3686 = vunpack.c.l.b16 %v2990
    %v3687 = vunpack.c.h.b16 %v2990
    %v3688 = vunpack.c.l.b16 %v2991
    %v3689 = vunpack.c.h.b16 %v2991
    %v3690 = vunpack.c.l.b16 %v2992
    %v3691 = vunpack.c.h.b16 %v2992
    %v3692 = vunpack.c.l.b16 %v2993
    %v3693 = vunpack.c.h.b16 %v2993
    %v3694 = vunpack.c.l.b16 %v2994
    %v3695 = vunpack.c.h.b16 %v2994
    %v3696 = vunpack.c.l.b16 %v2995
    %v3697 = vunpack.c.h.b16 %v2995
    %v3698 = vunpack.c.l.b16 %v2996
    %v3699 = vunpack.c.h.b16 %v2996
    %v3700 = vunpack.c.l.b16 %v2997
    %v3701 = vunpack.c.h.b16 %v2997
    %v3702 = vunpack.c.l.b16 %v2998
    %v3703 = vunpack.c.h.b16 %v2998
    %v3704 = vunpack.c.l.b16 %v2999
    %v3705 = vunpack.c.h.b16 %v2999
    %v3706 = vunpack.c.l.b16 %v3000
    %v3707 = vunpack.c.h.b16 %v3000
    %v3708 = vunpack.c.l.b16 %v3001
    %v3709 = vunpack.c.h.b16 %v3001
    %v3710 = vunpack.c.l.b16 %v3002
    %v3711 = vunpack.c.h.b16 %v3002
    %v3712 = vunpack.c.l.b16 %v3003
    %v3713 = vunpack.c.h.b16 %v3003
    %v3714 = vunpack.c.l.b16 %v3004
    %v3715 = vunpack.c.h.b16 %v3004
    %v3716 = vunpack.c.l.b16 %v3005
    %v3717 = vunpack.c.h.b16 %v3005
    %v3718 = vunpack.c.l.b16 %v3006
    %v3719 = vunpack.c.h.b16 %v3006
    %v3720 = vunpack.c.l.b16 %v3007
    %v3721 = vunpack.c.h.b16 %v3007
    %v3722 = vunpack.c.l.b16 %v3008
    %v3723 = vunpack.c.h.b16 %v3008
    %v3724 = vunpack.c.l.b16 %v3009
    %v3725 = vunpack.c.h.b16 %v3009
    %v3726 = vunpack.c.l.b16 %v3010
    %v3727 = vunpack.c.h.b16 %v3010
    %v3728 = vunpack.c.l.b16 %v3011
    %v3729 = vunpack.c.h.b16 %v3011
    %v3730 = vunpack.c.l.b16 %v3012
    %v3731 = vunpack.c.h.b16 %v3012
    %v3732 = vunpack.c.l.b16 %v3013
    %v3733 = vunpack.c.h.b16 %v3013
    %v3734 = vunpack.c.l.b16 %v3014
    %v3735 = vunpack.c.h.b16 %v3014
    %v3736 = vunpack.c.l.b16 %v3015
    %v3737 = vunpack.c.h.b16 %v3015
    %v3738 = vunpack.c.l.b16 %v3016
    %v3739 = vunpack.c.h.b16 %v3016
    %v3740 = vunpack.c.l.b16 %v3017
    %v3741 = vunpack.c.h.b16 %v3017
    %v3742 = vunpack.c.l.b16 %v3018
    %v3743 = vunpack.c.h.b16 %v3018
    %v3744 = vunpack.c.l.b16 %v3019
    %v3745 = vunpack.c.h.b16 %v3019
    %v3746 = vunpack.c.l.b16 %v3020
    %v3747 = vunpack.c.h.b16 %v3020
    %v3748 = vunpack.c.l.b16 %v3021
    %v3749 = vunpack.c.h.b16 %v3021
    %v3750 = vunpack.c.l.b16 %v3022
    %v3751 = vunpack.c.h.b16 %v3022
    %v3752 = vunpack.c.l.b16 %v3023
    %v3753 = vunpack.c.h.b16 %v3023
    %v3754 = vunpack.c.l.b16 %v3024
    %v3755 = vunpack.c.h.b16 %v3024
    %v3756 = vunpack.c.l.b16 %v3025
    %v3757 = vunpack.c.h.b16 %v3025
    %v3758 = vunpack.c.l.b16 %v3026
    %v3759 = vunpack.c.h.b16 %v3026
    %v3760 = vunpack.c.l.b16 %v3027
    %v3761 = vunpack.c.h.b16 %v3027
    %v3762 = vunpack.c.l.b16 %v3028
    %v3763 = vunpack.c.h.b16 %v3028
    %v3764 = vunpack.c.l.b16 %v3029
    %v3765 = vunpack.c.h.b16 %v3029
    %v3766 = vunpack.c.l.b16 %v3030
    %v3767 = vunpack.c.h.b16 %v3030
    %v3768 = vunpack.c.l.b16 %v3031
    %v3769 = vunpack.c.h.b16 %v3031
    %v3770 = vunpack.c.l.b16 %v3032
    %v3771 = vunpack.c.h.b16 %v3032
    %v3772 = vunpack.c.l.b16 %v3033
    %v3773 = vunpack.c.h.b16 %v3033
    %v3774 = vunpack.c.l.b16 %v3034
    %v3775 = vunpack.c.h.b16 %v3034
    %v3776 = vunpack.c.l.b16 %v3035
    %v3777 = vunpack.c.h.b16 %v3035
    %v3778 = vunpack.c.l.b16 %v3036
    %v3779 = vunpack.c.h.b16 %v3036
    %v3780 = vunpack.c.l.b16 %v3037
    %v3781 = vunpack.c.h.b16 %v3037
    %v3782 = vunpack.c.l.b16 %v3038
    %v3783 = vunpack.c.h.b16 %v3038
    %v3784 = vunpack.c.l.b16 %v3039
    %v3785 = vunpack.c.h.b16 %v3039
    %v3786 = vunpack.c.l.b16 %v3040
    %v3787 = vunpack.c.h.b16 %v3040
    %v3788 = vunpack.c.l.b16 %v3041
    %v3789 = vunpack.c.h.b16 %v3041
    %v3790 = vunpack.c.l.b16 %v3042
    %v3791 = vunpack.c.h.b16 %v3042
    %v3792 = vunpack.c.l.b16 %v3043
    %v3793 = vunpack.c.h.b16 %v3043
    %v3794 = vunpack.c.l.b16 %v3044
    %v3795 = vunpack.c.h.b16 %v3044
    %v3796 = vunpack.c.l.b16 %v3045
    %v3797 = vunpack.c.h.b16 %v3045
    %v3798 = vunpack.c.l.b16 %v3046
    %v3799 = vunpack.c.h.b16 %v3046
    %v3800 = vunpack.c.l.b16 %v3047
    %v3801 = vunpack.c.h.b16 %v3047
    %v3802 = vunpack.c.l.b16 %v3048
    %v3803 = vunpack.c.h.b16 %v3048
    %v3804 = vunpack.c.l.b16 %v3049
    %v3805 = vunpack.c.h.b16 %v3049
    %v3806 = vunpack.c.l.b16 %v3050
    %v3807 = vunpack.c.h.b16 %v3050
    %v3808 = vunpack.c.l.b16 %v3051
    %v3809 = vunpack.c.h.b16 %v3051
    %v3810 = vunpack.c.l.b16 %v3052
    %v3811 = vunpack.c.h.b16 %v3052
    %v3812 = vunpack.c.l.b16 %v3053
    %v3813 = vunpack.c.h.b16 %v3053
    %v3814 = vunpack.c.l.b16 %v3054
    %v3815 = vunpack.c.h.b16 %v3054
    %v3816 = vunpack.c.l.b16 %v3055
    %v3817 = vunpack.c.h.b16 %v3055
    %v3818 = vunpack.c.l.b16 %v3056
    %v3819 = vunpack.c.h.b16 %v3056
    %v3820 = vunpack.c.l.b16 %v3057
    %v3821 = vunpack.c.h.b16 %v3057
    %v3822 = vunpack.c.l.b16 %v3058
    %v3823 = vunpack.c.h.b16 %v3058
    %v3824 = vunpack.c.l.b16 %v3059
    %v3825 = vunpack.c.h.b16 %v3059
    %v3826 = vunpack.c.l.b16 %v3060
    %v3827 = vunpack.c.h.b16 %v3060
    %v3828 = vunpack.c.l.b16 %v3061
    %v3829 = vunpack.c.h.b16 %v3061
    %v3830 = vunpack.c.l.b16 %v3062
    %v3831 = vunpack.c.h.b16 %v3062
    %v3832 = vunpack.c.l.b16 %v3063
    %v3833 = vunpack.c.h.b16 %v3063
    %v3834 = vunpack.c.l.b16 %v3064
    %v3835 = vunpack.c.h.b16 %v3064
    %v3836 = vunpack.c.l.b16 %v3065
    %v3837 = vunpack.c.h.b16 %v3065
    %v3838 = vunpack.c.l.b16 %v3066
    %v3839 = vunpack.c.h.b16 %v3066
    %v3840 = vunpack.c.l.b16 %v3067
    %v3841 = vunpack.c.h.b16 %v3067
    %v3842 = vunpack.c.l.b16 %v3068
    %v3843 = vunpack.c.h.b16 %v3068
    %v3844 = vunpack.c.l.b16 %v3069
    %v3845 = vunpack.c.h.b16 %v3069
    %v3846 = vunpack.c.l.b16 %v3070
    %v3847 = vunpack.c.h.b16 %v3070
    %v3848 = vunpack.c.l.b16 %v3071
    %v3849 = vunpack.c.h.b16 %v3071
    %v3850 = vunpack.c.l.b16 %v3072
    %v3851 = vunpack.c.h.b16 %v3072
    %v3852 = vunpack.c.l.b16 %v3073
    %v3853 = vunpack.c.h.b16 %v3073
    %v3854 = vunpack.c.l.b16 %v3074
    %v3855 = vunpack.c.h.b16 %v3074
    %v3856 = vunpack.c.l.b16 %v3075
    %v3857 = vunpack.c.h.b16 %v3075
    %v3858 = vunpack.c.l.b16 %v3076
    %v3859 = vunpack.c.h.b16 %v3076
    %v3860 = vunpack.c.l.b16 %v3077
    %v3861 = vunpack.c.h.b16 %v3077
    %v3862 = vunpack.c.l.b16 %v3078
    %v3863 = vunpack.c.h.b16 %v3078
    %v3864 = vunpack.c.l.b16 %v3079
    %v3865 = vunpack.c.h.b16 %v3079
    %v3866 = vunpack.c.l.b16 %v3080
    %v3867 = vunpack.c.h.b16 %v3080
    %v3868 = vunpack.c.l.b16 %v3081
    %v3869 = vunpack.c.h.b16 %v3081
    %v3870 = vunpack.c.l.b16 %v3082
    %v3871 = vunpack.c.h.b16 %v3082
    %v3872 = vunpack.c.l.b16 %v3083
    %v3873 = vunpack.c.h.b16 %v3083
    %v3874 = vunpack.c.l.b16 %v3084
    %v3875 = vunpack.c.h.b16 %v3084
    %v3876 = vunpack.c.l.b16 %v3085
    %v3877 = vunpack.c.h.b16 %v3085
    %v3878 = vunpack.c.l.b16 %v3086
    %v3879 = vunpack.c.h.b16 %v3086
    %v3880 = vunpack.c.l.b16 %v3087
    %v3881 = vunpack.c.h.b16 %v3087
    %v3882 = vunpack.c.l.b16 %v3088
    %v3883 = vunpack.c.h.b16 %v3088
    %v3884 = vunpack.c.l.b16 %v3089
    %v3885 = vunpack.c.h.b16 %v3089
    %v3886 = vunpack.c.l.b16 %v3090
    %v3887 = vunpack.c.h.b16 %v3090
    %v3888 = vunpack.c.l.b16 %v3091
    %v3889 = vunpack.c.h.b16 %v3091
    %v3890 = vunpack.c.l.b16 %v3092
    %v3891 = vunpack.c.h.b16 %v3092
    %v3892 = vunpack.c.l.b16 %v3093
    %v3893 = vunpack.c.h.b16 %v3093
    %v3894 = vunpack.c.l.b16 %v3094
    %v3895 = vunpack.c.h.b16 %v3094
    %v3896 = vunpack.c.l.b16 %v3095
    %v3897 = vunpack.c.h.b16 %v3095
    %v3898 = vunpack.c.l.b16 %v3096
    %v3899 = vunpack.c.h.b16 %v3096
    %v3900 = vunpack.c.l.b16 %v3097
    %v3901 = vunpack.c.h.b16 %v3097
    %v3902 = vunpack.c.l.b16 %v3098
    %v3903 = vunpack.c.h.b16 %v3098
    %v3904 = vunpack.c.l.b16 %v3099
    %v3905 = vunpack.c.h.b16 %v3099
    %v3906 = vunpack.c.l.b16 %v3100
    %v3907 = vunpack.c.h.b16 %v3100
    %v3908 = vunpack.c.l.b16 %v3101
    %v3909 = vunpack.c.h.b16 %v3101
    %v3910 = vunpack.c.l.b16 %v3102
    %v3911 = vunpack.c.h.b16 %v3102
    %v3912 = vunpack.c.l.b16 %v3103
    %v3913 = vunpack.c.h.b16 %v3103
    %v3914 = vpack.c.b16 %v3410, %v3402
    %v3915 = vpack.c.b16 %v3411, %v3403
    %v3916 = vpack.c.b16 %v3412, %v3404
    %v3917 = vpack.c.b16 %v3413, %v3405
    %v3918 = vpack.c.b16 %v3414, %v3406
    %v3919 = vpack.c.b16 %v3415, %v3407
    %v3920 = vpack.c.b16 %v3416, %v3408
    %v3921 = vpack.c.b16 %v3417, %v3409
    %v3922 = vpack.c.b16 %v3426, %v3418
    %v3923 = vpack.c.b16 %v3427, %v3419
    %v3924 = vpack.c.b16 %v3428, %v3420
    %v3925 = vpack.c.b16 %v3429, %v3421
    %v3926 = vpack.c.b16 %v3430, %v3422
    %v3927 = vpack.c.b16 %v3431, %v3423
    %v3928 = vpack.c.b16 %v3432, %v3424
    %v3929 = vpack.c.b16 %v3433, %v3425
    %v3930 = vpack.c.b16 %v3442, %v3434
    %v3931 = vpack.c.b16 %v3443, %v3435
    %v3932 = vpack.c.b16 %v3444, %v3436
    %v3933 = vpack.c.b16 %v3445, %v3437
    %v3934 = vpack.c.b16 %v3446, %v3438
    %v3935 = vpack.c.b16 %v3447, %v3439
    %v3936 = vpack.c.b16 %v3448, %v3440
    %v3937 = vpack.c.b16 %v3449, %v3441
    %v3938 = vpack.c.b16 %v3458, %v3450
    %v3939 = vpack.c.b16 %v3459, %v3451
    %v3940 = vpack.c.b16 %v3460, %v3452
    %v3941 = vpack.c.b16 %v3461, %v3453
    %v3942 = vpack.c.b16 %v3462, %v3454
    %v3943 = vpack.c.b16 %v3463, %v3455
    %v3944 = vpack.c.b16 %v3464, %v3456
    %v3945 = vpack.c.b16 %v3465, %v3457
    %v3946 = vpack.c.b16 %v3474, %v3466
    %v3947 = vpack.c.b16 %v3475, %v3467
    %v3948 = vpack.c.b16 %v3476, %v3468
    %v3949 = vpack.c.b16 %v3477, %v3469
    %v3950 = vpack.c.b16 %v3478, %v3470
    %v3951 = vpack.c.b16 %v3479, %v3471
    %v3952 = vpack.c.b16 %v3480, %v3472
    %v3953 = vpack.c.b16 %v3481, %v3473
    %v3954 = vpack.c.b16 %v3490, %v3482
    %v3955 = vpack.c.b16 %v3491, %v3483
    %v3956 = vpack.c.b16 %v3492, %v3484
    %v3957 = vpack.c.b16 %v3493, %v3485
    %v3958 = vpack.c.b16 %v3494, %v3486
    %v3959 = vpack.c.b16 %v3495, %v3487
    %v3960 = vpack.c.b16 %v3496, %v3488
    %v3961 = vpack.c.b16 %v3497, %v3489
    %v3962 = vpack.c.b16 %v3506, %v3498
    %v3963 = vpack.c.b16 %v3507, %v3499
    %v3964 = vpack.c.b16 %v3508, %v3500
    %v3965 = vpack.c.b16 %v3509, %v3501
    %v3966 = vpack.c.b16 %v3510, %v3502
    %v3967 = vpack.c.b16 %v3511, %v3503
    %v3968 = vpack.c.b16 %v3512, %v3504
    %v3969 = vpack.c.b16 %v3513, %v3505
    %v3970 = vpack.c.b16 %v3522, %v3514
    %v3971 = vpack.c.b16 %v3523, %v3515
    %v3972 = vpack.c.b16 %v3524, %v3516
    %v3973 = vpack.c.b16 %v3525, %v3517
    %v3974 = vpack.c.b16 %v3526, %v3518
    %v3975 = vpack.c.b16 %v3527, %v3519
    %v3976 = vpack.c.b16 %v3528, %v3520
    %v3977 = vpack.c.b16 %v3529, %v3521
    %v3978 = vpack.c.b16 %v3538, %v3530
    %v3979 = vpack.c.b16 %v3539, %v3531
    %v3980 = vpack.c.b16 %v3540, %v3532
    %v3981 = vpack.c.b16 %v3541, %v3533
    %v3982 = vpack.c.b16 %v3542, %v3534
    %v3983 = vpack.c.b16 %v3543, %v3535
    %v3984 = vpack.c.b16 %v3544, %v3536
    %v3985 = vpack.c.b16 %v3545, %v3537
    %v3986 = vpack.c.b16 %v3554, %v3546
    %v3987 = vpack.c.b16 %v3555, %v3547
    %v3988 = vpack.c.b16 %v3556, %v3548
    %v3989 = vpack.c.b16 %v3557, %v3549
    %v3990 = vpack.c.b16 %v3558, %v3550
    %v3991 = vpack.c.b16 %v3559, %v3551
    %v3992 = vpack.c.b16 %v3560, %v3552
    %v3993 = vpack.c.b16 %v3561, %v3553
    %v3994 = vpack.c.b16 %v3570, %v3562
    %v3995 = vpack.c.b16 %v3571, %v3563
    %v3996 = vpack.c.b16 %v3572, %v3564
    %v3997 = vpack.c.b16 %v3573, %v3565
    %v3998 = vpack.c.b16 %v3574, %v3566
    %v3999 = vpack.c.b16 %v3575, %v3567
    %v4000 = vpack.c.b16 %v3576, %v3568
    %v4001 = vpack.c.b16 %v3577, %v3569
    %v4002 = vpack.c.b16 %v3586, %v3578
    %v4003 = vpack.c.b16 %v3587, %v3579
    %v4004 = vpack.c.b16 %v3588, %v3580
    %v4005 = vpack.c.b16 %v3589, %v3581
    %v4006 = vpack.c.b16 %v3590, %v3582
    %v4007 = vpack.c.b16 %v3591, %v3583
    %v4008 = vpack.c.b16 %v3592, %v3584
    %v4009 = vpack.c.b16 %v3593, %v3585
    %v4010 = vpack.c.b16 %v3602, %v3594
    %v4011 = vpack.c.b16 %v3603, %v3595
    %v4012 = vpack.c.b16 %v3604, %v3596
    %v4013 = vpack.c.b16 %v3605, %v3597
    %v4014 = vpack.c.b16 %v3606, %v3598
    %v4015 = vpack.c.b16 %v3607, %v3599
    %v4016 = vpack.c.b16 %v3608, %v3600
    %v4017 = vpack.c.b16 %v3609, %v3601
    %v4018 = vpack.c.b16 %v3618, %v3610
    %v4019 = vpack.c.b16 %v3619, %v3611
    %v4020 = vpack.c.b16 %v3620, %v3612
    %v4021 = vpack.c.b16 %v3621, %v3613
    %v4022 = vpack.c.b16 %v3622, %v3614
    %v4023 = vpack.c.b16 %v3623, %v3615
    %v4024 = vpack.c.b16 %v3624, %v3616
    %v4025 = vpack.c.b16 %v3625, %v3617
    %v4026 = vpack.c.b16 %v3634, %v3626
    %v4027 = vpack.c.b16 %v3635, %v3627
    %v4028 = vpack.c.b16 %v3636, %v3628
    %v4029 = vpack.c.b16 %v3637, %v3629
    %v4030 = vpack.c.b16 %v3638, %v3630
    %v4031 = vpack.c.b16 %v3639, %v3631
    %v4032 = vpack.c.b16 %v3640, %v3632
    %v4033 = vpack.c.b16 %v3641, %v3633
    %v4034 = vpack.c.b16 %v3650, %v3642
    %v4035 = vpack.c.b16 %v3651, %v3643
    %v4036 = vpack.c.b16 %v3652, %v3644
    %v4037 = vpack.c.b16 %v3653, %v3645
    %v4038 = vpack.c.b16 %v3654, %v3646
    %v4039 = vpack.c.b16 %v3655, %v3647
    %v4040 = vpack.c.b16 %v3656, %v3648
    %v4041 = vpack.c.b16 %v3657, %v3649
    %v4042 = vpack.c.b16 %v3666, %v3658
    %v4043 = vpack.c.b16 %v3667, %v3659
    %v4044 = vpack.c.b16 %v3668, %v3660
    %v4045 = vpack.c.b16 %v3669, %v3661
    %v4046 = vpack.c.b16 %v3670, %v3662
    %v4047 = vpack.c.b16 %v3671, %v3663
    %v4048 = vpack.c.b16 %v3672, %v3664
    %v4049 = vpack.c.b16 %v3673, %v3665
    %v4050 = vpack.c.b16 %v3682, %v3674
    %v4051 = vpack.c.b16 %v3683, %v3675
    %v4052 = vpack.c.b16 %v3684, %v3676
    %v4053 = vpack.c.b16 %v3685, %v3677
    %v4054 = vpack.c.b16 %v3686, %v3678
    %v4055 = vpack.c.b16 %v3687, %v3679
    %v4056 = vpack.c.b16 %v3688, %v3680
    %v4057 = vpack.c.b16 %v3689, %v3681
    %v4058 = vpack.c.b16 %v3698, %v3690
    %v4059 = vpack.c.b16 %v3699, %v3691
    %v4060 = vpack.c.b16 %v3700, %v3692
    %v4061 = vpack.c.b16 %v3701, %v3693
    %v4062 = vpack.c.b16 %v3702, %v3694
    %v4063 = vpack.c.b16 %v3703, %v3695
    %v4064 = vpack.c.b16 %v3704, %v3696
    %v4065 = vpack.c.b16 %v3705, %v3697
    %v4066 = vpack.c.b16 %v3714, %v3706
    %v4067 = vpack.c.b16 %v3715, %v3707
    %v4068 = vpack.c.b16 %v3716, %v3708
    %v4069 = vpack.c.b16 %v3717, %v3709
    %v4070 = vpack.c.b16 %v3718, %v3710
    %v4071 = vpack.c.b16 %v3719, %v3711
    %v4072 = vpack.c.b16 %v3720, %v3712
    %v4073 = vpack.c.b16 %v3721, %v3713
    %v4074 = vpack.c.b16 %v3730, %v3722
    %v4075 = vpack.c.b16 %v3731, %v3723
    %v4076 = vpack.c.b16 %v3732, %v3724
    %v4077 = vpack.c.b16 %v3733, %v3725
    %v4078 = vpack.c.b16 %v3734, %v3726
    %v4079 = vpack.c.b16 %v3735, %v3727
    %v4080 = vpack.c.b16 %v3736, %v3728
    %v4081 = vpack.c.b16 %v3737, %v3729
    %v4082 = vpack.c.b16 %v3746, %v3738
    %v4083 = vpack.c.b16 %v3747, %v3739
    %v4084 = vpack.c.b16 %v3748, %v3740
    %v4085 = vpack.c.b16 %v3749, %v3741
    %v4086 = vpack.c.b16 %v3750, %v3742
    %v4087 = vpack.c.b16 %v3751, %v3743
    %v4088 = vpack.c.b16 %v3752, %v3744
    %v4089 = vpack.c.b16 %v3753, %v3745
    %v4090 = vpack.c.b16 %v3762, %v3754
    %v4091 = vpack.c.b16 %v3763, %v3755
    %v4092 = vpack.c.b16 %v3764, %v3756
    %v4093 = vpack.c.b16 %v3765, %v3757
    %v4094 = vpack.c.b16 %v3766, %v3758
    %v4095 = vpack.c.b16 %v3767, %v3759
    %v4096 = vpack.c.b16 %v3768, %v3760
    %v4097 = vpack.c.b16 %v3769, %v3761
    %v4098 = vpack.c.b16 %v3778, %v3770
    %v4099 = vpack.c.b16 %v3779, %v3771
    %v4100 = vpack.c.b16 %v3780, %v3772
    %v4101 = vpack.c.b16 %v3781, %v3773
    %v4102 = vpack.c.b16 %v3782, %v3774
    %v4103 = vpack.c.b16 %v3783, %v3775
    %v4104 = vpack.c.b16 %v3784, %v3776
    %v4105 = vpack.c.b16 %v3785, %v3777
    %v4106 = vpack.c.b16 %v3794, %v3786
    %v4107 = vpack.c.b16 %v3795, %v3787
    %v4108 = vpack.c.b16 %v3796, %v3788
    %v4109 = vpack.c.b16 %v3797, %v3789
    %v4110 = vpack.c.b16 %v3798, %v3790
    %v4111 = vpack.c.b16 %v3799, %v3791
    %v4112 = vpack.c.b16 %v3800, %v3792
    %v4113 = vpack.c.b16 %v3801, %v3793
    %v4114 = vpack.c.b16 %v3810, %v3802
    %v4115 = vpack.c.b16 %v3811, %v3803
    %v4116 = vpack.c.b16 %v3812, %v3804
    %v4117 = vpack.c.b16 %v3813, %v3805
    %v4118 = vpack.c.b16 %v3814, %v3806
    %v4119 = vpack.c.b16 %v3815, %v3807
    %v4120 = vpack.c.b16 %v3816, %v3808
    %v4121 = vpack.c.b16 %v3817, %v3809
    %v4122 = vpack.c.b16 %v3826, %v3818
    %v4123 = vpack.c.b16 %v3827, %v3819
    %v4124 = vpack.c.b16 %v3828, %v3820
    %v4125 = vpack.c.b16 %v3829, %v3821
    %v4126 = vpack.c.b16 %v3830, %v3822
    %v4127 = vpack.c.b16 %v3831, %v3823
    %v4128 = vpack.c.b16 %v3832, %v3824
    %v4129 = vpack.c.b16 %v3833, %v3825
    %v4130 = vpack.c.b16 %v3842, %v3834
    %v4131 = vpack.c.b16 %v3843, %v3835
    %v4132 = vpack.c.b16 %v3844, %v3836
    %v4133 = vpack.c.b16 %v3845, %v3837
    %v4134 = vpack.c.b16 %v3846, %v3838
    %v4135 = vpack.c.b16 %v3847, %v3839
    %v4136 = vpack.c.b16 %v3848, %v3840
    %v4137 = vpack.c.b16 %v3849, %v3841
    %v4138 = vpack.c.b16 %v3858, %v3850
    %v4139 = vpack.c.b16 %v3859, %v3851
    %v4140 = vpack.c.b16 %v3860, %v3852
    %v4141 = vpack.c.b16 %v3861, %v3853
    %v4142 = vpack.c.b16 %v3862, %v3854
    %v4143 = vpack.c.b16 %v3863, %v3855
    %v4144 = vpack.c.b16 %v3864, %v3856
    %v4145 = vpack.c.b16 %v3865, %v3857
    %v4146 = vpack.c.b16 %v3874, %v3866
    %v4147 = vpack.c.b16 %v3875, %v3867
    %v4148 = vpack.c.b16 %v3876, %v3868
    %v4149 = vpack.c.b16 %v3877, %v3869
    %v4150 = vpack.c.b16 %v3878, %v3870
    %v4151 = vpack.c.b16 %v3879, %v3871
    %v4152 = vpack.c.b16 %v3880, %v3872
    %v4153 = vpack.c.b16 %v3881, %v3873
    %v4154 = vpack.c.b16 %v3890, %v3882
    %v4155 = vpack.c.b16 %v3891, %v3883
    %v4156 = vpack.c.b16 %v3892, %v3884
    %v4157 = vpack.c.b16 %v3893, %v3885
    %v4158 = vpack.c.b16 %v3894, %v3886
    %v4159 = vpack.c.b16 %v3895, %v3887
    %v4160 = vpack.c.b16 %v3896, %v3888
    %v4161 = vpack.c.b16 %v3897, %v3889
    %v4162 = vpack.c.b16 %v3906, %v3898
    %v4163 = vpack.c.b16 %v3907, %v3899
    %v4164 = vpack.c.b16 %v3908, %v3900
    %v4165 = vpack.c.b16 %v3909, %v3901
    %v4166 = vpack.c.b16 %v3910, %v3902
    %v4167 = vpack.c.b16 %v3911, %v3903
    %v4168 = vpack.c.b16 %v3912, %v3904
    %v4169 = vpack.c.b16 %v3913, %v3905
    %4426 = vmatprep.subr.bf16.mxu0 %v3915
    %4427 = vmatpush1.bf16.msra.mxu0 %v3914
    %4428 = vmatprep.subr.bf16.mxu0 %v3923
    %4429 = vmatpush1.bf16.msra.mxu0 %v3922
    %4430 = vmatprep.subr.bf16.mxu0 %v3931
    %4431 = vmatpush1.bf16.msra.mxu0 %v3930
    %4432 = vmatprep.subr.bf16.mxu0 %v3939
    %4433 = vmatpush1.bf16.msra.mxu0 %v3938
    %4434 = vmatprep.subr.bf16.mxu0 %v3947
    %4435 = vmatpush1.bf16.msra.mxu0 %v3946
    %4436 = vmatprep.subr.bf16.mxu0 %v3955
    %4437 = vmatpush1.bf16.msra.mxu0 %v3954
    %4438 = vmatprep.subr.bf16.mxu0 %v3963
    %4439 = vmatpush1.bf16.msra.mxu0 %v3962
    %4440 = vmatprep.subr.bf16.mxu0 %v3971
    %4441 = vmatpush1.bf16.msra.mxu0 %v3970
    %4442 = vmatprep.subr.bf16.mxu0 %v3979
    %4443 = vmatpush1.bf16.msra.mxu0 %v3978
    %4444 = vmatprep.subr.bf16.mxu0 %v3987
    %4445 = vmatpush1.bf16.msra.mxu0 %v3986
    %4446 = vmatprep.subr.bf16.mxu0 %v3995
    %4447 = vmatpush1.bf16.msra.mxu0 %v3994
    %4448 = vmatprep.subr.bf16.mxu0 %v4003
    %4449 = vmatpush1.bf16.msra.mxu0 %v4002
    %4450 = vmatprep.subr.bf16.mxu0 %v4011
    %4451 = vmatpush1.bf16.msra.mxu0 %v4010
    %4452 = vmatprep.subr.bf16.mxu0 %v4019
    %4453 = vmatpush1.bf16.msra.mxu0 %v4018
    %4454 = vmatprep.subr.bf16.mxu0 %v4027
    %4455 = vmatpush1.bf16.msra.mxu0 %v4026
    %4456 = vmatprep.subr.bf16.mxu0 %v4035
    %4457 = vmatpush1.bf16.msra.mxu0 %v4034
    %4458 = vmatprep.mubr.bf16.mxu0 %v2845
    %4459 = vmatmul.mubr.bf16.gmra.mrb[0].mxu0 %v2844
    %v4460 = vpop.f32.mrb[0].mxu0
    %v4461 = vadd.f32 %v3109, %v4460
    %v4462 = vpop.f32.mrb[0].mxu0
    %v4463 = vadd.f32 %v3113, %v4462
    %v4464 = vpop.f32.mrb[0].mxu0
    %v4465 = vadd.f32 %v3109, %v4464
    %v4466 = vpop.f32.mrb[0].mxu0
    %v4467 = vadd.f32 %v3113, %v4466
    %4468 = vdwg.mxu0
    %4469 = vmatprep.subr.bf16.mxu0 %v4043
    %4470 = vmatpush1.bf16.msra.mxu0 %v4042
    %4471 = vmatprep.subr.bf16.mxu0 %v4051
    %4472 = vmatpush1.bf16.msra.mxu0 %v4050
    %4473 = vmatprep.subr.bf16.mxu0 %v4059
    %4474 = vmatpush1.bf16.msra.mxu0 %v4058
    %4475 = vmatprep.subr.bf16.mxu0 %v4067
    %4476 = vmatpush1.bf16.msra.mxu0 %v4066
    %4477 = vmatprep.subr.bf16.mxu0 %v4075
    %4478 = vmatpush1.bf16.msra.mxu0 %v4074
    %4479 = vmatprep.subr.bf16.mxu0 %v4083
    %4480 = vmatpush1.bf16.msra.mxu0 %v4082
    %4481 = vmatprep.subr.bf16.mxu0 %v4091
    %4482 = vmatpush1.bf16.msra.mxu0 %v4090
    %4483 = vmatprep.subr.bf16.mxu0 %v4099
    %4484 = vmatpush1.bf16.msra.mxu0 %v4098
    %4485 = vmatprep.subr.bf16.mxu0 %v4107
    %4486 = vmatpush1.bf16.msra.mxu0 %v4106
    %4487 = vmatprep.subr.bf16.mxu0 %v4115
    %4488 = vmatpush1.bf16.msra.mxu0 %v4114
    %4489 = vmatprep.subr.bf16.mxu0 %v4123
    %4490 = vmatpush1.bf16.msra.mxu0 %v4122
    %4491 = vmatprep.subr.bf16.mxu0 %v4131
    %4492 = vmatpush1.bf16.msra.mxu0 %v4130
    %4493 = vmatprep.subr.bf16.mxu0 %v4139
    %4494 = vmatpush1.bf16.msra.mxu0 %v4138
    %4495 = vmatprep.subr.bf16.mxu0 %v4147
    %4496 = vmatpush1.bf16.msra.mxu0 %v4146
    %4497 = vmatprep.subr.bf16.mxu0 %v4155
    %4498 = vmatpush1.bf16.msra.mxu0 %v4154
    %4499 = vmatprep.subr.bf16.mxu0 %v4163
    %4500 = vmatpush1.bf16.msra.mxu0 %v4162
    %4501 = vmatprep.mubr.bf16.mxu0 %v2847
    %4502 = vmatmul.mubr.bf16.gmra.mrb[0].mxu0 %v2846
    %v4503 = vpop.f32.mrb[0].mxu0
    %v4504 = vadd.f32 %v4461, %v4503
    %v4505 = vpop.f32.mrb[0].mxu0
    %v4506 = vadd.f32 %v4463, %v4505
    %v4507 = vpop.f32.mrb[0].mxu0
    %v4508 = vadd.f32 %v4465, %v4507
    %v4509 = vpop.f32.mrb[0].mxu0
    %v4510 = vadd.f32 %v4467, %v4509
    %4511 = vdwg.mxu0
    %4512 = vmatprep.subr.bf16.mxu0 %v3917
    %4513 = vmatpush1.bf16.msra.mxu0 %v3916
    %4514 = vmatprep.subr.bf16.mxu0 %v3925
    %4515 = vmatpush1.bf16.msra.mxu0 %v3924
    %4516 = vmatprep.subr.bf16.mxu0 %v3933
    %4517 = vmatpush1.bf16.msra.mxu0 %v3932
    %4518 = vmatprep.subr.bf16.mxu0 %v3941
    %4519 = vmatpush1.bf16.msra.mxu0 %v3940
    %4520 = vmatprep.subr.bf16.mxu0 %v3949
    %4521 = vmatpush1.bf16.msra.mxu0 %v3948
    %4522 = vmatprep.subr.bf16.mxu0 %v3957
    %4523 = vmatpush1.bf16.msra.mxu0 %v3956
    %4524 = vmatprep.subr.bf16.mxu0 %v3965
    %4525 = vmatpush1.bf16.msra.mxu0 %v3964
    %4526 = vmatprep.subr.bf16.mxu0 %v3973
    %4527 = vmatpush1.bf16.msra.mxu0 %v3972
    %4528 = vmatprep.subr.bf16.mxu0 %v3981
    %4529 = vmatpush1.bf16.msra.mxu0 %v3980
    %4530 = vmatprep.subr.bf16.mxu0 %v3989
    %4531 = vmatpush1.bf16.msra.mxu0 %v3988
    %4532 = vmatprep.subr.bf16.mxu0 %v3997
    %4533 = vmatpush1.bf16.msra.mxu0 %v3996
    %4534 = vmatprep.subr.bf16.mxu0 %v4005
    %4535 = vmatpush1.bf16.msra.mxu0 %v4004
    %4536 = vmatprep.subr.bf16.mxu0 %v4013
    %4537 = vmatpush1.bf16.msra.mxu0 %v4012
    %4538 = vmatprep.subr.bf16.mxu0 %v4021
    %4539 = vmatpush1.bf16.msra.mxu0 %v4020
    %4540 = vmatprep.subr.bf16.mxu0 %v4029
    %4541 = vmatpush1.bf16.msra.mxu0 %v4028
    %4542 = vmatprep.subr.bf16.mxu0 %v4037
    %4543 = vmatpush1.bf16.msra.mxu0 %v4036
    %4544 = vmatprep.mubr.bf16.mxu0 %v2845
    %4545 = vmatmul.mubr.bf16.gmra.mrb[0].mxu0 %v2844
    %v4546 = vpop.f32.mrb[0].mxu0
    %v4547 = vadd.f32 %v3117, %v4546
    %v4548 = vpop.f32.mrb[0].mxu0
    %v4549 = vadd.f32 %v3121, %v4548
    %v4550 = vpop.f32.mrb[0].mxu0
    %v4551 = vadd.f32 %v3117, %v4550
    %v4552 = vpop.f32.mrb[0].mxu0
    %v4553 = vadd.f32 %v3121, %v4552
    %4554 = vdwg.mxu0
    %4555 = vmatprep.subr.bf16.mxu0 %v4045
    %4556 = vmatpush1.bf16.msra.mxu0 %v4044
    %4557 = vmatprep.subr.bf16.mxu0 %v4053
    %4558 = vmatpush1.bf16.msra.mxu0 %v4052
    %4559 = vmatprep.subr.bf16.mxu0 %v4061
    %4560 = vmatpush1.bf16.msra.mxu0 %v4060
    %4561 = vmatprep.subr.bf16.mxu0 %v4069
    %4562 = vmatpush1.bf16.msra.mxu0 %v4068
    %4563 = vmatprep.subr.bf16.mxu0 %v4077
    %4564 = vmatpush1.bf16.msra.mxu0 %v4076
    %4565 = vmatprep.subr.bf16.mxu0 %v4085
    %4566 = vmatpush1.bf16.msra.mxu0 %v4084
    %4567 = vmatprep.subr.bf16.mxu0 %v4093
    %4568 = vmatpush1.bf16.msra.mxu0 %v4092
    %4569 = vmatprep.subr.bf16.mxu0 %v4101
    %4570 = vmatpush1.bf16.msra.mxu0 %v4100
    %4571 = vmatprep.subr.bf16.mxu0 %v4109
    %4572 = vmatpush1.bf16.msra.mxu0 %v4108
    %4573 = vmatprep.subr.bf16.mxu0 %v4117
    %4574 = vmatpush1.bf16.msra.mxu0 %v4116
    %4575 = vmatprep.subr.bf16.mxu0 %v4125
    %4576 = vmatpush1.bf16.msra.mxu0 %v4124
    %4577 = vmatprep.subr.bf16.mxu0 %v4133
    %4578 = vmatpush1.bf16.msra.mxu0 %v4132
    %4579 = vmatprep.subr.bf16.mxu0 %v4141
    %4580 = vmatpush1.bf16.msra.mxu0 %v4140
    %4581 = vmatprep.subr.bf16.mxu0 %v4149
    %4582 = vmatpush1.bf16.msra.mxu0 %v4148
    %4583 = vmatprep.subr.bf16.mxu0 %v4157
    %4584 = vmatpush1.bf16.msra.mxu0 %v4156
    %4585 = vmatprep.subr.bf16.mxu0 %v4165
    %4586 = vmatpush1.bf16.msra.mxu0 %v4164
    %4587 = vmatprep.mubr.bf16.mxu0 %v2847
    %4588 = vmatmul.mubr.bf16.gmra.mrb[0].mxu0 %v2846
    %v4589 = vpop.f32.mrb[0].mxu0
    %v4590 = vadd.f32 %v4547, %v4589
    %v4591 = vpop.f32.mrb[0].mxu0
    %v4592 = vadd.f32 %v4549, %v4591
    %v4593 = vpop.f32.mrb[0].mxu0
    %v4594 = vadd.f32 %v4551, %v4593
    %v4595 = vpop.f32.mrb[0].mxu0
    %v4596 = vadd.f32 %v4553, %v4595
    %4597 = vdwg.mxu0
    %4598 = vmatprep.subr.bf16.mxu0 %v3919
    %4599 = vmatpush1.bf16.msra.mxu0 %v3918
    %4600 = vmatprep.subr.bf16.mxu0 %v3927
    %4601 = vmatpush1.bf16.msra.mxu0 %v3926
    %4602 = vmatprep.subr.bf16.mxu0 %v3935
    %4603 = vmatpush1.bf16.msra.mxu0 %v3934
    %4604 = vmatprep.subr.bf16.mxu0 %v3943
    %4605 = vmatpush1.bf16.msra.mxu0 %v3942
    %4606 = vmatprep.subr.bf16.mxu0 %v3951
    %4607 = vmatpush1.bf16.msra.mxu0 %v3950
    %4608 = vmatprep.subr.bf16.mxu0 %v3959
    %4609 = vmatpush1.bf16.msra.mxu0 %v3958
    %4610 = vmatprep.subr.bf16.mxu0 %v3967
    %4611 = vmatpush1.bf16.msra.mxu0 %v3966
    %4612 = vmatprep.subr.bf16.mxu0 %v3975
    %4613 = vmatpush1.bf16.msra.mxu0 %v3974
    %4614 = vmatprep.subr.bf16.mxu0 %v3983
    %4615 = vmatpush1.bf16.msra.mxu0 %v3982
    %4616 = vmatprep.subr.bf16.mxu0 %v3991
    %4617 = vmatpush1.bf16.msra.mxu0 %v3990
    %4618 = vmatprep.subr.bf16.mxu0 %v3999
    %4619 = vmatpush1.bf16.msra.mxu0 %v3998
    %4620 = vmatprep.subr.bf16.mxu0 %v4007
    %4621 = vmatpush1.bf16.msra.mxu0 %v4006
    %4622 = vmatprep.subr.bf16.mxu0 %v4015
    %4623 = vmatpush1.bf16.msra.mxu0 %v4014
    %4624 = vmatprep.subr.bf16.mxu0 %v4023
    %4625 = vmatpush1.bf16.msra.mxu0 %v4022
    %4626 = vmatprep.subr.bf16.mxu0 %v4031
    %4627 = vmatpush1.bf16.msra.mxu0 %v4030
    %4628 = vmatprep.subr.bf16.mxu0 %v4039
    %4629 = vmatpush1.bf16.msra.mxu0 %v4038
    %4630 = vmatprep.mubr.bf16.mxu0 %v2845
    %4631 = vmatmul.mubr.bf16.gmra.mrb[0].mxu0 %v2844
    %v4632 = vpop.f32.mrb[0].mxu0
    %v4633 = vadd.f32 %v3125, %v4632
    %v4634 = vpop.f32.mrb[0].mxu0
    %v4635 = vadd.f32 %v3129, %v4634
    %v4636 = vpop.f32.mrb[0].mxu0
    %v4637 = vadd.f32 %v3125, %v4636
    %v4638 = vpop.f32.mrb[0].mxu0
    %v4639 = vadd.f32 %v3129, %v4638
    %4640 = vdwg.mxu0
    %4641 = vmatprep.subr.bf16.mxu0 %v4047
    %4642 = vmatpush1.bf16.msra.mxu0 %v4046
    %4643 = vmatprep.subr.bf16.mxu0 %v4055
    %4644 = vmatpush1.bf16.msra.mxu0 %v4054
    %4645 = vmatprep.subr.bf16.mxu0 %v4063
    %4646 = vmatpush1.bf16.msra.mxu0 %v4062
    %4647 = vmatprep.subr.bf16.mxu0 %v4071
    %4648 = vmatpush1.bf16.msra.mxu0 %v4070
    %4649 = vmatprep.subr.bf16.mxu0 %v4079
    %4650 = vmatpush1.bf16.msra.mxu0 %v4078
    %4651 = vmatprep.subr.bf16.mxu0 %v4087
    %4652 = vmatpush1.bf16.msra.mxu0 %v4086
    %4653 = vmatprep.subr.bf16.mxu0 %v4095
    %4654 = vmatpush1.bf16.msra.mxu0 %v4094
    %4655 = vmatprep.subr.bf16.mxu0 %v4103
    %4656 = vmatpush1.bf16.msra.mxu0 %v4102
    %4657 = vmatprep.subr.bf16.mxu0 %v4111
    %4658 = vmatpush1.bf16.msra.mxu0 %v4110
    %4659 = vmatprep.subr.bf16.mxu0 %v4119
    %4660 = vmatpush1.bf16.msra.mxu0 %v4118
    %4661 = vmatprep.subr.bf16.mxu0 %v4127
    %4662 = vmatpush1.bf16.msra.mxu0 %v4126
    %4663 = vmatprep.subr.bf16.mxu0 %v4135
    %4664 = vmatpush1.bf16.msra.mxu0 %v4134
    %4665 = vmatprep.subr.bf16.mxu0 %v4143
    %4666 = vmatpush1.bf16.msra.mxu0 %v4142
    %4667 = vmatprep.subr.bf16.mxu0 %v4151
    %4668 = vmatpush1.bf16.msra.mxu0 %v4150
    %4669 = vmatprep.subr.bf16.mxu0 %v4159
    %4670 = vmatpush1.bf16.msra.mxu0 %v4158
    %4671 = vmatprep.subr.bf16.mxu0 %v4167
    %4672 = vmatpush1.bf16.msra.mxu0 %v4166
    %4673 = vmatprep.mubr.bf16.mxu0 %v2847
    %4674 = vmatmul.mubr.bf16.gmra.mrb[0].mxu0 %v2846
    %v4675 = vpop.f32.mrb[0].mxu0
    %v4676 = vadd.f32 %v4633, %v4675
    %v4677 = vpop.f32.mrb[0].mxu0
    %v4678 = vadd.f32 %v4635, %v4677
    %v4679 = vpop.f32.mrb[0].mxu0
    %v4680 = vadd.f32 %v4637, %v4679
    %v4681 = vpop.f32.mrb[0].mxu0
    %v4682 = vadd.f32 %v4639, %v4681
    %4683 = vdwg.mxu0
    %4684 = vmatprep.subr.bf16.mxu0 %v3921
    %4685 = vmatpush1.bf16.msra.mxu0 %v3920
    %4686 = vmatprep.subr.bf16.mxu0 %v3929
    %4687 = vmatpush1.bf16.msra.mxu0 %v3928
    %4688 = vmatprep.subr.bf16.mxu0 %v3937
    %4689 = vmatpush1.bf16.msra.mxu0 %v3936
    %4690 = vmatprep.subr.bf16.mxu0 %v3945
    %4691 = vmatpush1.bf16.msra.mxu0 %v3944
    %4692 = vmatprep.subr.bf16.mxu0 %v3953
    %4693 = vmatpush1.bf16.msra.mxu0 %v3952
    %4694 = vmatprep.subr.bf16.mxu0 %v3961
    %4695 = vmatpush1.bf16.msra.mxu0 %v3960
    %4696 = vmatprep.subr.bf16.mxu0 %v3969
    %4697 = vmatpush1.bf16.msra.mxu0 %v3968
    %4698 = vmatprep.subr.bf16.mxu0 %v3977
    %4699 = vmatpush1.bf16.msra.mxu0 %v3976
    %4700 = vmatprep.subr.bf16.mxu0 %v3985
    %4701 = vmatpush1.bf16.msra.mxu0 %v3984
    %4702 = vmatprep.subr.bf16.mxu0 %v3993
    %4703 = vmatpush1.bf16.msra.mxu0 %v3992
    %4704 = vmatprep.subr.bf16.mxu0 %v4001
    %4705 = vmatpush1.bf16.msra.mxu0 %v4000
    %4706 = vmatprep.subr.bf16.mxu0 %v4009
    %4707 = vmatpush1.bf16.msra.mxu0 %v4008
    %4708 = vmatprep.subr.bf16.mxu0 %v4017
    %4709 = vmatpush1.bf16.msra.mxu0 %v4016
    %4710 = vmatprep.subr.bf16.mxu0 %v4025
    %4711 = vmatpush1.bf16.msra.mxu0 %v4024
    %4712 = vmatprep.subr.bf16.mxu0 %v4033
    %4713 = vmatpush1.bf16.msra.mxu0 %v4032
    %4714 = vmatprep.subr.bf16.mxu0 %v4041
    %4715 = vmatpush1.bf16.msra.mxu0 %v4040
    %4716 = vmatprep.mubr.bf16.mxu0 %v2845
    %4717 = vmatmul.mubr.bf16.gmra.mrb[0].mxu0 %v2844
    %v4718 = vpop.f32.mrb[0].mxu0
    %v4719 = vadd.f32 %v3133, %v4718
    %v4720 = vpop.f32.mrb[0].mxu0
    %v4721 = vadd.f32 %v3137, %v4720
    %v4722 = vpop.f32.mrb[0].mxu0
    %v4723 = vadd.f32 %v3133, %v4722
    %v4724 = vpop.f32.mrb[0].mxu0
    %v4725 = vadd.f32 %v3137, %v4724
    %4726 = vdwg.mxu0
    %4727 = vmatprep.subr.bf16.mxu0 %v4049
    %4728 = vmatpush1.bf16.msra.mxu0 %v4048
    %4729 = vmatprep.subr.bf16.mxu0 %v4057
    %4730 = vmatpush1.bf16.msra.mxu0 %v4056
    %4731 = vmatprep.subr.bf16.mxu0 %v4065
    %4732 = vmatpush1.bf16.msra.mxu0 %v4064
    %4733 = vmatprep.subr.bf16.mxu0 %v4073
    %4734 = vmatpush1.bf16.msra.mxu0 %v4072
    %4735 = vmatprep.subr.bf16.mxu0 %v4081
    %4736 = vmatpush1.bf16.msra.mxu0 %v4080
    %4737 = vmatprep.subr.bf16.mxu0 %v4089
    %4738 = vmatpush1.bf16.msra.mxu0 %v4088
    %4739 = vmatprep.subr.bf16.mxu0 %v4097
    %4740 = vmatpush1.bf16.msra.mxu0 %v4096
    %4741 = vmatprep.subr.bf16.mxu0 %v4105
    %4742 = vmatpush1.bf16.msra.mxu0 %v4104
    %4743 = vmatprep.subr.bf16.mxu0 %v4113
    %4744 = vmatpush1.bf16.msra.mxu0 %v4112
    %4745 = vmatprep.subr.bf16.mxu0 %v4121
    %4746 = vmatpush1.bf16.msra.mxu0 %v4120
    %4747 = vmatprep.subr.bf16.mxu0 %v4129
    %4748 = vmatpush1.bf16.msra.mxu0 %v4128
    %4749 = vmatprep.subr.bf16.mxu0 %v4137
    %4750 = vmatpush1.bf16.msra.mxu0 %v4136
    %4751 = vmatprep.subr.bf16.mxu0 %v4145
    %4752 = vmatpush1.bf16.msra.mxu0 %v4144
    %4753 = vmatprep.subr.bf16.mxu0 %v4153
    %4754 = vmatpush1.bf16.msra.mxu0 %v4152
    %4755 = vmatprep.subr.bf16.mxu0 %v4161
    %4756 = vmatpush1.bf16.msra.mxu0 %v4160
    %4757 = vmatprep.subr.bf16.mxu0 %v4169
    %4758 = vmatpush1.bf16.msra.mxu0 %v4168
    %4759 = vmatprep.mubr.bf16.mxu0 %v2847
    %4760 = vmatmul.mubr.bf16.gmra.mrb[0].mxu0 %v2846
    %v4761 = vpop.f32.mrb[0].mxu0
    %v4762 = vadd.f32 %v4719, %v4761
    %v4763 = vpop.f32.mrb[0].mxu0
    %v4764 = vadd.f32 %v4721, %v4763
    %v4765 = vpop.f32.mrb[0].mxu0
    %v4766 = vadd.f32 %v4723, %v4765
    %v4767 = vpop.f32.mrb[0].mxu0
    %v4768 = vadd.f32 %v4725, %v4767
    %4769 = vdwg.mxu0
    %v4770 = vmax.f32 %v4504, 0.0
    %v4771 = vmax.f32 %v4506, 0.0
    %v4772 = vmax.f32 %v4590, 0.0
    %v4773 = vmax.f32 %v4592, 0.0
    %v4774 = vmax.f32 %v4676, 0.0
    %v4775 = vmax.f32 %v4678, 0.0
    %v4776 = vmax.f32 %v4762, 0.0
    %v4777 = vmax.f32 %v4764, 0.0
    %v4778 = vmax.f32 %v4508, 0.0
    %v4779 = vmax.f32 %v4510, 0.0
    %v4780 = vmax.f32 %v4594, 0.0
    %v4781 = vmax.f32 %v4596, 0.0
    %v4782 = vmax.f32 %v4680, 0.0
    %v4783 = vmax.f32 %v4682, 0.0
    %v4784 = vmax.f32 %v4766, 0.0
    %v4785 = vmax.f32 %v4768, 0.0
    %v4786 = vpack.c.bf16 %v4778, %v4770
    %v4787 = vpack.c.bf16 %v4779, %v4771
    %v4788 = vpack.c.bf16 %v4780, %v4772
    %v4789 = vpack.c.bf16 %v4781, %v4773
    %v4790 = vadd.f32 %v4774, %v2836
    %v4791 = vadd.f32 %v4775, %v2837
    %v4792 = vadd.f32 %v4776, %v2838
    %v4793 = vadd.f32 %v4777, %v2839
    %v4794 = vadd.f32 %v4782, %v2840
    %v4795 = vadd.f32 %v4783, %v2841
    %v4796 = vadd.f32 %v4784, %v2842
    %v4797 = vadd.f32 %v4785, %v2843
    %v4798 = vpack.c.bf16 %v4794, %v4790
    %v4799 = vpack.c.bf16 %v4795, %v4791
    %v4800 = vpack.c.bf16 %v4796, %v4792
    %v4801 = vpack.c.bf16 %v4797, %v4793
    %v4802 = vld [vmem:[%s9] sm:$0xf]
    %v4803 = vld [vmem:[%s9 + $0x4] sm:$0xf]
    %v4804 = vld [vmem:[%s9 + $0x8] sm:$0xf]
    %v4805 = vld [vmem:[%s9 + $0xc] sm:$0xf]
    %v4806 = vld [vmem:[%s9 + $0x10] sm:$0xf]
    %v4807 = vld [vmem:[%s9 + $0x14] sm:$0xf]
    %v4808 = vld [vmem:[%s9 + $0x18] sm:$0xf]
    %v4809 = vld [vmem:[%s9 + $0x1c] sm:$0xf]
    %v4810 = vld [vmem:[%s9 + $0x20] sm:$0xf]
    %v4811 = vld [vmem:[%s9 + $0x24] sm:$0xf]
    %v4812 = vld [vmem:[%s9 + $0x28] sm:$0xf]
    %v4813 = vld [vmem:[%s9 + $0x2c] sm:$0xf]
    %v4814 = vld [vmem:[%s9 + $0x30] sm:$0xf]
    %v4815 = vld [vmem:[%s9 + $0x34] sm:$0xf]
    %v4816 = vld [vmem:[%s9 + $0x38] sm:$0xf]
    %v4817 = vld [vmem:[%s9 + $0x3c] sm:$0xf]
    %v4818 = vld [vmem:[%s9 + $0x40] sm:$0xf]
    %v4819 = vld [vmem:[%s9 + $0x44] sm:$0xf]
    %v4820 = vld [vmem:[%s9 + $0x48] sm:$0xf]
    %v4821 = vld [vmem:[%s9 + $0x4c] sm:$0xf]
    %v4822 = vld [vmem:[%s9 + $0x50] sm:$0xf]
    %v4823 = vld [vmem:[%s9 + $0x54] sm:$0xf]
    %v4824 = vld [vmem:[%s9 + $0x58] sm:$0xf]
    %v4825 = vld [vmem:[%s9 + $0x5c] sm:$0xf]
    %v4826 = vld [vmem:[%s9 + $0x60] sm:$0xf]
    %v4827 = vld [vmem:[%s9 + $0x64] sm:$0xf]
    %v4828 = vld [vmem:[%s9 + $0x68] sm:$0xf]
    %v4829 = vld [vmem:[%s9 + $0x6c] sm:$0xf]
    %v4830 = vld [vmem:[%s9 + $0x70] sm:$0xf]
    %v4831 = vld [vmem:[%s9 + $0x74] sm:$0xf]
    %v4832 = vld [vmem:[%s9 + $0x78] sm:$0xf]
    %v4833 = vld [vmem:[%s9 + $0x7c] sm:$0xf]
    %v4834 = vld [vmem:[%s9 + $0x80] sm:$0xf]
    %v4835 = vld [vmem:[%s9 + $0x84] sm:$0xf]
    %v4836 = vld [vmem:[%s9 + $0x88] sm:$0xf]
    %v4837 = vld [vmem:[%s9 + $0x8c] sm:$0xf]
    %v4838 = vld [vmem:[%s9 + $0x90] sm:$0xf]
    %v4839 = vld [vmem:[%s9 + $0x94] sm:$0xf]
    %v4840 = vld [vmem:[%s9 + $0x98] sm:$0xf]
    %v4841 = vld [vmem:[%s9 + $0x9c] sm:$0xf]
    %v4842 = vld [vmem:[%s9 + $0xa0] sm:$0xf]
    %v4843 = vld [vmem:[%s9 + $0xa4] sm:$0xf]
    %v4844 = vld [vmem:[%s9 + $0xa8] sm:$0xf]
    %v4845 = vld [vmem:[%s9 + $0xac] sm:$0xf]
    %v4846 = vld [vmem:[%s9 + $0xb0] sm:$0xf]
    %v4847 = vld [vmem:[%s9 + $0xb4] sm:$0xf]
    %v4848 = vld [vmem:[%s9 + $0xb8] sm:$0xf]
    %v4849 = vld [vmem:[%s9 + $0xbc] sm:$0xf]
    %v4850 = vld [vmem:[%s9 + $0xc0] sm:$0xf]
    %v4851 = vld [vmem:[%s9 + $0xc4] sm:$0xf]
    %v4852 = vld [vmem:[%s9 + $0xc8] sm:$0xf]
    %v4853 = vld [vmem:[%s9 + $0xcc] sm:$0xf]
    %v4854 = vld [vmem:[%s9 + $0xd0] sm:$0xf]
    %v4855 = vld [vmem:[%s9 + $0xd4] sm:$0xf]
    %v4856 = vld [vmem:[%s9 + $0xd8] sm:$0xf]
    %v4857 = vld [vmem:[%s9 + $0xdc] sm:$0xf]
    %v4858 = vld [vmem:[%s9 + $0xe0] sm:$0xf]
    %v4859 = vld [vmem:[%s9 + $0xe4] sm:$0xf]
    %v4860 = vld [vmem:[%s9 + $0xe8] sm:$0xf]
    %v4861 = vld [vmem:[%s9 + $0xec] sm:$0xf]
    %v4862 = vld [vmem:[%s9 + $0xf0] sm:$0xf]
    %v4863 = vld [vmem:[%s9 + $0xf4] sm:$0xf]
    %v4864 = vld [vmem:[%s9 + $0xf8] sm:$0xf]
    %v4865 = vld [vmem:[%s9 + $0xfc] sm:$0xf]
    %v4866 = vld [vmem:[%s10] sm:$0xf]
    %v4867 = vld [vmem:[%s10 + $0x4] sm:$0xf]
    %v4868 = vld [vmem:[%s10 + $0x8] sm:$0xf]
    %v4869 = vld [vmem:[%s10 + $0xc] sm:$0xf]
    %v4870 = vld [vmem:[%s10 + $0x10] sm:$0xf]
    %v4871 = vld [vmem:[%s10 + $0x14] sm:$0xf]
    %v4872 = vld [vmem:[%s10 + $0x18] sm:$0xf]
    %v4873 = vld [vmem:[%s10 + $0x1c] sm:$0xf]
    %v4874 = vld [vmem:[%s10 + $0x20] sm:$0xf]
    %v4875 = vld [vmem:[%s10 + $0x24] sm:$0xf]
    %v4876 = vld [vmem:[%s10 + $0x28] sm:$0xf]
    %v4877 = vld [vmem:[%s10 + $0x2c] sm:$0xf]
    %v4878 = vld [vmem:[%s10 + $0x30] sm:$0xf]
    %v4879 = vld [vmem:[%s10 + $0x34] sm:$0xf]
    %v4880 = vld [vmem:[%s10 + $0x38] sm:$0xf]
    %v4881 = vld [vmem:[%s10 + $0x3c] sm:$0xf]
    %v4882 = vld [vmem:[%s10 + $0x40] sm:$0xf]
    %v4883 = vld [vmem:[%s10 + $0x44] sm:$0xf]
    %v4884 = vld [vmem:[%s10 + $0x48] sm:$0xf]
    %v4885 = vld [vmem:[%s10 + $0x4c] sm:$0xf]
    %v4886 = vld [vmem:[%s10 + $0x50] sm:$0xf]
    %v4887 = vld [vmem:[%s10 + $0x54] sm:$0xf]
    %v4888 = vld [vmem:[%s10 + $0x58] sm:$0xf]
    %v4889 = vld [vmem:[%s10 + $0x5c] sm:$0xf]
    %v4890 = vld [vmem:[%s10 + $0x60] sm:$0xf]
    %v4891 = vld [vmem:[%s10 + $0x64] sm:$0xf]
    %v4892 = vld [vmem:[%s10 + $0x68] sm:$0xf]
    %v4893 = vld [vmem:[%s10 + $0x6c] sm:$0xf]
    %v4894 = vld [vmem:[%s10 + $0x70] sm:$0xf]
    %v4895 = vld [vmem:[%s10 + $0x74] sm:$0xf]
    %v4896 = vld [vmem:[%s10 + $0x78] sm:$0xf]
    %v4897 = vld [vmem:[%s10 + $0x7c] sm:$0xf]
    %v4898 = vld [vmem:[%s10 + $0x80] sm:$0xf]
    %v4899 = vld [vmem:[%s10 + $0x84] sm:$0xf]
    %v4900 = vld [vmem:[%s10 + $0x88] sm:$0xf]
    %v4901 = vld [vmem:[%s10 + $0x8c] sm:$0xf]
    %v4902 = vld [vmem:[%s10 + $0x90] sm:$0xf]
    %v4903 = vld [vmem:[%s10 + $0x94] sm:$0xf]
    %v4904 = vld [vmem:[%s10 + $0x98] sm:$0xf]
    %v4905 = vld [vmem:[%s10 + $0x9c] sm:$0xf]
    %v4906 = vld [vmem:[%s10 + $0xa0] sm:$0xf]
    %v4907 = vld [vmem:[%s10 + $0xa4] sm:$0xf]
    %v4908 = vld [vmem:[%s10 + $0xa8] sm:$0xf]
    %v4909 = vld [vmem:[%s10 + $0xac] sm:$0xf]
    %v4910 = vld [vmem:[%s10 + $0xb0] sm:$0xf]
    %v4911 = vld [vmem:[%s10 + $0xb4] sm:$0xf]
    %v4912 = vld [vmem:[%s10 + $0xb8] sm:$0xf]
    %v4913 = vld [vmem:[%s10 + $0xbc] sm:$0xf]
    %v4914 = vld [vmem:[%s10 + $0xc0] sm:$0xf]
    %v4915 = vld [vmem:[%s10 + $0xc4] sm:$0xf]
    %v4916 = vld [vmem:[%s10 + $0xc8] sm:$0xf]
    %v4917 = vld [vmem:[%s10 + $0xcc] sm:$0xf]
    %v4918 = vld [vmem:[%s10 + $0xd0] sm:$0xf]
    %v4919 = vld [vmem:[%s10 + $0xd4] sm:$0xf]
    %v4920 = vld [vmem:[%s10 + $0xd8] sm:$0xf]
    %v4921 = vld [vmem:[%s10 + $0xdc] sm:$0xf]
    %v4922 = vld [vmem:[%s10 + $0xe0] sm:$0xf]
    %v4923 = vld [vmem:[%s10 + $0xe4] sm:$0xf]
    %v4924 = vld [vmem:[%s10 + $0xe8] sm:$0xf]
    %v4925 = vld [vmem:[%s10 + $0xec] sm:$0xf]
    %v4926 = vld [vmem:[%s10 + $0xf0] sm:$0xf]
    %v4927 = vld [vmem:[%s10 + $0xf4] sm:$0xf]
    %v4928 = vld [vmem:[%s10 + $0xf8] sm:$0xf]
    %v4929 = vld [vmem:[%s10 + $0xfc] sm:$0xf]
    %v4994 = vunpack.c.l.b16 %v4866
    %v4995 = vunpack.c.l.b16 %v4867
    %v4996 = vunpack.c.l.b16 %v4868
    %v4997 = vunpack.c.l.b16 %v4869
    %v4998 = vunpack.c.l.b16 %v4870
    %v4999 = vunpack.c.l.b16 %v4871
    %v5000 = vunpack.c.l.b16 %v4872
    %v5001 = vunpack.c.l.b16 %v4873
    %v5002 = vunpack.c.l.b16 %v4874
    %v5003 = vunpack.c.l.b16 %v4875
    %v5004 = vunpack.c.l.b16 %v4876
    %v5005 = vunpack.c.l.b16 %v4877
    %v5006 = vunpack.c.l.b16 %v4878
    %v5007 = vunpack.c.l.b16 %v4879
    %v5008 = vunpack.c.l.b16 %v4880
    %v5009 = vunpack.c.l.b16 %v4881
    %v5010 = vunpack.c.l.b16 %v4882
    %v5011 = vunpack.c.l.b16 %v4883
    %v5012 = vunpack.c.l.b16 %v4884
    %v5013 = vunpack.c.l.b16 %v4885
    %v5014 = vunpack.c.l.b16 %v4886
    %v5015 = vunpack.c.l.b16 %v4887
    %v5016 = vunpack.c.l.b16 %v4888
    %v5017 = vunpack.c.l.b16 %v4889
    %v5018 = vunpack.c.l.b16 %v4890
    %v5019 = vunpack.c.l.b16 %v4891
    %v5020 = vunpack.c.l.b16 %v4892
    %v5021 = vunpack.c.l.b16 %v4893
    %v5022 = vunpack.c.l.b16 %v4894
    %v5023 = vunpack.c.l.b16 %v4895
    %v5024 = vunpack.c.l.b16 %v4896
    %v5025 = vunpack.c.l.b16 %v4897
    %v5026 = vunpack.c.l.b16 %v4898
    %v5027 = vunpack.c.l.b16 %v4899
    %v5028 = vunpack.c.l.b16 %v4900
    %v5029 = vunpack.c.l.b16 %v4901
    %v5030 = vunpack.c.l.b16 %v4902
    %v5031 = vunpack.c.l.b16 %v4903
    %v5032 = vunpack.c.l.b16 %v4904
    %v5033 = vunpack.c.l.b16 %v4905
    %v5034 = vunpack.c.l.b16 %v4906
    %v5035 = vunpack.c.l.b16 %v4907
    %v5036 = vunpack.c.l.b16 %v4908
    %v5037 = vunpack.c.l.b16 %v4909
    %v5038 = vunpack.c.l.b16 %v4910
    %v5039 = vunpack.c.l.b16 %v4911
    %v5040 = vunpack.c.l.b16 %v4912
    %v5041 = vunpack.c.l.b16 %v4913
    %v5042 = vunpack.c.l.b16 %v4914
    %v5043 = vunpack.c.l.b16 %v4915
    %v5044 = vunpack.c.l.b16 %v4916
    %v5045 = vunpack.c.l.b16 %v4917
    %v5046 = vunpack.c.l.b16 %v4918
    %v5047 = vunpack.c.l.b16 %v4919
    %v5048 = vunpack.c.l.b16 %v4920
    %v5049 = vunpack.c.l.b16 %v4921
    %v5050 = vunpack.c.l.b16 %v4922
    %v5051 = vunpack.c.l.b16 %v4923
    %v5052 = vunpack.c.l.b16 %v4924
    %v5053 = vunpack.c.l.b16 %v4925
    %v5054 = vunpack.c.l.b16 %v4926
    %v5055 = vunpack.c.l.b16 %v4927
    %v5056 = vunpack.c.l.b16 %v4928
    %v5057 = vunpack.c.l.b16 %v4929
    %v5058 = vpack.c.b16 %v4995, %v4994
    %v5059 = vpack.c.b16 %v4997, %v4996
    %v5060 = vpack.c.b16 %v4999, %v4998
    %v5061 = vpack.c.b16 %v5001, %v5000
    %v5062 = vpack.c.b16 %v5003, %v5002
    %v5063 = vpack.c.b16 %v5005, %v5004
    %v5064 = vpack.c.b16 %v5007, %v5006
    %v5065 = vpack.c.b16 %v5009, %v5008
    %v5066 = vpack.c.b16 %v5011, %v5010
    %v5067 = vpack.c.b16 %v5013, %v5012
    %v5068 = vpack.c.b16 %v5015, %v5014
    %v5069 = vpack.c.b16 %v5017, %v5016
    %v5070 = vpack.c.b16 %v5019, %v5018
    %v5071 = vpack.c.b16 %v5021, %v5020
    %v5072 = vpack.c.b16 %v5023, %v5022
    %v5073 = vpack.c.b16 %v5025, %v5024
    %v5074 = vpack.c.b16 %v5027, %v5026
    %v5075 = vpack.c.b16 %v5029, %v5028
    %v5076 = vpack.c.b16 %v5031, %v5030
    %v5077 = vpack.c.b16 %v5033, %v5032
    %v5078 = vpack.c.b16 %v5035, %v5034
    %v5079 = vpack.c.b16 %v5037, %v5036
    %v5080 = vpack.c.b16 %v5039, %v5038
    %v5081 = vpack.c.b16 %v5041, %v5040
    %v5082 = vpack.c.b16 %v5043, %v5042
    %v5083 = vpack.c.b16 %v5045, %v5044
    %v5084 = vpack.c.b16 %v5047, %v5046
    %v5085 = vpack.c.b16 %v5049, %v5048
    %v5086 = vpack.c.b16 %v5051, %v5050
    %v5087 = vpack.c.b16 %v5053, %v5052
    %v5088 = vpack.c.b16 %v5055, %v5054
    %v5089 = vpack.c.b16 %v5057, %v5056
    %5122 = vmatprep.subr.bf16.mxu0 0
    %5123 = vmatpush1.bf16.msra.mxu0 %v5058
    %5124 = vmatprep.subr.bf16.mxu0 0
    %5125 = vmatpush1.bf16.msra.mxu0 %v5059
    %5126 = vmatprep.subr.bf16.mxu0 0
    %5127 = vmatpush1.bf16.msra.mxu0 %v5060
    %5128 = vmatprep.subr.bf16.mxu0 0
    %5129 = vmatpush1.bf16.msra.mxu0 %v5061
    %5130 = vmatprep.subr.bf16.mxu0 0
    %5131 = vmatpush1.bf16.msra.mxu0 %v5062
    %5132 = vmatprep.subr.bf16.mxu0 0
    %5133 = vmatpush1.bf16.msra.mxu0 %v5063
    %5134 = vmatprep.subr.bf16.mxu0 0
    %5135 = vmatpush1.bf16.msra.mxu0 %v5064
    %5136 = vmatprep.subr.bf16.mxu0 0
    %5137 = vmatpush1.bf16.msra.mxu0 %v5065
    %5138 = vmatprep.subr.bf16.mxu0 0
    %5139 = vmatpush1.bf16.msra.mxu0 %v5066
    %5140 = vmatprep.subr.bf16.mxu0 0
    %5141 = vmatpush1.bf16.msra.mxu0 %v5067
    %5142 = vmatprep.subr.bf16.mxu0 0
    %5143 = vmatpush1.bf16.msra.mxu0 %v5068
    %5144 = vmatprep.subr.bf16.mxu0 0
    %5145 = vmatpush1.bf16.msra.mxu0 %v5069
    %5146 = vmatprep.subr.bf16.mxu0 0
    %5147 = vmatpush1.bf16.msra.mxu0 %v5070
    %5148 = vmatprep.subr.bf16.mxu0 0
    %5149 = vmatpush1.bf16.msra.mxu0 %v5071
    %5150 = vmatprep.subr.bf16.mxu0 0
    %5151 = vmatpush1.bf16.msra.mxu0 %v5072
    %5152 = vmatprep.subr.bf16.mxu0 0
    %5153 = vmatpush1.bf16.msra.mxu0 %v5073
    %5154 = vmatprep.mubr.bf16.mxu0 %v4799
    %5155 = vmatmul.mubr.bf16.gmra.mrb[0].mxu0 %v4798
    %v5156 = vpop.f32.mrb[0].mxu0
    %v5157 = vadd.f32 0.0, %v5156
    %v5158 = vpop.f32.mrb[0].mxu0
    %v5159 = vpop.f32.mrb[0].mxu0
    %v5160 = vadd.f32 0.0, %v5159
    %v5161 = vpop.f32.mrb[0].mxu0
    %5162 = vdwg.mxu0
    %5163 = vmatprep.subr.bf16.mxu0 0
    %5164 = vmatpush1.bf16.msra.mxu0 %v5074
    %5165 = vmatprep.subr.bf16.mxu0 0
    %5166 = vmatpush1.bf16.msra.mxu0 %v5075
    %5167 = vmatprep.subr.bf16.mxu0 0
    %5168 = vmatpush1.bf16.msra.mxu0 %v5076
    %5169 = vmatprep.subr.bf16.mxu0 0
    %5170 = vmatpush1.bf16.msra.mxu0 %v5077
    %5171 = vmatprep.subr.bf16.mxu0 0
    %5172 = vmatpush1.bf16.msra.mxu0 %v5078
    %5173 = vmatprep.subr.bf16.mxu0 0
    %5174 = vmatpush1.bf16.msra.mxu0 %v5079
    %5175 = vmatprep.subr.bf16.mxu0 0
    %5176 = vmatpush1.bf16.msra.mxu0 %v5080
    %5177 = vmatprep.subr.bf16.mxu0 0
    %5178 = vmatpush1.bf16.msra.mxu0 %v5081
    %5179 = vmatprep.subr.bf16.mxu0 0
    %5180 = vmatpush1.bf16.msra.mxu0 %v5082
    %5181 = vmatprep.subr.bf16.mxu0 0
    %5182 = vmatpush1.bf16.msra.mxu0 %v5083
    %5183 = vmatprep.subr.bf16.mxu0 0
    %5184 = vmatpush1.bf16.msra.mxu0 %v5084
    %5185 = vmatprep.subr.bf16.mxu0 0
    %5186 = vmatpush1.bf16.msra.mxu0 %v5085
    %5187 = vmatprep.subr.bf16.mxu0 0
    %5188 = vmatpush1.bf16.msra.mxu0 %v5086
    %5189 = vmatprep.subr.bf16.mxu0 0
    %5190 = vmatpush1.bf16.msra.mxu0 %v5087
    %5191 = vmatprep.subr.bf16.mxu0 0
    %5192 = vmatpush1.bf16.msra.mxu0 %v5088
    %5193 = vmatprep.subr.bf16.mxu0 0
    %5194 = vmatpush1.bf16.msra.mxu0 %v5089
    %5195 = vmatprep.mubr.bf16.mxu0 %v4801
    %5196 = vmatmul.mubr.bf16.gmra.mrb[0].mxu0 %v4800
    %v5197 = vpop.f32.mrb[0].mxu0
    %v5198 = vadd.f32 %v5157, %v5197
    %v5199 = vpop.f32.mrb[0].mxu0
    %v5200 = vpop.f32.mrb[0].mxu0
    %v5201 = vadd.f32 %v5160, %v5200
    %v5202 = vpop.f32.mrb[0].mxu0
    %5203 = vdwg.mxu0
    %v5268 = vunpack.c.l.b16 %v4802
    %v5269 = vunpack.c.l.b16 %v4803
    %v5270 = vunpack.c.l.b16 %v4804
    %v5271 = vunpack.c.l.b16 %v4805
    %v5272 = vunpack.c.l.b16 %v4806
    %v5273 = vunpack.c.l.b16 %v4807
    %v5274 = vunpack.c.l.b16 %v4808
    %v5275 = vunpack.c.l.b16 %v4809
    %v5276 = vunpack.c.l.b16 %v4810
    %v5277 = vunpack.c.l.b16 %v4811
    %v5278 = vunpack.c.l.b16 %v4812
    %v5279 = vunpack.c.l.b16 %v4813
    %v5280 = vunpack.c.l.b16 %v4814
    %v5281 = vunpack.c.l.b16 %v4815
    %v5282 = vunpack.c.l.b16 %v4816
    %v5283 = vunpack.c.l.b16 %v4817
    %v5284 = vunpack.c.l.b16 %v4818
    %v5285 = vunpack.c.l.b16 %v4819
    %v5286 = vunpack.c.l.b16 %v4820
    %v5287 = vunpack.c.l.b16 %v4821
    %v5288 = vunpack.c.l.b16 %v4822
    %v5289 = vunpack.c.l.b16 %v4823
    %v5290 = vunpack.c.l.b16 %v4824
    %v5291 = vunpack.c.l.b16 %v4825
    %v5292 = vunpack.c.l.b16 %v4826
    %v5293 = vunpack.c.l.b16 %v4827
    %v5294 = vunpack.c.l.b16 %v4828
    %v5295 = vunpack.c.l.b16 %v4829
    %v5296 = vunpack.c.l.b16 %v4830
    %v5297 = vunpack.c.l.b16 %v4831
    %v5298 = vunpack.c.l.b16 %v4832
    %v5299 = vunpack.c.l.b16 %v4833
    %v5300 = vunpack.c.l.b16 %v4834
    %v5301 = vunpack.c.l.b16 %v4835
    %v5302 = vunpack.c.l.b16 %v4836
    %v5303 = vunpack.c.l.b16 %v4837
    %v5304 = vunpack.c.l.b16 %v4838
    %v5305 = vunpack.c.l.b16 %v4839
    %v5306 = vunpack.c.l.b16 %v4840
    %v5307 = vunpack.c.l.b16 %v4841
    %v5308 = vunpack.c.l.b16 %v4842
    %v5309 = vunpack.c.l.b16 %v4843
    %v5310 = vunpack.c.l.b16 %v4844
    %v5311 = vunpack.c.l.b16 %v4845
    %v5312 = vunpack.c.l.b16 %v4846
    %v5313 = vunpack.c.l.b16 %v4847
    %v5314 = vunpack.c.l.b16 %v4848
    %v5315 = vunpack.c.l.b16 %v4849
    %v5316 = vunpack.c.l.b16 %v4850
    %v5317 = vunpack.c.l.b16 %v4851
    %v5318 = vunpack.c.l.b16 %v4852
    %v5319 = vunpack.c.l.b16 %v4853
    %v5320 = vunpack.c.l.b16 %v4854
    %v5321 = vunpack.c.l.b16 %v4855
    %v5322 = vunpack.c.l.b16 %v4856
    %v5323 = vunpack.c.l.b16 %v4857
    %v5324 = vunpack.c.l.b16 %v4858
    %v5325 = vunpack.c.l.b16 %v4859
    %v5326 = vunpack.c.l.b16 %v4860
    %v5327 = vunpack.c.l.b16 %v4861
    %v5328 = vunpack.c.l.b16 %v4862
    %v5329 = vunpack.c.l.b16 %v4863
    %v5330 = vunpack.c.l.b16 %v4864
    %v5331 = vunpack.c.l.b16 %v4865
    %v5332 = vpack.c.b16 %v5269, %v5268
    %v5333 = vpack.c.b16 %v5271, %v5270
    %v5334 = vpack.c.b16 %v5273, %v5272
    %v5335 = vpack.c.b16 %v5275, %v5274
    %v5336 = vpack.c.b16 %v5277, %v5276
    %v5337 = vpack.c.b16 %v5279, %v5278
    %v5338 = vpack.c.b16 %v5281, %v5280
    %v5339 = vpack.c.b16 %v5283, %v5282
    %v5340 = vpack.c.b16 %v5285, %v5284
    %v5341 = vpack.c.b16 %v5287, %v5286
    %v5342 = vpack.c.b16 %v5289, %v5288
    %v5343 = vpack.c.b16 %v5291, %v5290
    %v5344 = vpack.c.b16 %v5293, %v5292
    %v5345 = vpack.c.b16 %v5295, %v5294
    %v5346 = vpack.c.b16 %v5297, %v5296
    %v5347 = vpack.c.b16 %v5299, %v5298
    %v5348 = vpack.c.b16 %v5301, %v5300
    %v5349 = vpack.c.b16 %v5303, %v5302
    %v5350 = vpack.c.b16 %v5305, %v5304
    %v5351 = vpack.c.b16 %v5307, %v5306
    %v5352 = vpack.c.b16 %v5309, %v5308
    %v5353 = vpack.c.b16 %v5311, %v5310
    %v5354 = vpack.c.b16 %v5313, %v5312
    %v5355 = vpack.c.b16 %v5315, %v5314
    %v5356 = vpack.c.b16 %v5317, %v5316
    %v5357 = vpack.c.b16 %v5319, %v5318
    %v5358 = vpack.c.b16 %v5321, %v5320
    %v5359 = vpack.c.b16 %v5323, %v5322
    %v5360 = vpack.c.b16 %v5325, %v5324
    %v5361 = vpack.c.b16 %v5327, %v5326
    %v5362 = vpack.c.b16 %v5329, %v5328
    %v5363 = vpack.c.b16 %v5331, %v5330
    %5396 = vmatprep.subr.bf16.mxu0 0
    %5397 = vmatpush1.bf16.msra.mxu0 %v5332
    %5398 = vmatprep.subr.bf16.mxu0 0
    %5399 = vmatpush1.bf16.msra.mxu0 %v5333
    %5400 = vmatprep.subr.bf16.mxu0 0
    %5401 = vmatpush1.bf16.msra.mxu0 %v5334
    %5402 = vmatprep.subr.bf16.mxu0 0
    %5403 = vmatpush1.bf16.msra.mxu0 %v5335
    %5404 = vmatprep.subr.bf16.mxu0 0
    %5405 = vmatpush1.bf16.msra.mxu0 %v5336
    %5406 = vmatprep.subr.bf16.mxu0 0
    %5407 = vmatpush1.bf16.msra.mxu0 %v5337
    %5408 = vmatprep.subr.bf16.mxu0 0
    %5409 = vmatpush1.bf16.msra.mxu0 %v5338
    %5410 = vmatprep.subr.bf16.mxu0 0
    %5411 = vmatpush1.bf16.msra.mxu0 %v5339
    %5412 = vmatprep.subr.bf16.mxu0 0
    %5413 = vmatpush1.bf16.msra.mxu0 %v5340
    %5414 = vmatprep.subr.bf16.mxu0 0
    %5415 = vmatpush1.bf16.msra.mxu0 %v5341
    %5416 = vmatprep.subr.bf16.mxu0 0
    %5417 = vmatpush1.bf16.msra.mxu0 %v5342
    %5418 = vmatprep.subr.bf16.mxu0 0
    %5419 = vmatpush1.bf16.msra.mxu0 %v5343
    %5420 = vmatprep.subr.bf16.mxu0 0
    %5421 = vmatpush1.bf16.msra.mxu0 %v5344
    %5422 = vmatprep.subr.bf16.mxu0 0
    %5423 = vmatpush1.bf16.msra.mxu0 %v5345
    %5424 = vmatprep.subr.bf16.mxu0 0
    %5425 = vmatpush1.bf16.msra.mxu0 %v5346
    %5426 = vmatprep.subr.bf16.mxu0 0
    %5427 = vmatpush1.bf16.msra.mxu0 %v5347
    %5428 = vmatprep.mubr.bf16.mxu0 %v4787
    %5429 = vmatmul.mubr.bf16.gmra.mrb[0].mxu0 %v4786
    %v5430 = vpop.f32.mrb[0].mxu0
    %v5431 = vadd.f32 %v5198, %v5430
    %v5432 = vpop.f32.mrb[0].mxu0
    %v5433 = vpop.f32.mrb[0].mxu0
    %v5434 = vadd.f32 %v5201, %v5433
    %v5435 = vpop.f32.mrb[0].mxu0
    %5436 = vdwg.mxu0
    %5437 = vmatprep.subr.bf16.mxu0 0
    %5438 = vmatpush1.bf16.msra.mxu0 %v5348
    %5439 = vmatprep.subr.bf16.mxu0 0
    %5440 = vmatpush1.bf16.msra.mxu0 %v5349
    %5441 = vmatprep.subr.bf16.mxu0 0
    %5442 = vmatpush1.bf16.msra.mxu0 %v5350
    %5443 = vmatprep.subr.bf16.mxu0 0
    %5444 = vmatpush1.bf16.msra.mxu0 %v5351
    %5445 = vmatprep.subr.bf16.mxu0 0
    %5446 = vmatpush1.bf16.msra.mxu0 %v5352
    %5447 = vmatprep.subr.bf16.mxu0 0
    %5448 = vmatpush1.bf16.msra.mxu0 %v5353
    %5449 = vmatprep.subr.bf16.mxu0 0
    %5450 = vmatpush1.bf16.msra.mxu0 %v5354
    %5451 = vmatprep.subr.bf16.mxu0 0
    %5452 = vmatpush1.bf16.msra.mxu0 %v5355
    %5453 = vmatprep.subr.bf16.mxu0 0
    %5454 = vmatpush1.bf16.msra.mxu0 %v5356
    %5455 = vmatprep.subr.bf16.mxu0 0
    %5456 = vmatpush1.bf16.msra.mxu0 %v5357
    %5457 = vmatprep.subr.bf16.mxu0 0
    %5458 = vmatpush1.bf16.msra.mxu0 %v5358
    %5459 = vmatprep.subr.bf16.mxu0 0
    %5460 = vmatpush1.bf16.msra.mxu0 %v5359
    %5461 = vmatprep.subr.bf16.mxu0 0
    %5462 = vmatpush1.bf16.msra.mxu0 %v5360
    %5463 = vmatprep.subr.bf16.mxu0 0
    %5464 = vmatpush1.bf16.msra.mxu0 %v5361
    %5465 = vmatprep.subr.bf16.mxu0 0
    %5466 = vmatpush1.bf16.msra.mxu0 %v5362
    %5467 = vmatprep.subr.bf16.mxu0 0
    %5468 = vmatpush1.bf16.msra.mxu0 %v5363
    %5469 = vmatprep.mubr.bf16.mxu0 %v4789
    %5470 = vmatmul.mubr.bf16.gmra.mrb[0].mxu0 %v4788
    %v5471 = vpop.f32.mrb[0].mxu0
    %v5472 = vadd.f32 %v5431, %v5471
    %v5473 = vpop.f32.mrb[0].mxu0
    %v5474 = vpop.f32.mrb[0].mxu0
    %v5475 = vadd.f32 %v5434, %v5474
    %v5476 = vpop.f32.mrb[0].mxu0
    %5477 = vdwg.mxu0
    %v5478 = vld [vmem:[%s11] sm:$0x1]
    %v5480 = vlaneseq
    %v5481 = vshrl.u32 %v5480, 7
    %v5482 = vsub.s32 0, %v5481
    %v5483 = vrot.slane %v5478, %v5482
    %v5485 = vadd.f32 %v5472, %v5483
    %v5486 = vadd.f32 %v5475, %v5483
    %5487 = vst [vmem:[%s12] sm:$0xff] %v5485
    %5488 = vst [vmem:[%s12 + $0x8] sm:$0xff] %v5486
    // Predicated region
    $region62: #{cnn_actor_critic_forward.1} parent=1 // pred_check
      _
    $region63: #{cnn_actor_critic_forward.1} parent=1 // pred_check_branch
      %5490 = sbr.rel (0) target = $region65
    $region64: #{cnn_actor_critic_forward.1} parent=1 // pred_region
      _
    $region65: #{cnn_actor_critic_forward.1} parent=1 // pred_fallthru
      _
    // Predicated region
    $region66: #{cnn_actor_critic_forward.1} parent=1 // pred_check
      _
    $region67: #{cnn_actor_critic_forward.1} parent=1 // pred_check_branch
      %5492 = sbr.rel (0) target = $region69
    $region68: #{cnn_actor_critic_forward.1} parent=1 // pred_region
      _
    $region69: #{cnn_actor_critic_forward.1} parent=1 // pred_fallthru
      _
    %5493 = vsyncpa [#allocation3], 1
    %5494 = vsyncpa [#allocation5], 1

</llo_original>
